<compile_context>
chip_gen: v7x
topology: tpu7x:2x2x1
jax: 0.10.0
libtpu: 0.0.40
codegen_flags: <defaults>
</compile_context>

<pallas_src>
import functools

import jax
import jax.numpy as jnp
from jax.experimental import pallas as pl
from jax.experimental.pallas import tpu as pltpu

NEG_SLOPE = 0.01  # nn.LeakyReLU() default


def _leaky_relu(x):
    return jnp.where(x >= 0, x, NEG_SLOPE * x)


def _fc1_partial_kernel(x_ref, w1_ref, o_ref):
    """Streams W1 over the huge K dimension.

    Grid: (n_split, n_k).  Axis 0 is 'parallel' (megacore split of the weight
    stream), axis 1 is the 'arbitrary' K-reduction.  o_ref is the per-split
    (1, B, 64) f32 partial accumulator, resident across the k axis.
    """
    @pl.when(pl.program_id(1) == 0)
    def _():
        o_ref[...] = jnp.zeros_like(o_ref)

    # Hot path: (B, tk) @ (tk, 64) on the MXU, accumulated in f32.
    o_ref[...] += jnp.dot(x_ref[...], w1_ref[...],
                          preferred_element_type=jnp.float32)[None]


def _head_kernel(p_ref, b1_ref, w2_ref, b2_ref, w3_ref, b3_ref, o_ref):
    """Tiny epilogue: combine partials, bias + LeakyReLU, fc2, fc3. One step."""
    h1 = _leaky_relu(jnp.sum(p_ref[...], axis=0) + b1_ref[...])          # (B, 64)
    # dropout1: identity (eval mode)
    h2 = _leaky_relu(
        jnp.dot(h1, w2_ref[...], preferred_element_type=jnp.float32)
        + b2_ref[...])                                                   # (B, 32)
    # dropout2: identity (eval mode)
    o_ref[...] = (jnp.dot(h2, w3_ref[...],
                          preferred_element_type=jnp.float32)
                  + b3_ref[...]).astype(o_ref.dtype)                     # (B, 6)


def prepare_params(w1, b1, w2, b2, w3, b3, *, tk=8192, n_split=2):
    """One-time parameter prep (call OUTSIDE the jitted forward).

    Pads W1's reduction dim so every (n_split x tk) K tile is full (zero rows
    contribute 0 to the accumulator) and reshapes biases to (1, N) rows.
    """
    K = w1.shape[0]
    chunk = tk * n_split
    Kp = pl.cdiv(K, chunk) * chunk
    w1_p = jnp.pad(w1, ((0, Kp - K), (0, 0)))
    return (w1_p, b1.reshape(1, -1), w2, b2.reshape(1, -1),
            w3, b3.reshape(1, -1))


@functools.partial(jax.jit, static_argnames=("tk", "n_split"))
def server_trashnet_forward(x, w1_p, b1_r, w2, b2_r, w3, b3_r,
                            *, tk=8192, n_split=2):
    """x: (B, 32*37*37*num_devices) f32; params from prepare_params.

    Returns logits (B, 6) f32.
    """
    B, K = x.shape
    Kp = w1_p.shape[0]
    assert Kp % (tk * n_split) == 0, "W1 must be padded via prepare_params"
    n_k = Kp // (tk * n_split)   # K tiles per split

    # Padding x is cheap (small B); W1 padding was hoisted to prepare_params.
    x_p = jnp.pad(x, ((0, 0), (0, Kp - K)))

    # ---- Kernel 1: stream W1, produce per-split partial sums of fc1 ----
    partial = pl.pallas_call(
        _fc1_partial_kernel,
        out_shape=jax.ShapeDtypeStruct((n_split, B, 64), jnp.float32),
        grid_spec=pltpu.PrefetchScalarGridSpec(
            num_scalar_prefetch=0,
            grid=(n_split, n_k),
            in_specs=[
                pl.BlockSpec((B, tk), lambda i, k: (0, i * n_k + k)),    # x tile
                pl.BlockSpec((tk, 64), lambda i, k: (i * n_k + k, 0)),   # W1 tile
            ],
            out_specs=pl.BlockSpec((1, B, 64), lambda i, k: (i, 0, 0)),
        ),
        compiler_params=pltpu.CompilerParams(
            dimension_semantics=("parallel", "arbitrary"),
            vmem_limit_bytes=32 * 1024 * 1024),
    )(x_p, w1_p)

    # ---- Kernel 2: tiny head (single grid step) ----
    out = pl.pallas_call(
        _head_kernel,
        out_shape=jax.ShapeDtypeStruct((B, 6), jnp.float32),
        grid_spec=pltpu.PrefetchScalarGridSpec(
            num_scalar_prefetch=0,
            grid=(1,),
            in_specs=[
                pl.BlockSpec((n_split, B, 64), lambda i: (0, 0, 0)),
                pl.BlockSpec((1, 64), lambda i: (0, 0)),
                pl.BlockSpec((64, 32), lambda i: (0, 0)),
                pl.BlockSpec((1, 32), lambda i: (0, 0)),
                pl.BlockSpec((32, 6), lambda i: (0, 0)),
                pl.BlockSpec((1, 6), lambda i: (0, 0)),
            ],
            out_specs=pl.BlockSpec((B, 6), lambda i: (0, 0)),
        ),
    )(partial, b1_r, w2, b2_r, w3, b3_r)
    return out


def init_params(key, in_features):
    """Deterministic init mimicking nn.Linear defaults: U(-1/sqrt(fan_in), +)."""
    def linear(k, fan_in, fan_out):
        kw, kb = jax.random.split(k)
        bound = 1.0 / jnp.sqrt(fan_in)
        # stored as (in, out) so the kernel does x @ W
        w = jax.random.uniform(kw, (fan_in, fan_out), jnp.float32, -bound, bound)
        b = jax.random.uniform(kb, (fan_out,), jnp.float32, -bound, bound)
        return w, b

    k1, k2, k3 = jax.random.split(key, 3)
    w1, b1 = linear(k1, in_features, 64)
    w2, b2 = linear(k2, 64, 32)
    w3, b3 = linear(k3, 32, 6)
    return w1, b1, w2, b2, w3, b3


def reference_forward(x, w1, b1, w2, b2, w3, b3):
    h1 = _leaky_relu(x @ w1 + b1)
    h2 = _leaky_relu(h1 @ w2 + b2)
    return h2 @ w3 + b3


if __name__ == "__main__":
    num_devices = 1
    batch = 2
    in_features = 32 * 37 * 37 * num_devices  # 43808

    key = jax.random.PRNGKey(0)
    kx, kp = jax.random.split(key)
    x = jax.random.normal(kx, (batch, in_features), jnp.float32)
    w1, b1, w2, b2, w3, b3 = init_params(kp, in_features)

    TK = 8192      # sweep 4096-16384 per chip; 8192 fits v5e's 16 MiB default
    NSPLIT = 2     # splits the weight stream across both v7x TensorCores

    params = prepare_params(w1, b1, w2, b2, w3, b3, tk=TK, n_split=NSPLIT)
    params = jax.block_until_ready(params)   # one-time prep, outside forward

    out = server_trashnet_forward(x, *params, tk=TK, n_split=NSPLIT)
    out = jax.block_until_ready(out)

    ref = reference_forward(x, w1, b1, w2, b2, w3, b3)
    assert out.shape == (batch, 6)
    assert jnp.allclose(out, ref, atol=1e-3, rtol=1e-3), "mismatch vs reference"

    print("KERNEL_OK")
</pallas_src>

<mosaic_0001>
module attributes {stable_mosaic.version = 11 : i64} {
  func.func @_fc1_partial_kernel(%arg0: i32, %arg1: i32, %arg2: memref<2x8192xf32, #tpu.memory_space<vmem>>, %arg3: memref<8192x64xf32, #tpu.memory_space<vmem>>, %arg4: memref<1x2x64xf32, #tpu.memory_space<vmem>>) attributes {dimension_semantics = [#tpu.dimension_semantics<parallel>, #tpu.dimension_semantics<arbitrary>], iteration_bounds = array<i64: 2, 3>, scalar_prefetch = 0 : i64, scratch_operands = 0 : i64, tpu.core_type = #tpu.core_type<tc>, window_params = [{transform_indices = @transform_0, window_bounds = array<i64: 2, 8192>}, {transform_indices = @transform_1, window_bounds = array<i64: 8192, 64>}, {transform_indices = @transform_2, window_bounds = array<i64: 1, 2, 64>}]} {
    %c0_i32 = arith.constant 0 : i32
    %0 = arith.cmpi eq, %arg1, %c0_i32 : i32
    %1 = arith.extui %0 : i1 to i32
    %c0_i32_0 = arith.constant 0 : i32
    %2 = arith.cmpi ne, %1, %c0_i32_0 : i32
    scf.if %2 {
      %cst_10 = arith.constant 0.000000e+00 : f32
      %10 = vector.broadcast %cst_10 : f32 to vector<1x2x64xf32>
      %c0_11 = arith.constant 0 : index
      %c0_12 = arith.constant 0 : index
      %c0_13 = arith.constant 0 : index
      %11 = vector.load %arg4[%c0_11, %c0_12, %c0_13] : memref<1x2x64xf32, #tpu.memory_space<vmem>>, vector<1x2x64xf32>
      tpu.vector_store %arg4[%c0_11, %c0_12, %c0_13], %10 {strides = array<i32>} : memref<1x2x64xf32, #tpu.memory_space<vmem>>, vector<1x2x64xf32>,
    } else {
    }
    %c0 = arith.constant 0 : index
    %c0_1 = arith.constant 0 : index
    %c0_2 = arith.constant 0 : index
    %3 = vector.load %arg4[%c0, %c0_1, %c0_2] : memref<1x2x64xf32, #tpu.memory_space<vmem>>, vector<1x2x64xf32>
    %c0_3 = arith.constant 0 : index
    %c0_4 = arith.constant 0 : index
    %4 = vector.load %arg2[%c0_3, %c0_4] : memref<2x8192xf32, #tpu.memory_space<vmem>>, vector<2x8192xf32>
    %c0_5 = arith.constant 0 : index
    %c0_6 = arith.constant 0 : index
    %5 = vector.load %arg3[%c0_5, %c0_6] : memref<8192x64xf32, #tpu.memory_space<vmem>>, vector<8192x64xf32>
    %cst = arith.constant dense<0.000000e+00> : vector<2x64xf32>
    %6 = tpu.matmul %4, %5, %cst {dimension_numbers = #tpu.dot_dimension_numbers<[1], [0], [0], [1], [0, 0, 1, 1], [], []>} : vector<2x8192xf32>, vector<8192x64xf32>, vector<2x64xf32> -> vector<2x64xf32>
    %7 = vector.shape_cast %6 : vector<2x64xf32> to vector<1x2x64xf32>
    %8 = arith.addf %3, %7 : vector<1x2x64xf32>
    %c0_7 = arith.constant 0 : index
    %c0_8 = arith.constant 0 : index
    %c0_9 = arith.constant 0 : index
    %9 = vector.load %arg4[%c0_7, %c0_8, %c0_9] : memref<1x2x64xf32, #tpu.memory_space<vmem>>, vector<1x2x64xf32>
    tpu.vector_store %arg4[%c0_7, %c0_8, %c0_9], %8 {strides = array<i32>} : memref<1x2x64xf32, #tpu.memory_space<vmem>>, vector<1x2x64xf32>,
    return
  }
  func.func @transform_0(%arg0: i32, %arg1: i32) -> (i32, i32) {
    %c3_i32 = arith.constant 3 : i32
    %0 = arith.muli %arg0, %c3_i32 : i32
    %1 = arith.addi %0, %arg1 : i32
    %c0_i32 = arith.constant 0 : i32
    %c0_i32_0 = arith.constant 0 : i32
    return %c0_i32, %1 : i32, i32
  }
  func.func @transform_1(%arg0: i32, %arg1: i32) -> (i32, i32) {
    %c3_i32 = arith.constant 3 : i32
    %0 = arith.muli %arg0, %c3_i32 : i32
    %1 = arith.addi %0, %arg1 : i32
    %c0_i32 = arith.constant 0 : i32
    %c0_i32_0 = arith.constant 0 : i32
    return %1, %c0_i32 : i32, i32
  }
  func.func @transform_2(%arg0: i32, %arg1: i32) -> (i32, i32, i32) {
    %c0_i32 = arith.constant 0 : i32
    %c0_i32_0 = arith.constant 0 : i32
    %c0_i32_1 = arith.constant 0 : i32
    return %arg0, %c0_i32, %c0_i32_0 : i32, i32, i32
  }
}

module attributes {stable_mosaic.version = 11 : i64} {
  func.func @_head_kernel(%arg0: i32, %arg1: memref<2x2x64xf32, #tpu.memory_space<vmem>>, %arg2: memref<1x64xf32, #tpu.memory_space<vmem>>, %arg3: memref<64x32xf32, #tpu.memory_space<vmem>>, %arg4: memref<1x32xf32, #tpu.memory_space<vmem>>, %arg5: memref<32x6xf32, #tpu.memory_space<vmem>>, %arg6: memref<1x6xf32, #tpu.memory_space<vmem>>, %arg7: memref<2x6xf32, #tpu.memory_space<vmem>>) attributes {dimension_semantics = [#tpu.dimension_semantics<arbitrary>], iteration_bounds = array<i64: 1>, scalar_prefetch = 0 : i64, scratch_operands = 0 : i64, tpu.core_type = #tpu.core_type<tc>, window_params = [{pipeline_mode = #tpu.pipeline_mode<synchronous>, transform_indices = @transform_0, window_bounds = array<i64: 2, 2, 64>}, {pipeline_mode = #tpu.pipeline_mode<synchronous>, transform_indices = @transform_1, window_bounds = array<i64: 1, 64>}, {pipeline_mode = #tpu.pipeline_mode<synchronous>, transform_indices = @transform_2, window_bounds = array<i64: 64, 32>}, {pipeline_mode = #tpu.pipeline_mode<synchronous>, transform_indices = @transform_3, window_bounds = array<i64: 1, 32>}, {pipeline_mode = #tpu.pipeline_mode<synchronous>, transform_indices = @transform_4, window_bounds = array<i64: 32, 6>}, {pipeline_mode = #tpu.pipeline_mode<synchronous>, transform_indices = @transform_5, window_bounds = array<i64: 1, 6>}, {pipeline_mode = #tpu.pipeline_mode<synchronous>, transform_indices = @transform_6, window_bounds = array<i64: 2, 6>}]} {
    %c0 = arith.constant 0 : index
    %c0_0 = arith.constant 0 : index
    %c0_1 = arith.constant 0 : index
    %0 = vector.load %arg1[%c0, %c0_0, %c0_1] : memref<2x2x64xf32, #tpu.memory_space<vmem>>, vector<2x2x64xf32>
    %cst = arith.constant dense<0.000000e+00> : vector<2x64xf32>
    %1 = vector.multi_reduction <add>, %0, %cst [0] : vector<2x2x64xf32> to vector<2x64xf32>
    %c0_2 = arith.constant 0 : index
    %c0_3 = arith.constant 0 : index
    %2 = vector.load %arg2[%c0_2, %c0_3] : memref<1x64xf32, #tpu.memory_space<vmem>>, vector<1x64xf32>
    %3 = vector.broadcast %2 : vector<1x64xf32> to vector<2x64xf32>
    %4 = arith.addf %1, %3 : vector<2x64xf32>
    %cst_4 = arith.constant 0.000000e+00 : f32
    %5 = vector.broadcast %cst_4 : f32 to vector<2x64xf32>
    %6 = arith.cmpf oge, %4, %5 : vector<2x64xf32>
    %cst_5 = arith.constant 0.00999999977 : f32
    %7 = vector.broadcast %cst_5 : f32 to vector<2x64xf32>
    %8 = arith.mulf %7, %4 : vector<2x64xf32>
    %9 = arith.select %6, %4, %8 : vector<2x64xi1>, vector<2x64xf32>
    %c0_6 = arith.constant 0 : index
    %c0_7 = arith.constant 0 : index
    %10 = vector.load %arg3[%c0_6, %c0_7] : memref<64x32xf32, #tpu.memory_space<vmem>>, vector<64x32xf32>
    %cst_8 = arith.constant dense<0.000000e+00> : vector<2x32xf32>
    %11 = tpu.matmul %9, %10, %cst_8 {dimension_numbers = #tpu.dot_dimension_numbers<[1], [0], [0], [1], [0, 0, 1, 1], [], []>} : vector<2x64xf32>, vector<64x32xf32>, vector<2x32xf32> -> vector<2x32xf32>
    %c0_9 = arith.constant 0 : index
    %c0_10 = arith.constant 0 : index
    %12 = vector.load %arg4[%c0_9, %c0_10] : memref<1x32xf32, #tpu.memory_space<vmem>>, vector<1x32xf32>
    %13 = vector.broadcast %12 : vector<1x32xf32> to vector<2x32xf32>
    %14 = arith.addf %11, %13 : vector<2x32xf32>
    %cst_11 = arith.constant 0.000000e+00 : f32
    %15 = vector.broadcast %cst_11 : f32 to vector<2x32xf32>
    %16 = arith.cmpf oge, %14, %15 : vector<2x32xf32>
    %cst_12 = arith.constant 0.00999999977 : f32
    %17 = vector.broadcast %cst_12 : f32 to vector<2x32xf32>
    %18 = arith.mulf %17, %14 : vector<2x32xf32>
    %19 = arith.select %16, %14, %18 : vector<2x32xi1>, vector<2x32xf32>
    %c0_13 = arith.constant 0 : index
    %c0_14 = arith.constant 0 : index
    %20 = vector.load %arg5[%c0_13, %c0_14] : memref<32x6xf32, #tpu.memory_space<vmem>>, vector<32x6xf32>
    %cst_15 = arith.constant dense<0.000000e+00> : vector<2x6xf32>
    %21 = tpu.matmul %19, %20, %cst_15 {dimension_numbers = #tpu.dot_dimension_numbers<[1], [0], [0], [1], [0, 0, 1, 1], [], []>} : vector<2x32xf32>, vector<32x6xf32>, vector<2x6xf32> -> vector<2x6xf32>
    %c0_16 = arith.constant 0 : index
    %c0_17 = arith.constant 0 : index
    %22 = vector.load %arg6[%c0_16, %c0_17] : memref<1x6xf32, #tpu.memory_space<vmem>>, vector<1x6xf32>
    %23 = vector.broadcast %22 : vector<1x6xf32> to vector<2x6xf32>
    %24 = arith.addf %21, %23 : vector<2x6xf32>
    %c0_18 = arith.constant 0 : index
    %c0_19 = arith.constant 0 : index
    %25 = vector.load %arg7[%c0_18, %c0_19] : memref<2x6xf32, #tpu.memory_space<vmem>>, vector<2x6xf32>
    tpu.vector_store %arg7[%c0_18, %c0_19], %24 {strides = array<i32>} : memref<2x6xf32, #tpu.memory_space<vmem>>, vector<2x6xf32>,
    return
  }
  func.func @transform_0(%arg0: i32) -> (i32, i32, i32) {
    %c0_i32 = arith.constant 0 : i32
    %c0_i32_0 = arith.constant 0 : i32
    %c0_i32_1 = arith.constant 0 : i32
    %c0_i32_2 = arith.constant 0 : i32
    return %c0_i32, %c0_i32_0, %c0_i32_1 : i32, i32, i32
  }
  func.func @transform_1(%arg0: i32) -> (i32, i32) {
    %c0_i32 = arith.constant 0 : i32
    %c0_i32_0 = arith.constant 0 : i32
    %c0_i32_1 = arith.constant 0 : i32
    return %c0_i32, %c0_i32_0 : i32, i32
  }
  func.func @transform_2(%arg0: i32) -> (i32, i32) {
    %c0_i32 = arith.constant 0 : i32
    %c0_i32_0 = arith.constant 0 : i32
    %c0_i32_1 = arith.constant 0 : i32
    return %c0_i32, %c0_i32_0 : i32, i32
  }
  func.func @transform_3(%arg0: i32) -> (i32, i32) {
    %c0_i32 = arith.constant 0 : i32
    %c0_i32_0 = arith.constant 0 : i32
    %c0_i32_1 = arith.constant 0 : i32
    return %c0_i32, %c0_i32_0 : i32, i32
  }
  func.func @transform_4(%arg0: i32) -> (i32, i32) {
    %c0_i32 = arith.constant 0 : i32
    %c0_i32_0 = arith.constant 0 : i32
    %c0_i32_1 = arith.constant 0 : i32
    return %c0_i32, %c0_i32_0 : i32, i32
  }
  func.func @transform_5(%arg0: i32) -> (i32, i32) {
    %c0_i32 = arith.constant 0 : i32
    %c0_i32_0 = arith.constant 0 : i32
    %c0_i32_1 = arith.constant 0 : i32
    return %c0_i32, %c0_i32_0 : i32, i32
  }
  func.func @transform_6(%arg0: i32) -> (i32, i32) {
    %c0_i32 = arith.constant 0 : i32
    %c0_i32_0 = arith.constant 0 : i32
    %c0_i32_1 = arith.constant 0 : i32
    return %c0_i32, %c0_i32_0 : i32, i32
  }
}

</mosaic_0001>

<llo_original>
// kernel: server_trashnet_forward.3
$region0: #{server_trashnet_forward.3}
  #allocation0 [shape = 'u32[]', space=smem, size = 0x4, offset = 0x4, fixed_abs, tag = 'smem constant byte address 0x4 - core index']
  #allocation1 [shape = 'u32[144,128]{1,0:T(1,128)}', space=vmem, size = 0x12000, scoped, tag = 'internal scratch']
  %s0 = inlined_call_operand.vmem [shape: f32[2,2,64], index: 0, kind: input, shape index: {}]
  %s1 = inlined_call_operand.vmem [shape: f32[1,64], index: 1, kind: input, shape index: {}]
  %s2 = inlined_call_operand.vmem [shape: f32[64,32], index: 2, kind: input, shape index: {}]
  %s3 = inlined_call_operand.vmem [shape: f32[1,32], index: 3, kind: input, shape index: {}]
  %s4 = inlined_call_operand.vmem [shape: f32[32,6], index: 4, kind: input, shape index: {}]
  %s5 = inlined_call_operand.vmem [shape: f32[1,6], index: 5, kind: input, shape index: {}]
  %s6 = inlined_call_operand.hbm [shape: f32[2,6], index: 6, kind: output, shape index: {}]
  %s7 = sld [smem:[#allocation0]]
  $region34: #{server_trashnet_forward.3} parent=0
    _
  %s9 = ssub.s32 1, %s7
  %s10 = scalar_select 0, %s9, %s7
  $region1: #{server_trashnet_forward.3} parent=0
    #allocation2 [shape = 'u8[1024]{0}', space=vmem, size = 0x400, scoped, tag = 'output window, operand 0, single buffered']
    #allocation3 [shape = 's32[1]{0}', space=sflag, size = 0x4, scoped, tag = 'scoped memory for server_trashnet_forward.3']
    %11 = vsyncpa [#allocation3], 0
    // Predicated region
    $region2: #{server_trashnet_forward.3} parent=1 // pred_check
      _
    $region3: #{server_trashnet_forward.3} parent=1 // pred_check_branch
      %13 = sbr.rel (0) target = $region5
    $region4: #{server_trashnet_forward.3} parent=1 // pred_region
      _
    $region5: #{server_trashnet_forward.3} parent=1 // pred_fallthru
      _
    // Predicated region
    $region6: #{server_trashnet_forward.3} parent=1 // pred_check
      _
    $region7: #{server_trashnet_forward.3} parent=1 // pred_check_branch
      %15 = sbr.rel (0) target = $region9
    $region8: #{server_trashnet_forward.3} parent=1 // pred_region
      _
    $region9: #{server_trashnet_forward.3} parent=1 // pred_fallthru
      _
    // Predicated region
    $region10: #{server_trashnet_forward.3} parent=1 // pred_check
      _
    $region11: #{server_trashnet_forward.3} parent=1 // pred_check_branch
      %17 = sbr.rel (0) target = $region13
    $region12: #{server_trashnet_forward.3} parent=1 // pred_region
      _
    $region13: #{server_trashnet_forward.3} parent=1 // pred_fallthru
      _
    // Predicated region
    $region14: #{server_trashnet_forward.3} parent=1 // pred_check
      _
    $region15: #{server_trashnet_forward.3} parent=1 // pred_check_branch
      %19 = sbr.rel (0) target = $region17
    $region16: #{server_trashnet_forward.3} parent=1 // pred_region
      _
    $region17: #{server_trashnet_forward.3} parent=1 // pred_fallthru
      _
    // Predicated region
    $region18: #{server_trashnet_forward.3} parent=1 // pred_check
      _
    $region19: #{server_trashnet_forward.3} parent=1 // pred_check_branch
      %21 = sbr.rel (0) target = $region21
    $region20: #{server_trashnet_forward.3} parent=1 // pred_region
      _
    $region21: #{server_trashnet_forward.3} parent=1 // pred_fallthru
      _
    // Predicated region
    $region22: #{server_trashnet_forward.3} parent=1 // pred_check
      _
    $region23: #{server_trashnet_forward.3} parent=1 // pred_check_branch
      %23 = sbr.rel (0) target = $region25
    $region24: #{server_trashnet_forward.3} parent=1 // pred_region
      _
    $region25: #{server_trashnet_forward.3} parent=1 // pred_fallthru
      _
    %v24 = vld [vmem:[%s0] sm:$0x3]
    %v25 = vld [vmem:[%s0 + $0x2] sm:$0x3]
    %vm26 = vcmask 517120
    %v27 = vsel %vm26, %v24, 0.0
    %v28 = vsel %vm26, %v25, 0.0
    %v29 = vadd.f32 %v27, %v28
    %v30 = vld [vmem:[%s1] sm:$0x1]
    %v32 = vlaneseq
    %v33 = vshrl.u32 %v32, 7
    %v34 = vsub.s32 0, %v33
    %v35 = vrot.slane %v30, %v34
    %v37 = vadd.f32 %v29, %v35
    %vm38 = vcmp.ge.f32.partialorder %v37, 0.0
    %v39 = vmul.f32 %v37, 0.01
    %v40 = vsel %vm38, %v37, %v39
    %v41 = vld [vmem:[%s2] sm:$0xff]
    %v42 = vld [vmem:[%s2 + $0x8] sm:$0xff]
    %v43 = vld [vmem:[%s2 + $0x10] sm:$0xff]
    %v44 = vld [vmem:[%s2 + $0x18] sm:$0xff]
    %v45 = vld [vmem:[%s2 + $0x20] sm:$0xff]
    %v46 = vld [vmem:[%s2 + $0x28] sm:$0xff]
    %v47 = vld [vmem:[%s2 + $0x30] sm:$0xff]
    %v48 = vld [vmem:[%s2 + $0x38] sm:$0xff]
    %v49 = vld [vmem:[%s3] sm:$0x1]
    %v51 = vlaneseq
    %v52 = vshrl.u32 %v51, 7
    %v53 = vsub.s32 0, %v52
    %v54 = vrot.slane %v49, %v53
    %vm56 = vcmask 523264
    %v58 = vsel %vm56, %v40, 0
    %60 = vmatprep.subr.mxu0 0.0
    %61 = vmatpush1.msra.mxu0 %v41
    %62 = vmatprep.subr.mxu0 0.0
    %63 = vmatpush1.msra.mxu0 %v42
    %64 = vmatprep.subr.mxu0 0.0
    %65 = vmatpush1.msra.mxu0 %v43
    %66 = vmatprep.subr.mxu0 0.0
    %67 = vmatpush1.msra.mxu0 %v44
    %68 = vmatprep.subr.mxu0 0.0
    %69 = vmatpush1.msra.mxu0 %v45
    %70 = vmatprep.subr.mxu0 0.0
    %71 = vmatpush1.msra.mxu0 %v46
    %72 = vmatprep.subr.mxu0 0.0
    %73 = vmatpush1.msra.mxu0 %v47
    %74 = vmatprep.subr.mxu0 0.0
    %75 = vmatpush1.msra.mxu0 %v48
    %76 = vmatprep.subr.mxu0 0.0
    %77 = vmatpush1.msra.mxu0 0.0
    %78 = vmatprep.subr.mxu0 0.0
    %79 = vmatpush1.msra.mxu0 0.0
    %80 = vmatprep.subr.mxu0 0.0
    %81 = vmatpush1.msra.mxu0 0.0
    %82 = vmatprep.subr.mxu0 0.0
    %83 = vmatpush1.msra.mxu0 0.0
    %84 = vmatprep.subr.mxu0 0.0
    %85 = vmatpush1.msra.mxu0 0.0
    %86 = vmatprep.subr.mxu0 0.0
    %87 = vmatpush1.msra.mxu0 0.0
    %88 = vmatprep.subr.mxu0 0.0
    %89 = vmatpush1.msra.mxu0 0.0
    %90 = vmatprep.subr.mxu0 0.0
    %91 = vmatpush1.msra.mxu0 0.0
    %92 = vmatprep.subr.mxu0 0.0
    %93 = vmatpush1.msra.mxu0 0.0
    %94 = vmatprep.subr.mxu0 0.0
    %95 = vmatpush1.msra.mxu0 0.0
    %96 = vmatprep.subr.mxu0 0.0
    %97 = vmatpush1.msra.mxu0 0.0
    %98 = vmatprep.subr.mxu0 0.0
    %99 = vmatpush1.msra.mxu0 0.0
    %100 = vmatprep.subr.mxu0 0.0
    %101 = vmatpush1.msra.mxu0 0.0
    %102 = vmatprep.subr.mxu0 0.0
    %103 = vmatpush1.msra.mxu0 0.0
    %104 = vmatprep.subr.mxu0 0.0
    %105 = vmatpush1.msra.mxu0 0.0
    %106 = vmatprep.subr.mxu0 0.0
    %107 = vmatpush1.msra.mxu0 0.0
    %108 = vmatprep.subr.mxu0 0.0
    %109 = vmatpush1.msra.mxu0 0.0
    %110 = vmatprep.subr.mxu0 0.0
    %111 = vmatpush1.msra.mxu0 0.0
    %112 = vmatprep.subr.mxu0 0.0
    %113 = vmatpush1.msra.mxu0 0.0
    %114 = vmatprep.subr.mxu0 0.0
    %115 = vmatpush1.msra.mxu0 0.0
    %116 = vmatprep.subr.mxu0 0.0
    %117 = vmatpush1.msra.mxu0 0.0
    %118 = vmatprep.subr.mxu0 0.0
    %119 = vmatpush1.msra.mxu0 0.0
    %120 = vmatprep.subr.mxu0 0.0
    %121 = vmatpush1.msra.mxu0 0.0
    %122 = vmatprep.subr.mxu0 0.0
    %123 = vmatpush1.msra.mxu0 0.0
    %124 = vmatprep.mubr.f32.mxu0 0.0
    %125 = vmatmul.mubr.f32.gmra.mrb[0].mxu0 %v58
    %v126 = vpop.f32.mrb[0].mxu0
    %v127 = vadd.f32 %v54, %v126
    %v128 = vpop.f32.mrb[0].mxu0
    %129 = vdwg.mxu0
    %vm130 = vcmp.ge.f32.partialorder %v127, 0.0
    %v131 = vmul.f32 %v127, 0.01
    %v132 = vsel %vm130, %v127, %v131
    %v133 = vld [vmem:[%s4] sm:$0xff]
    %v134 = vld [vmem:[%s4 + $0x8] sm:$0xff]
    %v135 = vld [vmem:[%s4 + $0x10] sm:$0xff]
    %v136 = vld [vmem:[%s4 + $0x18] sm:$0xff]
    %v137 = vld [vmem:[%s5] sm:$0x1]
    %v139 = vlaneseq
    %v140 = vshrl.u32 %v139, 7
    %v141 = vsub.s32 0, %v140
    %v142 = vrot.slane %v137, %v141
    %vm144 = vcmask 261120
    %v146 = vsel %vm144, %v132, 0
    %148 = vmatprep.subr.mxu0 0.0
    %149 = vmatpush1.msra.mxu0 %v133
    %150 = vmatprep.subr.mxu0 0.0
    %151 = vmatpush1.msra.mxu0 %v134
    %152 = vmatprep.subr.mxu0 0.0
    %153 = vmatpush1.msra.mxu0 %v135
    %154 = vmatprep.subr.mxu0 0.0
    %155 = vmatpush1.msra.mxu0 %v136
    %156 = vmatprep.subr.mxu0 0.0
    %157 = vmatpush1.msra.mxu0 0.0
    %158 = vmatprep.subr.mxu0 0.0
    %159 = vmatpush1.msra.mxu0 0.0
    %160 = vmatprep.subr.mxu0 0.0
    %161 = vmatpush1.msra.mxu0 0.0
    %162 = vmatprep.subr.mxu0 0.0
    %163 = vmatpush1.msra.mxu0 0.0
    %164 = vmatprep.subr.mxu0 0.0
    %165 = vmatpush1.msra.mxu0 0.0
    %166 = vmatprep.subr.mxu0 0.0
    %167 = vmatpush1.msra.mxu0 0.0
    %168 = vmatprep.subr.mxu0 0.0
    %169 = vmatpush1.msra.mxu0 0.0
    %170 = vmatprep.subr.mxu0 0.0
    %171 = vmatpush1.msra.mxu0 0.0
    %172 = vmatprep.subr.mxu0 0.0
    %173 = vmatpush1.msra.mxu0 0.0
    %174 = vmatprep.subr.mxu0 0.0
    %175 = vmatpush1.msra.mxu0 0.0
    %176 = vmatprep.subr.mxu0 0.0
    %177 = vmatpush1.msra.mxu0 0.0
    %178 = vmatprep.subr.mxu0 0.0
    %179 = vmatpush1.msra.mxu0 0.0
    %180 = vmatprep.subr.mxu0 0.0
    %181 = vmatpush1.msra.mxu0 0.0
    %182 = vmatprep.subr.mxu0 0.0
    %183 = vmatpush1.msra.mxu0 0.0
    %184 = vmatprep.subr.mxu0 0.0
    %185 = vmatpush1.msra.mxu0 0.0
    %186 = vmatprep.subr.mxu0 0.0
    %187 = vmatpush1.msra.mxu0 0.0
    %188 = vmatprep.subr.mxu0 0.0
    %189 = vmatpush1.msra.mxu0 0.0
    %190 = vmatprep.subr.mxu0 0.0
    %191 = vmatpush1.msra.mxu0 0.0
    %192 = vmatprep.subr.mxu0 0.0
    %193 = vmatpush1.msra.mxu0 0.0
    %194 = vmatprep.subr.mxu0 0.0
    %195 = vmatpush1.msra.mxu0 0.0
    %196 = vmatprep.subr.mxu0 0.0
    %197 = vmatpush1.msra.mxu0 0.0
    %198 = vmatprep.subr.mxu0 0.0
    %199 = vmatpush1.msra.mxu0 0.0
    %200 = vmatprep.subr.mxu0 0.0
    %201 = vmatpush1.msra.mxu0 0.0
    %202 = vmatprep.subr.mxu0 0.0
    %203 = vmatpush1.msra.mxu0 0.0
    %204 = vmatprep.subr.mxu0 0.0
    %205 = vmatpush1.msra.mxu0 0.0
    %206 = vmatprep.subr.mxu0 0.0
    %207 = vmatpush1.msra.mxu0 0.0
    %208 = vmatprep.subr.mxu0 0.0
    %209 = vmatpush1.msra.mxu0 0.0
    %210 = vmatprep.subr.mxu0 0.0
    %211 = vmatpush1.msra.mxu0 0.0
    %212 = vmatprep.mubr.f32.mxu0 0.0
    %213 = vmatmul.mubr.f32.gmra.mrb[0].mxu0 %v146
    %v214 = vpop.f32.mrb[0].mxu0
    %v215 = vadd.f32 %v142, %v214
    %v216 = vpop.f32.mrb[0].mxu0
    %217 = vdwg.mxu0
    %vm218 = vcmask 41984
    %219 = vst.msk [vmem:[#allocation2] sm:$0x3] %vm218, %v215
    // Predicated region
    $region26: #{server_trashnet_forward.3} parent=1 // pred_check
      _
    $region27: #{server_trashnet_forward.3} parent=1 // pred_check_branch
      %221 = sbr.rel (0) target = $region29
    $region28: #{server_trashnet_forward.3} parent=1 // pred_region
      %s223 = ssub.s32 32, 32
      %224 = vsyncadd [#allocation3], %s223
      %s226 = sshll.u32 [#allocation2], 4
      %s227 = int_to_ptr.vmem [resolvable:$true] %s226
      %229 = dma.vmem_to_hbm [thread:$0]  %s227, 32, %s6, [#allocation3]
    $region29: #{server_trashnet_forward.3} parent=1 // pred_fallthru
      _
    // Predicated region
    $region30: #{server_trashnet_forward.3} parent=1 // pred_check
      _
    $region31: #{server_trashnet_forward.3} parent=1 // pred_check_branch
      %231 = sbr.rel (0) target = $region33
    $region32: #{server_trashnet_forward.3} parent=1 // pred_region
      %232 = dma.done [#allocation3], 32
    $region33: #{server_trashnet_forward.3} parent=1 // pred_fallthru
      _
    %233 = vsyncpa [#allocation3], 1

// kernel: server_trashnet_forward.2
$region0: #{server_trashnet_forward.2}
  #allocation0 [shape = 'u32[]', space=smem, size = 0x4, offset = 0x4, fixed_abs, tag = 'smem constant byte address 0x4 - core index']
  #allocation1 [shape = 'u32[144,128]{1,0:T(1,128)}', space=vmem, size = 0x12000, scoped, tag = 'internal scratch']
  %s0 = inlined_call_operand.vmem [shape: f32[2,49152], index: 0, kind: input, shape index: {}]
  %s1 = inlined_call_operand.vmem [shape: f32[49152,64], index: 1, kind: input, shape index: {}]
  %s2 = inlined_call_operand.vmem [shape: f32[2,2,64], index: 2, kind: output, shape index: {}]
  %s3 = sld [smem:[#allocation0]]
  $region45: #{server_trashnet_forward.2} parent=0
    _
  %s5 = ssub.s32 1, %s3
  %s6 = scalar_select 0, %s5, %s3
  loop: start=0, step=1, limit=8
  $region2: #{server_trashnet_forward.2} parent=0 // loop_pre_header
    _
  $region3: #{server_trashnet_forward.2} parent=0 // loop_header
    %s8 = sphi 0, %s12
    %p9 = scmp.ge.s32.totalorder %s8, 8
    %s15 = sphi 0, %s27
    %s16 = sphi 0, %s23
    %s17 = sphi 0, %s15
    %s18 = sphi 0, %s16
    %s19 = sphi 0, %s17
    %s20 = sphi 0, %s18
    %s34 = sphi 0, %s36
    %s37 = sphi 0, %s34
    %s38 = sphi 0, %s37
    %s54 = sphi 0, %s38
    %s64 = sphi 0, %s66
    %s67 = sphi 0, %s64
    %s68 = sphi 0, %s67
    %s84 = sphi 0, %s68
    %s90 = sphi 0, %s92
    %s93 = sphi 0, %s90
    %s94 = sphi 0, %s93
    %s110 = sphi 0, %s94
  $region4: #{server_trashnet_forward.2} parent=0 // loop_header_branch
    %11 = sbr.rel (%p9) target = $region8
  $region5: #{server_trashnet_forward.2} parent=0 // loop_body
    %s13 = ssub.s32 %s8, 1
    %s14 = ssub.s32 %s8, 2
    %s21 = sadd.s32 1, %s16
    %p22 = scmp.ge.s32.totalorder %s21, 3
    %s23 = scalar_select %p22, 0, %s21
    %s24 = sadd.s32 1, %s15
    %s25 = scalar_select %p22, %s24, %s15
    %p26 = scmp.ge.s32.totalorder %s25, 2
    %s27 = scalar_select %p26, 0, %s25
    %s28 = smul.u32 %s15, 3
    %s29 = sadd.s32 %s28, %s16
    %s30 = smul.u32 %s27, 3
    %s31 = sadd.s32 %s30, %s23
    %s32 = ssub.s32 %s29, %s31
    %p33 = scmp.eq.s32.totalorder %s32, 0
    %s35 = sadd.s32 %s34, 1
    %s36 = scalar_select %p33, %s34, %s35
    %p39 = pneg %p33
    %p40 = scmp.eq.s32.totalorder %s8, 5
    %p41 = por %p39, %p40
    %p42 = scmp.ne.s32.totalorder %s34, %s37
    %p43 = scmp.eq.s32.totalorder %s8, 0
    %p44 = por %p42, %p43
    %p45 = scmp.ne.s32.totalorder %s34, %s37
    %p46 = scmp.eq.s32.totalorder %s13, 5
    %p47 = por %p45, %p46
    %p48 = scmp.ne.s32.totalorder %s37, %s38
    %p49 = scmp.eq.s32.totalorder %s13, 0
    %p50 = por %p48, %p49
    %p51 = scmp.ne.s32.totalorder %s37, %s38
    %p52 = scmp.eq.s32.totalorder %s14, 5
    %p53 = por %p51, %p52
    %p55 = scmp.ne.s32.totalorder %s38, %s54
    %p56 = scmp.eq.s32.totalorder %s14, 0
    %p57 = por %p55, %p56
    %s58 = smul.u32 %s15, 3
    %s59 = sadd.s32 %s58, %s16
    %s60 = smul.u32 %s27, 3
    %s61 = sadd.s32 %s60, %s23
    %s62 = ssub.s32 %s59, %s61
    %p63 = scmp.eq.s32.totalorder %s62, 0
    %s65 = sadd.s32 %s64, 1
    %s66 = scalar_select %p63, %s64, %s65
    %p69 = pneg %p63
    %p70 = scmp.eq.s32.totalorder %s8, 5
    %p71 = por %p69, %p70
    %p72 = scmp.ne.s32.totalorder %s64, %s67
    %p73 = scmp.eq.s32.totalorder %s8, 0
    %p74 = por %p72, %p73
    %p75 = scmp.ne.s32.totalorder %s64, %s67
    %p76 = scmp.eq.s32.totalorder %s13, 5
    %p77 = por %p75, %p76
    %p78 = scmp.ne.s32.totalorder %s67, %s68
    %p79 = scmp.eq.s32.totalorder %s13, 0
    %p80 = por %p78, %p79
    %p81 = scmp.ne.s32.totalorder %s67, %s68
    %p82 = scmp.eq.s32.totalorder %s14, 5
    %p83 = por %p81, %p82
    %p85 = scmp.ne.s32.totalorder %s68, %s84
    %p86 = scmp.eq.s32.totalorder %s14, 0
    %p87 = por %p85, %p86
    %s88 = ssub.s32 %s15, %s27
    %p89 = scmp.eq.s32.totalorder %s88, 0
    %s91 = sadd.s32 %s90, 1
    %s92 = scalar_select %p89, %s90, %s91
    %p95 = pneg %p89
    %p96 = scmp.eq.s32.totalorder %s8, 5
    %p97 = por %p95, %p96
    %p98 = scmp.ne.s32.totalorder %s90, %s93
    %p99 = scmp.eq.s32.totalorder %s8, 0
    %p100 = por %p98, %p99
    %p101 = scmp.ne.s32.totalorder %s90, %s93
    %p102 = scmp.eq.s32.totalorder %s13, 5
    %p103 = por %p101, %p102
    %p104 = scmp.ne.s32.totalorder %s93, %s94
    %p105 = scmp.eq.s32.totalorder %s13, 0
    %p106 = por %p104, %p105
    %p107 = scmp.ne.s32.totalorder %s93, %s94
    %p108 = scmp.eq.s32.totalorder %s14, 5
    %p109 = por %p107, %p108
    %p111 = scmp.ne.s32.totalorder %s94, %s110
    %p112 = scmp.eq.s32.totalorder %s14, 0
    %p113 = por %p111, %p112
    %p114 = scmp.le.s32.totalorder 1, %s8
    %p115 = scmp.lt.s32.totalorder %s8, 7
    %p116 = pnand %p114, %p115
    %p117 = pneg %p116
    // Predicated region
    $region9: #{server_trashnet_forward.2} parent=5 // pred_check
      _
    $region10: #{server_trashnet_forward.2} parent=5 // pred_check_branch
      %119 = sbr.rel (%p116) target = $region12
    $region11: #{server_trashnet_forward.2} parent=5 // pred_region
      %s120 = ssub.s32 %s8, 1
    $region12: #{server_trashnet_forward.2} parent=5 // pred_fallthru
      _
    %p121 = scmp.lt.s32.totalorder %s8, 6
    // Predicated region
    $region13: #{server_trashnet_forward.2} parent=5 // pred_check
      %p122 = pneg %p121
    $region14: #{server_trashnet_forward.2} parent=5 // pred_check_branch
      %124 = sbr.rel (%p122) target = $region16
    $region15: #{server_trashnet_forward.2} parent=5 // pred_region
      // Predicated region
      $region17: #{server_trashnet_forward.2} parent=15 // pred_check
        %p125 = pneg %p44
      $region18: #{server_trashnet_forward.2} parent=15 // pred_check_branch
        %127 = sbr.rel (%p125) target = $region20
      $region19: #{server_trashnet_forward.2} parent=15 // pred_region
        %s128 = smul.u32 %s15, 3
        %s129 = sadd.s32 %s128, %s16
        %s130 = smul.u32 64, %s129
        %p131 = scmp.lt.s32.totalorder %s130, 383
        %s132 = scalar_select %p131, %s130, 383
        %s133 = smul.addr %s132, 2
        %s134 = scalar_lea.vmem %s0, %s133
        %s135 = smul.u32 %s15, 3
        %s136 = sadd.s32 %s135, %s16
        %s137 = smul.u32 64, %s136
      $region20: #{server_trashnet_forward.2} parent=15 // pred_fallthru
        _
      // Predicated region
      $region21: #{server_trashnet_forward.2} parent=15 // pred_check
        %p138 = pneg %p74
      $region22: #{server_trashnet_forward.2} parent=15 // pred_check_branch
        %140 = sbr.rel (%p138) target = $region24
      $region23: #{server_trashnet_forward.2} parent=15 // pred_region
        %s141 = smul.u32 %s15, 3
        %s142 = sadd.s32 %s141, %s16
        %s143 = smul.u32 1024, %s142
        %p144 = scmp.lt.s32.totalorder %s143, 6143
        %s145 = scalar_select %p144, %s143, 6143
        %s146 = smul.addr %s145, 8
        %s147 = scalar_lea.vmem %s1, %s146
        %s148 = smul.u32 %s15, 3
        %s149 = sadd.s32 %s148, %s16
        %s150 = smul.u32 1024, %s149
      $region24: #{server_trashnet_forward.2} parent=15 // pred_fallthru
        _
    $region16: #{server_trashnet_forward.2} parent=5 // pred_fallthru
      _
    %p151 = scmp.le.s32.totalorder 1, %s8
    %p152 = scmp.lt.s32.totalorder %s8, 7
    %p153 = pnand %p151, %p152
    %p154 = pneg %p153
    // Predicated region
    $region25: #{server_trashnet_forward.2} parent=5 // pred_check
      _
    $region26: #{server_trashnet_forward.2} parent=5 // pred_check_branch
      %156 = sbr.rel (%p153) target = $region28
    $region27: #{server_trashnet_forward.2} parent=5 // pred_region
      %s157 = ssub.s32 %s8, 1
      %s158 = smul.u32 %s17, 3
      %s159 = sadd.s32 %s158, %s18
      %s160 = smul.u32 64, %s159
      %p161 = scmp.lt.s32.totalorder %s160, 383
      %s162 = scalar_select %p161, %s160, 383
      %s163 = smul.addr %s162, 2
      %s164 = scalar_lea.vmem %s0, %s163
      %p165 = pneg %p50
      %p166 = pneg %p47
      %s167 = smul.u32 %s17, 3
      %s168 = sadd.s32 %s167, %s18
      %s169 = smul.u32 1024, %s168
      %p170 = scmp.lt.s32.totalorder %s169, 6143
      %s171 = scalar_select %p170, %s169, 6143
      %s172 = smul.addr %s171, 8
      %s173 = scalar_lea.vmem %s1, %s172
      %p174 = pneg %p80
      %p175 = pneg %p77
      %p176 = pneg %p106
      %p177 = pneg %p103
      %p178 = scmp.lt.s32.totalorder %s17, 1
      %s179 = scalar_select %p178, %s17, 1
      %s180 = smul.addr %s179, 2
      %s181 = scalar_lea.vmem %s2, %s180
      %s182 = smul.u32 %s17, 3
      %s183 = sadd.s32 %s182, %s18
      %s184 = smul.u32 64, %s183
      %p185 = scmp.lt.s32.totalorder %s184, 383
      %s186 = scalar_select %p185, %s184, 383
      %s187 = smul.addr %s186, 2
      %s188 = scalar_lea.vmem %s0, %s187
      %s189 = smul.u32 %s17, 3
      %s190 = sadd.s32 %s189, %s18
      %s191 = smul.u32 64, %s190
      %s192 = smul.u32 %s17, 3
      %s193 = sadd.s32 %s192, %s18
      %s194 = smul.u32 1024, %s193
      %p195 = scmp.lt.s32.totalorder %s194, 6143
      %s196 = scalar_select %p195, %s194, 6143
      %s197 = smul.addr %s196, 8
      %s198 = scalar_lea.vmem %s1, %s197
      %s199 = smul.u32 %s17, 3
      %s200 = sadd.s32 %s199, %s18
      %s201 = smul.u32 1024, %s200
      %p202 = scmp.lt.s32.totalorder %s17, 1
      %s203 = scalar_select %p202, %s17, 1
      %s204 = smul.addr %s203, 2
      %s205 = scalar_lea.vmem %s2, %s204
      %p206 = scmp.eq.s32.totalorder %s18, 0
      // Predicated region
      $region29: #{server_trashnet_forward.2} parent=27 // pred_check
        %p207 = pneg %p206
      $region30: #{server_trashnet_forward.2} parent=27 // pred_check_branch
        %209 = sbr.rel (%p207) target = $region32
      $region31: #{server_trashnet_forward.2} parent=27 // pred_region
        %vm210 = vcmask 517120
        %211 = vst.msk [vmem:[%s205] sm:$0x3] %vm210, 0.0
      $region32: #{server_trashnet_forward.2} parent=27 // pred_fallthru
        _
      %v212 = vld [vmem:[%s205] sm:$0x3]
      %v213 = vld [vmem:[%s188] sm:$0xff]
      %v214 = vld [vmem:[%s188 + $0x8] sm:$0xff]
      %v215 = vld [vmem:[%s188 + $0x10] sm:$0xff]
      %v216 = vld [vmem:[%s188 + $0x18] sm:$0xff]
      %v217 = vld [vmem:[%s188 + $0x20] sm:$0xff]
      %v218 = vld [vmem:[%s188 + $0x28] sm:$0xff]
      %v219 = vld [vmem:[%s188 + $0x30] sm:$0xff]
      %v220 = vld [vmem:[%s188 + $0x38] sm:$0xff]
      %v221 = vld [vmem:[%s188 + $0x40] sm:$0xff]
      %v222 = vld [vmem:[%s188 + $0x48] sm:$0xff]
      %v223 = vld [vmem:[%s188 + $0x50] sm:$0xff]
      %v224 = vld [vmem:[%s188 + $0x58] sm:$0xff]
      %v225 = vld [vmem:[%s188 + $0x60] sm:$0xff]
      %v226 = vld [vmem:[%s188 + $0x68] sm:$0xff]
      %v227 = vld [vmem:[%s188 + $0x70] sm:$0xff]
      %v228 = vld [vmem:[%s188 + $0x78] sm:$0xff]
      %v229 = vld [vmem:[%s198] sm:$0xff]
      %v230 = vld [vmem:[%s198 + $0x8] sm:$0xff]
      %v231 = vld [vmem:[%s198 + $0x10] sm:$0xff]
      %v232 = vld [vmem:[%s198 + $0x18] sm:$0xff]
      %v233 = vld [vmem:[%s198 + $0x20] sm:$0xff]
      %v234 = vld [vmem:[%s198 + $0x28] sm:$0xff]
      %v235 = vld [vmem:[%s198 + $0x30] sm:$0xff]
      %v236 = vld [vmem:[%s198 + $0x38] sm:$0xff]
      %v237 = vld [vmem:[%s198 + $0x40] sm:$0xff]
      %v238 = vld [vmem:[%s198 + $0x48] sm:$0xff]
      %v239 = vld [vmem:[%s198 + $0x50] sm:$0xff]
      %v240 = vld [vmem:[%s198 + $0x58] sm:$0xff]
      %v241 = vld [vmem:[%s198 + $0x60] sm:$0xff]
      %v242 = vld [vmem:[%s198 + $0x68] sm:$0xff]
      %v243 = vld [vmem:[%s198 + $0x70] sm:$0xff]
      %v244 = vld [vmem:[%s198 + $0x78] sm:$0xff]
      %v245 = vld [vmem:[%s198 + $0x80] sm:$0xff]
      %v246 = vld [vmem:[%s198 + $0x88] sm:$0xff]
      %v247 = vld [vmem:[%s198 + $0x90] sm:$0xff]
      %v248 = vld [vmem:[%s198 + $0x98] sm:$0xff]
      %v249 = vld [vmem:[%s198 + $0xa0] sm:$0xff]
      %v250 = vld [vmem:[%s198 + $0xa8] sm:$0xff]
      %v251 = vld [vmem:[%s198 + $0xb0] sm:$0xff]
      %v252 = vld [vmem:[%s198 + $0xb8] sm:$0xff]
      %v253 = vld [vmem:[%s198 + $0xc0] sm:$0xff]
      %v254 = vld [vmem:[%s198 + $0xc8] sm:$0xff]
      %v255 = vld [vmem:[%s198 + $0xd0] sm:$0xff]
      %v256 = vld [vmem:[%s198 + $0xd8] sm:$0xff]
      %v257 = vld [vmem:[%s198 + $0xe0] sm:$0xff]
      %v258 = vld [vmem:[%s198 + $0xe8] sm:$0xff]
      %v259 = vld [vmem:[%s198 + $0xf0] sm:$0xff]
      %v260 = vld [vmem:[%s198 + $0xf8] sm:$0xff]
      %v261 = vld [vmem:[%s198 + $0x100] sm:$0xff]
      %v262 = vld [vmem:[%s198 + $0x108] sm:$0xff]
      %v263 = vld [vmem:[%s198 + $0x110] sm:$0xff]
      %v264 = vld [vmem:[%s198 + $0x118] sm:$0xff]
      %v265 = vld [vmem:[%s198 + $0x120] sm:$0xff]
      %v266 = vld [vmem:[%s198 + $0x128] sm:$0xff]
      %v267 = vld [vmem:[%s198 + $0x130] sm:$0xff]
      %v268 = vld [vmem:[%s198 + $0x138] sm:$0xff]
      %v269 = vld [vmem:[%s198 + $0x140] sm:$0xff]
      %v270 = vld [vmem:[%s198 + $0x148] sm:$0xff]
      %v271 = vld [vmem:[%s198 + $0x150] sm:$0xff]
      %v272 = vld [vmem:[%s198 + $0x158] sm:$0xff]
      %v273 = vld [vmem:[%s198 + $0x160] sm:$0xff]
      %v274 = vld [vmem:[%s198 + $0x168] sm:$0xff]
      %v275 = vld [vmem:[%s198 + $0x170] sm:$0xff]
      %v276 = vld [vmem:[%s198 + $0x178] sm:$0xff]
      %v277 = vld [vmem:[%s198 + $0x180] sm:$0xff]
      %v278 = vld [vmem:[%s198 + $0x188] sm:$0xff]
      %v279 = vld [vmem:[%s198 + $0x190] sm:$0xff]
      %v280 = vld [vmem:[%s198 + $0x198] sm:$0xff]
      %v281 = vld [vmem:[%s198 + $0x1a0] sm:$0xff]
      %v282 = vld [vmem:[%s198 + $0x1a8] sm:$0xff]
      %v283 = vld [vmem:[%s198 + $0x1b0] sm:$0xff]
      %v284 = vld [vmem:[%s198 + $0x1b8] sm:$0xff]
      %v285 = vld [vmem:[%s198 + $0x1c0] sm:$0xff]
      %v286 = vld [vmem:[%s198 + $0x1c8] sm:$0xff]
      %v287 = vld [vmem:[%s198 + $0x1d0] sm:$0xff]
      %v288 = vld [vmem:[%s198 + $0x1d8] sm:$0xff]
      %v289 = vld [vmem:[%s198 + $0x1e0] sm:$0xff]
      %v290 = vld [vmem:[%s198 + $0x1e8] sm:$0xff]
      %v291 = vld [vmem:[%s198 + $0x1f0] sm:$0xff]
      %v292 = vld [vmem:[%s198 + $0x1f8] sm:$0xff]
      %v293 = vld [vmem:[%s198 + $0x200] sm:$0xff]
      %v294 = vld [vmem:[%s198 + $0x208] sm:$0xff]
      %v295 = vld [vmem:[%s198 + $0x210] sm:$0xff]
      %v296 = vld [vmem:[%s198 + $0x218] sm:$0xff]
      %v297 = vld [vmem:[%s198 + $0x220] sm:$0xff]
      %v298 = vld [vmem:[%s198 + $0x228] sm:$0xff]
      %v299 = vld [vmem:[%s198 + $0x230] sm:$0xff]
      %v300 = vld [vmem:[%s198 + $0x238] sm:$0xff]
      %v301 = vld [vmem:[%s198 + $0x240] sm:$0xff]
      %v302 = vld [vmem:[%s198 + $0x248] sm:$0xff]
      %v303 = vld [vmem:[%s198 + $0x250] sm:$0xff]
      %v304 = vld [vmem:[%s198 + $0x258] sm:$0xff]
      %v305 = vld [vmem:[%s198 + $0x260] sm:$0xff]
      %v306 = vld [vmem:[%s198 + $0x268] sm:$0xff]
      %v307 = vld [vmem:[%s198 + $0x270] sm:$0xff]
      %v308 = vld [vmem:[%s198 + $0x278] sm:$0xff]
      %v309 = vld [vmem:[%s198 + $0x280] sm:$0xff]
      %v310 = vld [vmem:[%s198 + $0x288] sm:$0xff]
      %v311 = vld [vmem:[%s198 + $0x290] sm:$0xff]
      %v312 = vld [vmem:[%s198 + $0x298] sm:$0xff]
      %v313 = vld [vmem:[%s198 + $0x2a0] sm:$0xff]
      %v314 = vld [vmem:[%s198 + $0x2a8] sm:$0xff]
      %v315 = vld [vmem:[%s198 + $0x2b0] sm:$0xff]
      %v316 = vld [vmem:[%s198 + $0x2b8] sm:$0xff]
      %v317 = vld [vmem:[%s198 + $0x2c0] sm:$0xff]
      %v318 = vld [vmem:[%s198 + $0x2c8] sm:$0xff]
      %v319 = vld [vmem:[%s198 + $0x2d0] sm:$0xff]
      %v320 = vld [vmem:[%s198 + $0x2d8] sm:$0xff]
      %v321 = vld [vmem:[%s198 + $0x2e0] sm:$0xff]
      %v322 = vld [vmem:[%s198 + $0x2e8] sm:$0xff]
      %v323 = vld [vmem:[%s198 + $0x2f0] sm:$0xff]
      %v324 = vld [vmem:[%s198 + $0x2f8] sm:$0xff]
      %v325 = vld [vmem:[%s198 + $0x300] sm:$0xff]
      %v326 = vld [vmem:[%s198 + $0x308] sm:$0xff]
      %v327 = vld [vmem:[%s198 + $0x310] sm:$0xff]
      %v328 = vld [vmem:[%s198 + $0x318] sm:$0xff]
      %v329 = vld [vmem:[%s198 + $0x320] sm:$0xff]
      %v330 = vld [vmem:[%s198 + $0x328] sm:$0xff]
      %v331 = vld [vmem:[%s198 + $0x330] sm:$0xff]
      %v332 = vld [vmem:[%s198 + $0x338] sm:$0xff]
      %v333 = vld [vmem:[%s198 + $0x340] sm:$0xff]
      %v334 = vld [vmem:[%s198 + $0x348] sm:$0xff]
      %v335 = vld [vmem:[%s198 + $0x350] sm:$0xff]
      %v336 = vld [vmem:[%s198 + $0x358] sm:$0xff]
      %v337 = vld [vmem:[%s198 + $0x360] sm:$0xff]
      %v338 = vld [vmem:[%s198 + $0x368] sm:$0xff]
      %v339 = vld [vmem:[%s198 + $0x370] sm:$0xff]
      %v340 = vld [vmem:[%s198 + $0x378] sm:$0xff]
      %v341 = vld [vmem:[%s198 + $0x380] sm:$0xff]
      %v342 = vld [vmem:[%s198 + $0x388] sm:$0xff]
      %v343 = vld [vmem:[%s198 + $0x390] sm:$0xff]
      %v344 = vld [vmem:[%s198 + $0x398] sm:$0xff]
      %v345 = vld [vmem:[%s198 + $0x3a0] sm:$0xff]
      %v346 = vld [vmem:[%s198 + $0x3a8] sm:$0xff]
      %v347 = vld [vmem:[%s198 + $0x3b0] sm:$0xff]
      %v348 = vld [vmem:[%s198 + $0x3b8] sm:$0xff]
      %v349 = vld [vmem:[%s198 + $0x3c0] sm:$0xff]
      %v350 = vld [vmem:[%s198 + $0x3c8] sm:$0xff]
      %v351 = vld [vmem:[%s198 + $0x3d0] sm:$0xff]
      %v352 = vld [vmem:[%s198 + $0x3d8] sm:$0xff]
      %v353 = vld [vmem:[%s198 + $0x3e0] sm:$0xff]
      %v354 = vld [vmem:[%s198 + $0x3e8] sm:$0xff]
      %v355 = vld [vmem:[%s198 + $0x3f0] sm:$0xff]
      %v356 = vld [vmem:[%s198 + $0x3f8] sm:$0xff]
      %v357 = vld [vmem:[%s198 + $0x400] sm:$0xff]
      %v358 = vld [vmem:[%s198 + $0x408] sm:$0xff]
      %v359 = vld [vmem:[%s198 + $0x410] sm:$0xff]
      %v360 = vld [vmem:[%s198 + $0x418] sm:$0xff]
      %v361 = vld [vmem:[%s198 + $0x420] sm:$0xff]
      %v362 = vld [vmem:[%s198 + $0x428] sm:$0xff]
      %v363 = vld [vmem:[%s198 + $0x430] sm:$0xff]
      %v364 = vld [vmem:[%s198 + $0x438] sm:$0xff]
      %v365 = vld [vmem:[%s198 + $0x440] sm:$0xff]
      %v366 = vld [vmem:[%s198 + $0x448] sm:$0xff]
      %v367 = vld [vmem:[%s198 + $0x450] sm:$0xff]
      %v368 = vld [vmem:[%s198 + $0x458] sm:$0xff]
      %v369 = vld [vmem:[%s198 + $0x460] sm:$0xff]
      %v370 = vld [vmem:[%s198 + $0x468] sm:$0xff]
      %v371 = vld [vmem:[%s198 + $0x470] sm:$0xff]
      %v372 = vld [vmem:[%s198 + $0x478] sm:$0xff]
      %v373 = vld [vmem:[%s198 + $0x480] sm:$0xff]
      %v374 = vld [vmem:[%s198 + $0x488] sm:$0xff]
      %v375 = vld [vmem:[%s198 + $0x490] sm:$0xff]
      %v376 = vld [vmem:[%s198 + $0x498] sm:$0xff]
      %v377 = vld [vmem:[%s198 + $0x4a0] sm:$0xff]
      %v378 = vld [vmem:[%s198 + $0x4a8] sm:$0xff]
      %v379 = vld [vmem:[%s198 + $0x4b0] sm:$0xff]
      %v380 = vld [vmem:[%s198 + $0x4b8] sm:$0xff]
      %v381 = vld [vmem:[%s198 + $0x4c0] sm:$0xff]
      %v382 = vld [vmem:[%s198 + $0x4c8] sm:$0xff]
      %v383 = vld [vmem:[%s198 + $0x4d0] sm:$0xff]
      %v384 = vld [vmem:[%s198 + $0x4d8] sm:$0xff]
      %v385 = vld [vmem:[%s198 + $0x4e0] sm:$0xff]
      %v386 = vld [vmem:[%s198 + $0x4e8] sm:$0xff]
      %v387 = vld [vmem:[%s198 + $0x4f0] sm:$0xff]
      %v388 = vld [vmem:[%s198 + $0x4f8] sm:$0xff]
      %v389 = vld [vmem:[%s198 + $0x500] sm:$0xff]
      %v390 = vld [vmem:[%s198 + $0x508] sm:$0xff]
      %v391 = vld [vmem:[%s198 + $0x510] sm:$0xff]
      %v392 = vld [vmem:[%s198 + $0x518] sm:$0xff]
      %v393 = vld [vmem:[%s198 + $0x520] sm:$0xff]
      %v394 = vld [vmem:[%s198 + $0x528] sm:$0xff]
      %v395 = vld [vmem:[%s198 + $0x530] sm:$0xff]
      %v396 = vld [vmem:[%s198 + $0x538] sm:$0xff]
      %v397 = vld [vmem:[%s198 + $0x540] sm:$0xff]
      %v398 = vld [vmem:[%s198 + $0x548] sm:$0xff]
      %v399 = vld [vmem:[%s198 + $0x550] sm:$0xff]
      %v400 = vld [vmem:[%s198 + $0x558] sm:$0xff]
      %v401 = vld [vmem:[%s198 + $0x560] sm:$0xff]
      %v402 = vld [vmem:[%s198 + $0x568] sm:$0xff]
      %v403 = vld [vmem:[%s198 + $0x570] sm:$0xff]
      %v404 = vld [vmem:[%s198 + $0x578] sm:$0xff]
      %v405 = vld [vmem:[%s198 + $0x580] sm:$0xff]
      %v406 = vld [vmem:[%s198 + $0x588] sm:$0xff]
      %v407 = vld [vmem:[%s198 + $0x590] sm:$0xff]
      %v408 = vld [vmem:[%s198 + $0x598] sm:$0xff]
      %v409 = vld [vmem:[%s198 + $0x5a0] sm:$0xff]
      %v410 = vld [vmem:[%s198 + $0x5a8] sm:$0xff]
      %v411 = vld [vmem:[%s198 + $0x5b0] sm:$0xff]
      %v412 = vld [vmem:[%s198 + $0x5b8] sm:$0xff]
      %v413 = vld [vmem:[%s198 + $0x5c0] sm:$0xff]
      %v414 = vld [vmem:[%s198 + $0x5c8] sm:$0xff]
      %v415 = vld [vmem:[%s198 + $0x5d0] sm:$0xff]
      %v416 = vld [vmem:[%s198 + $0x5d8] sm:$0xff]
      %v417 = vld [vmem:[%s198 + $0x5e0] sm:$0xff]
      %v418 = vld [vmem:[%s198 + $0x5e8] sm:$0xff]
      %v419 = vld [vmem:[%s198 + $0x5f0] sm:$0xff]
      %v420 = vld [vmem:[%s198 + $0x5f8] sm:$0xff]
      %v421 = vld [vmem:[%s198 + $0x600] sm:$0xff]
      %v422 = vld [vmem:[%s198 + $0x608] sm:$0xff]
      %v423 = vld [vmem:[%s198 + $0x610] sm:$0xff]
      %v424 = vld [vmem:[%s198 + $0x618] sm:$0xff]
      %v425 = vld [vmem:[%s198 + $0x620] sm:$0xff]
      %v426 = vld [vmem:[%s198 + $0x628] sm:$0xff]
      %v427 = vld [vmem:[%s198 + $0x630] sm:$0xff]
      %v428 = vld [vmem:[%s198 + $0x638] sm:$0xff]
      %v429 = vld [vmem:[%s198 + $0x640] sm:$0xff]
      %v430 = vld [vmem:[%s198 + $0x648] sm:$0xff]
      %v431 = vld [vmem:[%s198 + $0x650] sm:$0xff]
      %v432 = vld [vmem:[%s198 + $0x658] sm:$0xff]
      %v433 = vld [vmem:[%s198 + $0x660] sm:$0xff]
      %v434 = vld [vmem:[%s198 + $0x668] sm:$0xff]
      %v435 = vld [vmem:[%s198 + $0x670] sm:$0xff]
      %v436 = vld [vmem:[%s198 + $0x678] sm:$0xff]
      %v437 = vld [vmem:[%s198 + $0x680] sm:$0xff]
      %v438 = vld [vmem:[%s198 + $0x688] sm:$0xff]
      %v439 = vld [vmem:[%s198 + $0x690] sm:$0xff]
      %v440 = vld [vmem:[%s198 + $0x698] sm:$0xff]
      %v441 = vld [vmem:[%s198 + $0x6a0] sm:$0xff]
      %v442 = vld [vmem:[%s198 + $0x6a8] sm:$0xff]
      %v443 = vld [vmem:[%s198 + $0x6b0] sm:$0xff]
      %v444 = vld [vmem:[%s198 + $0x6b8] sm:$0xff]
      %v445 = vld [vmem:[%s198 + $0x6c0] sm:$0xff]
      %v446 = vld [vmem:[%s198 + $0x6c8] sm:$0xff]
      %v447 = vld [vmem:[%s198 + $0x6d0] sm:$0xff]
      %v448 = vld [vmem:[%s198 + $0x6d8] sm:$0xff]
      %v449 = vld [vmem:[%s198 + $0x6e0] sm:$0xff]
      %v450 = vld [vmem:[%s198 + $0x6e8] sm:$0xff]
      %v451 = vld [vmem:[%s198 + $0x6f0] sm:$0xff]
      %v452 = vld [vmem:[%s198 + $0x6f8] sm:$0xff]
      %v453 = vld [vmem:[%s198 + $0x700] sm:$0xff]
      %v454 = vld [vmem:[%s198 + $0x708] sm:$0xff]
      %v455 = vld [vmem:[%s198 + $0x710] sm:$0xff]
      %v456 = vld [vmem:[%s198 + $0x718] sm:$0xff]
      %v457 = vld [vmem:[%s198 + $0x720] sm:$0xff]
      %v458 = vld [vmem:[%s198 + $0x728] sm:$0xff]
      %v459 = vld [vmem:[%s198 + $0x730] sm:$0xff]
      %v460 = vld [vmem:[%s198 + $0x738] sm:$0xff]
      %v461 = vld [vmem:[%s198 + $0x740] sm:$0xff]
      %v462 = vld [vmem:[%s198 + $0x748] sm:$0xff]
      %v463 = vld [vmem:[%s198 + $0x750] sm:$0xff]
      %v464 = vld [vmem:[%s198 + $0x758] sm:$0xff]
      %v465 = vld [vmem:[%s198 + $0x760] sm:$0xff]
      %v466 = vld [vmem:[%s198 + $0x768] sm:$0xff]
      %v467 = vld [vmem:[%s198 + $0x770] sm:$0xff]
      %v468 = vld [vmem:[%s198 + $0x778] sm:$0xff]
      %v469 = vld [vmem:[%s198 + $0x780] sm:$0xff]
      %v470 = vld [vmem:[%s198 + $0x788] sm:$0xff]
      %v471 = vld [vmem:[%s198 + $0x790] sm:$0xff]
      %v472 = vld [vmem:[%s198 + $0x798] sm:$0xff]
      %v473 = vld [vmem:[%s198 + $0x7a0] sm:$0xff]
      %v474 = vld [vmem:[%s198 + $0x7a8] sm:$0xff]
      %v475 = vld [vmem:[%s198 + $0x7b0] sm:$0xff]
      %v476 = vld [vmem:[%s198 + $0x7b8] sm:$0xff]
      %v477 = vld [vmem:[%s198 + $0x7c0] sm:$0xff]
      %v478 = vld [vmem:[%s198 + $0x7c8] sm:$0xff]
      %v479 = vld [vmem:[%s198 + $0x7d0] sm:$0xff]
      %v480 = vld [vmem:[%s198 + $0x7d8] sm:$0xff]
      %v481 = vld [vmem:[%s198 + $0x7e0] sm:$0xff]
      %v482 = vld [vmem:[%s198 + $0x7e8] sm:$0xff]
      %v483 = vld [vmem:[%s198 + $0x7f0] sm:$0xff]
      %v484 = vld [vmem:[%s198 + $0x7f8] sm:$0xff]
      %v485 = vld [vmem:[%s198 + $0x800] sm:$0xff]
      %v486 = vld [vmem:[%s198 + $0x808] sm:$0xff]
      %v487 = vld [vmem:[%s198 + $0x810] sm:$0xff]
      %v488 = vld [vmem:[%s198 + $0x818] sm:$0xff]
      %v489 = vld [vmem:[%s198 + $0x820] sm:$0xff]
      %v490 = vld [vmem:[%s198 + $0x828] sm:$0xff]
      %v491 = vld [vmem:[%s198 + $0x830] sm:$0xff]
      %v492 = vld [vmem:[%s198 + $0x838] sm:$0xff]
      %v493 = vld [vmem:[%s198 + $0x840] sm:$0xff]
      %v494 = vld [vmem:[%s198 + $0x848] sm:$0xff]
      %v495 = vld [vmem:[%s198 + $0x850] sm:$0xff]
      %v496 = vld [vmem:[%s198 + $0x858] sm:$0xff]
      %v497 = vld [vmem:[%s198 + $0x860] sm:$0xff]
      %v498 = vld [vmem:[%s198 + $0x868] sm:$0xff]
      %v499 = vld [vmem:[%s198 + $0x870] sm:$0xff]
      %v500 = vld [vmem:[%s198 + $0x878] sm:$0xff]
      %v501 = vld [vmem:[%s198 + $0x880] sm:$0xff]
      %v502 = vld [vmem:[%s198 + $0x888] sm:$0xff]
      %v503 = vld [vmem:[%s198 + $0x890] sm:$0xff]
      %v504 = vld [vmem:[%s198 + $0x898] sm:$0xff]
      %v505 = vld [vmem:[%s198 + $0x8a0] sm:$0xff]
      %v506 = vld [vmem:[%s198 + $0x8a8] sm:$0xff]
      %v507 = vld [vmem:[%s198 + $0x8b0] sm:$0xff]
      %v508 = vld [vmem:[%s198 + $0x8b8] sm:$0xff]
      %v509 = vld [vmem:[%s198 + $0x8c0] sm:$0xff]
      %v510 = vld [vmem:[%s198 + $0x8c8] sm:$0xff]
      %v511 = vld [vmem:[%s198 + $0x8d0] sm:$0xff]
      %v512 = vld [vmem:[%s198 + $0x8d8] sm:$0xff]
      %v513 = vld [vmem:[%s198 + $0x8e0] sm:$0xff]
      %v514 = vld [vmem:[%s198 + $0x8e8] sm:$0xff]
      %v515 = vld [vmem:[%s198 + $0x8f0] sm:$0xff]
      %v516 = vld [vmem:[%s198 + $0x8f8] sm:$0xff]
      %v517 = vld [vmem:[%s198 + $0x900] sm:$0xff]
      %v518 = vld [vmem:[%s198 + $0x908] sm:$0xff]
      %v519 = vld [vmem:[%s198 + $0x910] sm:$0xff]
      %v520 = vld [vmem:[%s198 + $0x918] sm:$0xff]
      %v521 = vld [vmem:[%s198 + $0x920] sm:$0xff]
      %v522 = vld [vmem:[%s198 + $0x928] sm:$0xff]
      %v523 = vld [vmem:[%s198 + $0x930] sm:$0xff]
      %v524 = vld [vmem:[%s198 + $0x938] sm:$0xff]
      %v525 = vld [vmem:[%s198 + $0x940] sm:$0xff]
      %v526 = vld [vmem:[%s198 + $0x948] sm:$0xff]
      %v527 = vld [vmem:[%s198 + $0x950] sm:$0xff]
      %v528 = vld [vmem:[%s198 + $0x958] sm:$0xff]
      %v529 = vld [vmem:[%s198 + $0x960] sm:$0xff]
      %v530 = vld [vmem:[%s198 + $0x968] sm:$0xff]
      %v531 = vld [vmem:[%s198 + $0x970] sm:$0xff]
      %v532 = vld [vmem:[%s198 + $0x978] sm:$0xff]
      %v533 = vld [vmem:[%s198 + $0x980] sm:$0xff]
      %v534 = vld [vmem:[%s198 + $0x988] sm:$0xff]
      %v535 = vld [vmem:[%s198 + $0x990] sm:$0xff]
      %v536 = vld [vmem:[%s198 + $0x998] sm:$0xff]
      %v537 = vld [vmem:[%s198 + $0x9a0] sm:$0xff]
      %v538 = vld [vmem:[%s198 + $0x9a8] sm:$0xff]
      %v539 = vld [vmem:[%s198 + $0x9b0] sm:$0xff]
      %v540 = vld [vmem:[%s198 + $0x9b8] sm:$0xff]
      %v541 = vld [vmem:[%s198 + $0x9c0] sm:$0xff]
      %v542 = vld [vmem:[%s198 + $0x9c8] sm:$0xff]
      %v543 = vld [vmem:[%s198 + $0x9d0] sm:$0xff]
      %v544 = vld [vmem:[%s198 + $0x9d8] sm:$0xff]
      %v545 = vld [vmem:[%s198 + $0x9e0] sm:$0xff]
      %v546 = vld [vmem:[%s198 + $0x9e8] sm:$0xff]
      %v547 = vld [vmem:[%s198 + $0x9f0] sm:$0xff]
      %v548 = vld [vmem:[%s198 + $0x9f8] sm:$0xff]
      %v549 = vld [vmem:[%s198 + $0xa00] sm:$0xff]
      %v550 = vld [vmem:[%s198 + $0xa08] sm:$0xff]
      %v551 = vld [vmem:[%s198 + $0xa10] sm:$0xff]
      %v552 = vld [vmem:[%s198 + $0xa18] sm:$0xff]
      %v553 = vld [vmem:[%s198 + $0xa20] sm:$0xff]
      %v554 = vld [vmem:[%s198 + $0xa28] sm:$0xff]
      %v555 = vld [vmem:[%s198 + $0xa30] sm:$0xff]
      %v556 = vld [vmem:[%s198 + $0xa38] sm:$0xff]
      %v557 = vld [vmem:[%s198 + $0xa40] sm:$0xff]
      %v558 = vld [vmem:[%s198 + $0xa48] sm:$0xff]
      %v559 = vld [vmem:[%s198 + $0xa50] sm:$0xff]
      %v560 = vld [vmem:[%s198 + $0xa58] sm:$0xff]
      %v561 = vld [vmem:[%s198 + $0xa60] sm:$0xff]
      %v562 = vld [vmem:[%s198 + $0xa68] sm:$0xff]
      %v563 = vld [vmem:[%s198 + $0xa70] sm:$0xff]
      %v564 = vld [vmem:[%s198 + $0xa78] sm:$0xff]
      %v565 = vld [vmem:[%s198 + $0xa80] sm:$0xff]
      %v566 = vld [vmem:[%s198 + $0xa88] sm:$0xff]
      %v567 = vld [vmem:[%s198 + $0xa90] sm:$0xff]
      %v568 = vld [vmem:[%s198 + $0xa98] sm:$0xff]
      %v569 = vld [vmem:[%s198 + $0xaa0] sm:$0xff]
      %v570 = vld [vmem:[%s198 + $0xaa8] sm:$0xff]
      %v571 = vld [vmem:[%s198 + $0xab0] sm:$0xff]
      %v572 = vld [vmem:[%s198 + $0xab8] sm:$0xff]
      %v573 = vld [vmem:[%s198 + $0xac0] sm:$0xff]
      %v574 = vld [vmem:[%s198 + $0xac8] sm:$0xff]
      %v575 = vld [vmem:[%s198 + $0xad0] sm:$0xff]
      %v576 = vld [vmem:[%s198 + $0xad8] sm:$0xff]
      %v577 = vld [vmem:[%s198 + $0xae0] sm:$0xff]
      %v578 = vld [vmem:[%s198 + $0xae8] sm:$0xff]
      %v579 = vld [vmem:[%s198 + $0xaf0] sm:$0xff]
      %v580 = vld [vmem:[%s198 + $0xaf8] sm:$0xff]
      %v581 = vld [vmem:[%s198 + $0xb00] sm:$0xff]
      %v582 = vld [vmem:[%s198 + $0xb08] sm:$0xff]
      %v583 = vld [vmem:[%s198 + $0xb10] sm:$0xff]
      %v584 = vld [vmem:[%s198 + $0xb18] sm:$0xff]
      %v585 = vld [vmem:[%s198 + $0xb20] sm:$0xff]
      %v586 = vld [vmem:[%s198 + $0xb28] sm:$0xff]
      %v587 = vld [vmem:[%s198 + $0xb30] sm:$0xff]
      %v588 = vld [vmem:[%s198 + $0xb38] sm:$0xff]
      %v589 = vld [vmem:[%s198 + $0xb40] sm:$0xff]
      %v590 = vld [vmem:[%s198 + $0xb48] sm:$0xff]
      %v591 = vld [vmem:[%s198 + $0xb50] sm:$0xff]
      %v592 = vld [vmem:[%s198 + $0xb58] sm:$0xff]
      %v593 = vld [vmem:[%s198 + $0xb60] sm:$0xff]
      %v594 = vld [vmem:[%s198 + $0xb68] sm:$0xff]
      %v595 = vld [vmem:[%s198 + $0xb70] sm:$0xff]
      %v596 = vld [vmem:[%s198 + $0xb78] sm:$0xff]
      %v597 = vld [vmem:[%s198 + $0xb80] sm:$0xff]
      %v598 = vld [vmem:[%s198 + $0xb88] sm:$0xff]
      %v599 = vld [vmem:[%s198 + $0xb90] sm:$0xff]
      %v600 = vld [vmem:[%s198 + $0xb98] sm:$0xff]
      %v601 = vld [vmem:[%s198 + $0xba0] sm:$0xff]
      %v602 = vld [vmem:[%s198 + $0xba8] sm:$0xff]
      %v603 = vld [vmem:[%s198 + $0xbb0] sm:$0xff]
      %v604 = vld [vmem:[%s198 + $0xbb8] sm:$0xff]
      %v605 = vld [vmem:[%s198 + $0xbc0] sm:$0xff]
      %v606 = vld [vmem:[%s198 + $0xbc8] sm:$0xff]
      %v607 = vld [vmem:[%s198 + $0xbd0] sm:$0xff]
      %v608 = vld [vmem:[%s198 + $0xbd8] sm:$0xff]
      %v609 = vld [vmem:[%s198 + $0xbe0] sm:$0xff]
      %v610 = vld [vmem:[%s198 + $0xbe8] sm:$0xff]
      %v611 = vld [vmem:[%s198 + $0xbf0] sm:$0xff]
      %v612 = vld [vmem:[%s198 + $0xbf8] sm:$0xff]
      %v613 = vld [vmem:[%s198 + $0xc00] sm:$0xff]
      %v614 = vld [vmem:[%s198 + $0xc08] sm:$0xff]
      %v615 = vld [vmem:[%s198 + $0xc10] sm:$0xff]
      %v616 = vld [vmem:[%s198 + $0xc18] sm:$0xff]
      %v617 = vld [vmem:[%s198 + $0xc20] sm:$0xff]
      %v618 = vld [vmem:[%s198 + $0xc28] sm:$0xff]
      %v619 = vld [vmem:[%s198 + $0xc30] sm:$0xff]
      %v620 = vld [vmem:[%s198 + $0xc38] sm:$0xff]
      %v621 = vld [vmem:[%s198 + $0xc40] sm:$0xff]
      %v622 = vld [vmem:[%s198 + $0xc48] sm:$0xff]
      %v623 = vld [vmem:[%s198 + $0xc50] sm:$0xff]
      %v624 = vld [vmem:[%s198 + $0xc58] sm:$0xff]
      %v625 = vld [vmem:[%s198 + $0xc60] sm:$0xff]
      %v626 = vld [vmem:[%s198 + $0xc68] sm:$0xff]
      %v627 = vld [vmem:[%s198 + $0xc70] sm:$0xff]
      %v628 = vld [vmem:[%s198 + $0xc78] sm:$0xff]
      %v629 = vld [vmem:[%s198 + $0xc80] sm:$0xff]
      %v630 = vld [vmem:[%s198 + $0xc88] sm:$0xff]
      %v631 = vld [vmem:[%s198 + $0xc90] sm:$0xff]
      %v632 = vld [vmem:[%s198 + $0xc98] sm:$0xff]
      %v633 = vld [vmem:[%s198 + $0xca0] sm:$0xff]
      %v634 = vld [vmem:[%s198 + $0xca8] sm:$0xff]
      %v635 = vld [vmem:[%s198 + $0xcb0] sm:$0xff]
      %v636 = vld [vmem:[%s198 + $0xcb8] sm:$0xff]
      %v637 = vld [vmem:[%s198 + $0xcc0] sm:$0xff]
      %v638 = vld [vmem:[%s198 + $0xcc8] sm:$0xff]
      %v639 = vld [vmem:[%s198 + $0xcd0] sm:$0xff]
      %v640 = vld [vmem:[%s198 + $0xcd8] sm:$0xff]
      %v641 = vld [vmem:[%s198 + $0xce0] sm:$0xff]
      %v642 = vld [vmem:[%s198 + $0xce8] sm:$0xff]
      %v643 = vld [vmem:[%s198 + $0xcf0] sm:$0xff]
      %v644 = vld [vmem:[%s198 + $0xcf8] sm:$0xff]
      %v645 = vld [vmem:[%s198 + $0xd00] sm:$0xff]
      %v646 = vld [vmem:[%s198 + $0xd08] sm:$0xff]
      %v647 = vld [vmem:[%s198 + $0xd10] sm:$0xff]
      %v648 = vld [vmem:[%s198 + $0xd18] sm:$0xff]
      %v649 = vld [vmem:[%s198 + $0xd20] sm:$0xff]
      %v650 = vld [vmem:[%s198 + $0xd28] sm:$0xff]
      %v651 = vld [vmem:[%s198 + $0xd30] sm:$0xff]
      %v652 = vld [vmem:[%s198 + $0xd38] sm:$0xff]
      %v653 = vld [vmem:[%s198 + $0xd40] sm:$0xff]
      %v654 = vld [vmem:[%s198 + $0xd48] sm:$0xff]
      %v655 = vld [vmem:[%s198 + $0xd50] sm:$0xff]
      %v656 = vld [vmem:[%s198 + $0xd58] sm:$0xff]
      %v657 = vld [vmem:[%s198 + $0xd60] sm:$0xff]
      %v658 = vld [vmem:[%s198 + $0xd68] sm:$0xff]
      %v659 = vld [vmem:[%s198 + $0xd70] sm:$0xff]
      %v660 = vld [vmem:[%s198 + $0xd78] sm:$0xff]
      %v661 = vld [vmem:[%s198 + $0xd80] sm:$0xff]
      %v662 = vld [vmem:[%s198 + $0xd88] sm:$0xff]
      %v663 = vld [vmem:[%s198 + $0xd90] sm:$0xff]
      %v664 = vld [vmem:[%s198 + $0xd98] sm:$0xff]
      %v665 = vld [vmem:[%s198 + $0xda0] sm:$0xff]
      %v666 = vld [vmem:[%s198 + $0xda8] sm:$0xff]
      %v667 = vld [vmem:[%s198 + $0xdb0] sm:$0xff]
      %v668 = vld [vmem:[%s198 + $0xdb8] sm:$0xff]
      %v669 = vld [vmem:[%s198 + $0xdc0] sm:$0xff]
      %v670 = vld [vmem:[%s198 + $0xdc8] sm:$0xff]
      %v671 = vld [vmem:[%s198 + $0xdd0] sm:$0xff]
      %v672 = vld [vmem:[%s198 + $0xdd8] sm:$0xff]
      %v673 = vld [vmem:[%s198 + $0xde0] sm:$0xff]
      %v674 = vld [vmem:[%s198 + $0xde8] sm:$0xff]
      %v675 = vld [vmem:[%s198 + $0xdf0] sm:$0xff]
      %v676 = vld [vmem:[%s198 + $0xdf8] sm:$0xff]
      %v677 = vld [vmem:[%s198 + $0xe00] sm:$0xff]
      %v678 = vld [vmem:[%s198 + $0xe08] sm:$0xff]
      %v679 = vld [vmem:[%s198 + $0xe10] sm:$0xff]
      %v680 = vld [vmem:[%s198 + $0xe18] sm:$0xff]
      %v681 = vld [vmem:[%s198 + $0xe20] sm:$0xff]
      %v682 = vld [vmem:[%s198 + $0xe28] sm:$0xff]
      %v683 = vld [vmem:[%s198 + $0xe30] sm:$0xff]
      %v684 = vld [vmem:[%s198 + $0xe38] sm:$0xff]
      %v685 = vld [vmem:[%s198 + $0xe40] sm:$0xff]
      %v686 = vld [vmem:[%s198 + $0xe48] sm:$0xff]
      %v687 = vld [vmem:[%s198 + $0xe50] sm:$0xff]
      %v688 = vld [vmem:[%s198 + $0xe58] sm:$0xff]
      %v689 = vld [vmem:[%s198 + $0xe60] sm:$0xff]
      %v690 = vld [vmem:[%s198 + $0xe68] sm:$0xff]
      %v691 = vld [vmem:[%s198 + $0xe70] sm:$0xff]
      %v692 = vld [vmem:[%s198 + $0xe78] sm:$0xff]
      %v693 = vld [vmem:[%s198 + $0xe80] sm:$0xff]
      %v694 = vld [vmem:[%s198 + $0xe88] sm:$0xff]
      %v695 = vld [vmem:[%s198 + $0xe90] sm:$0xff]
      %v696 = vld [vmem:[%s198 + $0xe98] sm:$0xff]
      %v697 = vld [vmem:[%s198 + $0xea0] sm:$0xff]
      %v698 = vld [vmem:[%s198 + $0xea8] sm:$0xff]
      %v699 = vld [vmem:[%s198 + $0xeb0] sm:$0xff]
      %v700 = vld [vmem:[%s198 + $0xeb8] sm:$0xff]
      %v701 = vld [vmem:[%s198 + $0xec0] sm:$0xff]
      %v702 = vld [vmem:[%s198 + $0xec8] sm:$0xff]
      %v703 = vld [vmem:[%s198 + $0xed0] sm:$0xff]
      %v704 = vld [vmem:[%s198 + $0xed8] sm:$0xff]
      %v705 = vld [vmem:[%s198 + $0xee0] sm:$0xff]
      %v706 = vld [vmem:[%s198 + $0xee8] sm:$0xff]
      %v707 = vld [vmem:[%s198 + $0xef0] sm:$0xff]
      %v708 = vld [vmem:[%s198 + $0xef8] sm:$0xff]
      %v709 = vld [vmem:[%s198 + $0xf00] sm:$0xff]
      %v710 = vld [vmem:[%s198 + $0xf08] sm:$0xff]
      %v711 = vld [vmem:[%s198 + $0xf10] sm:$0xff]
      %v712 = vld [vmem:[%s198 + $0xf18] sm:$0xff]
      %v713 = vld [vmem:[%s198 + $0xf20] sm:$0xff]
      %v714 = vld [vmem:[%s198 + $0xf28] sm:$0xff]
      %v715 = vld [vmem:[%s198 + $0xf30] sm:$0xff]
      %v716 = vld [vmem:[%s198 + $0xf38] sm:$0xff]
      %v717 = vld [vmem:[%s198 + $0xf40] sm:$0xff]
      %v718 = vld [vmem:[%s198 + $0xf48] sm:$0xff]
      %v719 = vld [vmem:[%s198 + $0xf50] sm:$0xff]
      %v720 = vld [vmem:[%s198 + $0xf58] sm:$0xff]
      %v721 = vld [vmem:[%s198 + $0xf60] sm:$0xff]
      %v722 = vld [vmem:[%s198 + $0xf68] sm:$0xff]
      %v723 = vld [vmem:[%s198 + $0xf70] sm:$0xff]
      %v724 = vld [vmem:[%s198 + $0xf78] sm:$0xff]
      %v725 = vld [vmem:[%s198 + $0xf80] sm:$0xff]
      %v726 = vld [vmem:[%s198 + $0xf88] sm:$0xff]
      %v727 = vld [vmem:[%s198 + $0xf90] sm:$0xff]
      %v728 = vld [vmem:[%s198 + $0xf98] sm:$0xff]
      %v729 = vld [vmem:[%s198 + $0xfa0] sm:$0xff]
      %v730 = vld [vmem:[%s198 + $0xfa8] sm:$0xff]
      %v731 = vld [vmem:[%s198 + $0xfb0] sm:$0xff]
      %v732 = vld [vmem:[%s198 + $0xfb8] sm:$0xff]
      %v733 = vld [vmem:[%s198 + $0xfc0] sm:$0xff]
      %v734 = vld [vmem:[%s198 + $0xfc8] sm:$0xff]
      %v735 = vld [vmem:[%s198 + $0xfd0] sm:$0xff]
      %v736 = vld [vmem:[%s198 + $0xfd8] sm:$0xff]
      %v737 = vld [vmem:[%s198 + $0xfe0] sm:$0xff]
      %v738 = vld [vmem:[%s198 + $0xfe8] sm:$0xff]
      %v739 = vld [vmem:[%s198 + $0xff0] sm:$0xff]
      %v740 = vld [vmem:[%s198 + $0xff8] sm:$0xff]
      %v741 = vld [vmem:[%s198 + $0x1000] sm:$0xff]
      %v742 = vld [vmem:[%s198 + $0x1008] sm:$0xff]
      %v743 = vld [vmem:[%s198 + $0x1010] sm:$0xff]
      %v744 = vld [vmem:[%s198 + $0x1018] sm:$0xff]
      %v745 = vld [vmem:[%s198 + $0x1020] sm:$0xff]
      %v746 = vld [vmem:[%s198 + $0x1028] sm:$0xff]
      %v747 = vld [vmem:[%s198 + $0x1030] sm:$0xff]
      %v748 = vld [vmem:[%s198 + $0x1038] sm:$0xff]
      %v749 = vld [vmem:[%s198 + $0x1040] sm:$0xff]
      %v750 = vld [vmem:[%s198 + $0x1048] sm:$0xff]
      %v751 = vld [vmem:[%s198 + $0x1050] sm:$0xff]
      %v752 = vld [vmem:[%s198 + $0x1058] sm:$0xff]
      %v753 = vld [vmem:[%s198 + $0x1060] sm:$0xff]
      %v754 = vld [vmem:[%s198 + $0x1068] sm:$0xff]
      %v755 = vld [vmem:[%s198 + $0x1070] sm:$0xff]
      %v756 = vld [vmem:[%s198 + $0x1078] sm:$0xff]
      %v757 = vld [vmem:[%s198 + $0x1080] sm:$0xff]
      %v758 = vld [vmem:[%s198 + $0x1088] sm:$0xff]
      %v759 = vld [vmem:[%s198 + $0x1090] sm:$0xff]
      %v760 = vld [vmem:[%s198 + $0x1098] sm:$0xff]
      %v761 = vld [vmem:[%s198 + $0x10a0] sm:$0xff]
      %v762 = vld [vmem:[%s198 + $0x10a8] sm:$0xff]
      %v763 = vld [vmem:[%s198 + $0x10b0] sm:$0xff]
      %v764 = vld [vmem:[%s198 + $0x10b8] sm:$0xff]
      %v765 = vld [vmem:[%s198 + $0x10c0] sm:$0xff]
      %v766 = vld [vmem:[%s198 + $0x10c8] sm:$0xff]
      %v767 = vld [vmem:[%s198 + $0x10d0] sm:$0xff]
      %v768 = vld [vmem:[%s198 + $0x10d8] sm:$0xff]
      %v769 = vld [vmem:[%s198 + $0x10e0] sm:$0xff]
      %v770 = vld [vmem:[%s198 + $0x10e8] sm:$0xff]
      %v771 = vld [vmem:[%s198 + $0x10f0] sm:$0xff]
      %v772 = vld [vmem:[%s198 + $0x10f8] sm:$0xff]
      %v773 = vld [vmem:[%s198 + $0x1100] sm:$0xff]
      %v774 = vld [vmem:[%s198 + $0x1108] sm:$0xff]
      %v775 = vld [vmem:[%s198 + $0x1110] sm:$0xff]
      %v776 = vld [vmem:[%s198 + $0x1118] sm:$0xff]
      %v777 = vld [vmem:[%s198 + $0x1120] sm:$0xff]
      %v778 = vld [vmem:[%s198 + $0x1128] sm:$0xff]
      %v779 = vld [vmem:[%s198 + $0x1130] sm:$0xff]
      %v780 = vld [vmem:[%s198 + $0x1138] sm:$0xff]
      %v781 = vld [vmem:[%s198 + $0x1140] sm:$0xff]
      %v782 = vld [vmem:[%s198 + $0x1148] sm:$0xff]
      %v783 = vld [vmem:[%s198 + $0x1150] sm:$0xff]
      %v784 = vld [vmem:[%s198 + $0x1158] sm:$0xff]
      %v785 = vld [vmem:[%s198 + $0x1160] sm:$0xff]
      %v786 = vld [vmem:[%s198 + $0x1168] sm:$0xff]
      %v787 = vld [vmem:[%s198 + $0x1170] sm:$0xff]
      %v788 = vld [vmem:[%s198 + $0x1178] sm:$0xff]
      %v789 = vld [vmem:[%s198 + $0x1180] sm:$0xff]
      %v790 = vld [vmem:[%s198 + $0x1188] sm:$0xff]
      %v791 = vld [vmem:[%s198 + $0x1190] sm:$0xff]
      %v792 = vld [vmem:[%s198 + $0x1198] sm:$0xff]
      %v793 = vld [vmem:[%s198 + $0x11a0] sm:$0xff]
      %v794 = vld [vmem:[%s198 + $0x11a8] sm:$0xff]
      %v795 = vld [vmem:[%s198 + $0x11b0] sm:$0xff]
      %v796 = vld [vmem:[%s198 + $0x11b8] sm:$0xff]
      %v797 = vld [vmem:[%s198 + $0x11c0] sm:$0xff]
      %v798 = vld [vmem:[%s198 + $0x11c8] sm:$0xff]
      %v799 = vld [vmem:[%s198 + $0x11d0] sm:$0xff]
      %v800 = vld [vmem:[%s198 + $0x11d8] sm:$0xff]
      %v801 = vld [vmem:[%s198 + $0x11e0] sm:$0xff]
      %v802 = vld [vmem:[%s198 + $0x11e8] sm:$0xff]
      %v803 = vld [vmem:[%s198 + $0x11f0] sm:$0xff]
      %v804 = vld [vmem:[%s198 + $0x11f8] sm:$0xff]
      %v805 = vld [vmem:[%s198 + $0x1200] sm:$0xff]
      %v806 = vld [vmem:[%s198 + $0x1208] sm:$0xff]
      %v807 = vld [vmem:[%s198 + $0x1210] sm:$0xff]
      %v808 = vld [vmem:[%s198 + $0x1218] sm:$0xff]
      %v809 = vld [vmem:[%s198 + $0x1220] sm:$0xff]
      %v810 = vld [vmem:[%s198 + $0x1228] sm:$0xff]
      %v811 = vld [vmem:[%s198 + $0x1230] sm:$0xff]
      %v812 = vld [vmem:[%s198 + $0x1238] sm:$0xff]
      %v813 = vld [vmem:[%s198 + $0x1240] sm:$0xff]
      %v814 = vld [vmem:[%s198 + $0x1248] sm:$0xff]
      %v815 = vld [vmem:[%s198 + $0x1250] sm:$0xff]
      %v816 = vld [vmem:[%s198 + $0x1258] sm:$0xff]
      %v817 = vld [vmem:[%s198 + $0x1260] sm:$0xff]
      %v818 = vld [vmem:[%s198 + $0x1268] sm:$0xff]
      %v819 = vld [vmem:[%s198 + $0x1270] sm:$0xff]
      %v820 = vld [vmem:[%s198 + $0x1278] sm:$0xff]
      %v821 = vld [vmem:[%s198 + $0x1280] sm:$0xff]
      %v822 = vld [vmem:[%s198 + $0x1288] sm:$0xff]
      %v823 = vld [vmem:[%s198 + $0x1290] sm:$0xff]
      %v824 = vld [vmem:[%s198 + $0x1298] sm:$0xff]
      %v825 = vld [vmem:[%s198 + $0x12a0] sm:$0xff]
      %v826 = vld [vmem:[%s198 + $0x12a8] sm:$0xff]
      %v827 = vld [vmem:[%s198 + $0x12b0] sm:$0xff]
      %v828 = vld [vmem:[%s198 + $0x12b8] sm:$0xff]
      %v829 = vld [vmem:[%s198 + $0x12c0] sm:$0xff]
      %v830 = vld [vmem:[%s198 + $0x12c8] sm:$0xff]
      %v831 = vld [vmem:[%s198 + $0x12d0] sm:$0xff]
      %v832 = vld [vmem:[%s198 + $0x12d8] sm:$0xff]
      %v833 = vld [vmem:[%s198 + $0x12e0] sm:$0xff]
      %v834 = vld [vmem:[%s198 + $0x12e8] sm:$0xff]
      %v835 = vld [vmem:[%s198 + $0x12f0] sm:$0xff]
      %v836 = vld [vmem:[%s198 + $0x12f8] sm:$0xff]
      %v837 = vld [vmem:[%s198 + $0x1300] sm:$0xff]
      %v838 = vld [vmem:[%s198 + $0x1308] sm:$0xff]
      %v839 = vld [vmem:[%s198 + $0x1310] sm:$0xff]
      %v840 = vld [vmem:[%s198 + $0x1318] sm:$0xff]
      %v841 = vld [vmem:[%s198 + $0x1320] sm:$0xff]
      %v842 = vld [vmem:[%s198 + $0x1328] sm:$0xff]
      %v843 = vld [vmem:[%s198 + $0x1330] sm:$0xff]
      %v844 = vld [vmem:[%s198 + $0x1338] sm:$0xff]
      %v845 = vld [vmem:[%s198 + $0x1340] sm:$0xff]
      %v846 = vld [vmem:[%s198 + $0x1348] sm:$0xff]
      %v847 = vld [vmem:[%s198 + $0x1350] sm:$0xff]
      %v848 = vld [vmem:[%s198 + $0x1358] sm:$0xff]
      %v849 = vld [vmem:[%s198 + $0x1360] sm:$0xff]
      %v850 = vld [vmem:[%s198 + $0x1368] sm:$0xff]
      %v851 = vld [vmem:[%s198 + $0x1370] sm:$0xff]
      %v852 = vld [vmem:[%s198 + $0x1378] sm:$0xff]
      %v853 = vld [vmem:[%s198 + $0x1380] sm:$0xff]
      %v854 = vld [vmem:[%s198 + $0x1388] sm:$0xff]
      %v855 = vld [vmem:[%s198 + $0x1390] sm:$0xff]
      %v856 = vld [vmem:[%s198 + $0x1398] sm:$0xff]
      %v857 = vld [vmem:[%s198 + $0x13a0] sm:$0xff]
      %v858 = vld [vmem:[%s198 + $0x13a8] sm:$0xff]
      %v859 = vld [vmem:[%s198 + $0x13b0] sm:$0xff]
      %v860 = vld [vmem:[%s198 + $0x13b8] sm:$0xff]
      %v861 = vld [vmem:[%s198 + $0x13c0] sm:$0xff]
      %v862 = vld [vmem:[%s198 + $0x13c8] sm:$0xff]
      %v863 = vld [vmem:[%s198 + $0x13d0] sm:$0xff]
      %v864 = vld [vmem:[%s198 + $0x13d8] sm:$0xff]
      %v865 = vld [vmem:[%s198 + $0x13e0] sm:$0xff]
      %v866 = vld [vmem:[%s198 + $0x13e8] sm:$0xff]
      %v867 = vld [vmem:[%s198 + $0x13f0] sm:$0xff]
      %v868 = vld [vmem:[%s198 + $0x13f8] sm:$0xff]
      %v869 = vld [vmem:[%s198 + $0x1400] sm:$0xff]
      %v870 = vld [vmem:[%s198 + $0x1408] sm:$0xff]
      %v871 = vld [vmem:[%s198 + $0x1410] sm:$0xff]
      %v872 = vld [vmem:[%s198 + $0x1418] sm:$0xff]
      %v873 = vld [vmem:[%s198 + $0x1420] sm:$0xff]
      %v874 = vld [vmem:[%s198 + $0x1428] sm:$0xff]
      %v875 = vld [vmem:[%s198 + $0x1430] sm:$0xff]
      %v876 = vld [vmem:[%s198 + $0x1438] sm:$0xff]
      %v877 = vld [vmem:[%s198 + $0x1440] sm:$0xff]
      %v878 = vld [vmem:[%s198 + $0x1448] sm:$0xff]
      %v879 = vld [vmem:[%s198 + $0x1450] sm:$0xff]
      %v880 = vld [vmem:[%s198 + $0x1458] sm:$0xff]
      %v881 = vld [vmem:[%s198 + $0x1460] sm:$0xff]
      %v882 = vld [vmem:[%s198 + $0x1468] sm:$0xff]
      %v883 = vld [vmem:[%s198 + $0x1470] sm:$0xff]
      %v884 = vld [vmem:[%s198 + $0x1478] sm:$0xff]
      %v885 = vld [vmem:[%s198 + $0x1480] sm:$0xff]
      %v886 = vld [vmem:[%s198 + $0x1488] sm:$0xff]
      %v887 = vld [vmem:[%s198 + $0x1490] sm:$0xff]
      %v888 = vld [vmem:[%s198 + $0x1498] sm:$0xff]
      %v889 = vld [vmem:[%s198 + $0x14a0] sm:$0xff]
      %v890 = vld [vmem:[%s198 + $0x14a8] sm:$0xff]
      %v891 = vld [vmem:[%s198 + $0x14b0] sm:$0xff]
      %v892 = vld [vmem:[%s198 + $0x14b8] sm:$0xff]
      %v893 = vld [vmem:[%s198 + $0x14c0] sm:$0xff]
      %v894 = vld [vmem:[%s198 + $0x14c8] sm:$0xff]
      %v895 = vld [vmem:[%s198 + $0x14d0] sm:$0xff]
      %v896 = vld [vmem:[%s198 + $0x14d8] sm:$0xff]
      %v897 = vld [vmem:[%s198 + $0x14e0] sm:$0xff]
      %v898 = vld [vmem:[%s198 + $0x14e8] sm:$0xff]
      %v899 = vld [vmem:[%s198 + $0x14f0] sm:$0xff]
      %v900 = vld [vmem:[%s198 + $0x14f8] sm:$0xff]
      %v901 = vld [vmem:[%s198 + $0x1500] sm:$0xff]
      %v902 = vld [vmem:[%s198 + $0x1508] sm:$0xff]
      %v903 = vld [vmem:[%s198 + $0x1510] sm:$0xff]
      %v904 = vld [vmem:[%s198 + $0x1518] sm:$0xff]
      %v905 = vld [vmem:[%s198 + $0x1520] sm:$0xff]
      %v906 = vld [vmem:[%s198 + $0x1528] sm:$0xff]
      %v907 = vld [vmem:[%s198 + $0x1530] sm:$0xff]
      %v908 = vld [vmem:[%s198 + $0x1538] sm:$0xff]
      %v909 = vld [vmem:[%s198 + $0x1540] sm:$0xff]
      %v910 = vld [vmem:[%s198 + $0x1548] sm:$0xff]
      %v911 = vld [vmem:[%s198 + $0x1550] sm:$0xff]
      %v912 = vld [vmem:[%s198 + $0x1558] sm:$0xff]
      %v913 = vld [vmem:[%s198 + $0x1560] sm:$0xff]
      %v914 = vld [vmem:[%s198 + $0x1568] sm:$0xff]
      %v915 = vld [vmem:[%s198 + $0x1570] sm:$0xff]
      %v916 = vld [vmem:[%s198 + $0x1578] sm:$0xff]
      %v917 = vld [vmem:[%s198 + $0x1580] sm:$0xff]
      %v918 = vld [vmem:[%s198 + $0x1588] sm:$0xff]
      %v919 = vld [vmem:[%s198 + $0x1590] sm:$0xff]
      %v920 = vld [vmem:[%s198 + $0x1598] sm:$0xff]
      %v921 = vld [vmem:[%s198 + $0x15a0] sm:$0xff]
      %v922 = vld [vmem:[%s198 + $0x15a8] sm:$0xff]
      %v923 = vld [vmem:[%s198 + $0x15b0] sm:$0xff]
      %v924 = vld [vmem:[%s198 + $0x15b8] sm:$0xff]
      %v925 = vld [vmem:[%s198 + $0x15c0] sm:$0xff]
      %v926 = vld [vmem:[%s198 + $0x15c8] sm:$0xff]
      %v927 = vld [vmem:[%s198 + $0x15d0] sm:$0xff]
      %v928 = vld [vmem:[%s198 + $0x15d8] sm:$0xff]
      %v929 = vld [vmem:[%s198 + $0x15e0] sm:$0xff]
      %v930 = vld [vmem:[%s198 + $0x15e8] sm:$0xff]
      %v931 = vld [vmem:[%s198 + $0x15f0] sm:$0xff]
      %v932 = vld [vmem:[%s198 + $0x15f8] sm:$0xff]
      %v933 = vld [vmem:[%s198 + $0x1600] sm:$0xff]
      %v934 = vld [vmem:[%s198 + $0x1608] sm:$0xff]
      %v935 = vld [vmem:[%s198 + $0x1610] sm:$0xff]
      %v936 = vld [vmem:[%s198 + $0x1618] sm:$0xff]
      %v937 = vld [vmem:[%s198 + $0x1620] sm:$0xff]
      %v938 = vld [vmem:[%s198 + $0x1628] sm:$0xff]
      %v939 = vld [vmem:[%s198 + $0x1630] sm:$0xff]
      %v940 = vld [vmem:[%s198 + $0x1638] sm:$0xff]
      %v941 = vld [vmem:[%s198 + $0x1640] sm:$0xff]
      %v942 = vld [vmem:[%s198 + $0x1648] sm:$0xff]
      %v943 = vld [vmem:[%s198 + $0x1650] sm:$0xff]
      %v944 = vld [vmem:[%s198 + $0x1658] sm:$0xff]
      %v945 = vld [vmem:[%s198 + $0x1660] sm:$0xff]
      %v946 = vld [vmem:[%s198 + $0x1668] sm:$0xff]
      %v947 = vld [vmem:[%s198 + $0x1670] sm:$0xff]
      %v948 = vld [vmem:[%s198 + $0x1678] sm:$0xff]
      %v949 = vld [vmem:[%s198 + $0x1680] sm:$0xff]
      %v950 = vld [vmem:[%s198 + $0x1688] sm:$0xff]
      %v951 = vld [vmem:[%s198 + $0x1690] sm:$0xff]
      %v952 = vld [vmem:[%s198 + $0x1698] sm:$0xff]
      %v953 = vld [vmem:[%s198 + $0x16a0] sm:$0xff]
      %v954 = vld [vmem:[%s198 + $0x16a8] sm:$0xff]
      %v955 = vld [vmem:[%s198 + $0x16b0] sm:$0xff]
      %v956 = vld [vmem:[%s198 + $0x16b8] sm:$0xff]
      %v957 = vld [vmem:[%s198 + $0x16c0] sm:$0xff]
      %v958 = vld [vmem:[%s198 + $0x16c8] sm:$0xff]
      %v959 = vld [vmem:[%s198 + $0x16d0] sm:$0xff]
      %v960 = vld [vmem:[%s198 + $0x16d8] sm:$0xff]
      %v961 = vld [vmem:[%s198 + $0x16e0] sm:$0xff]
      %v962 = vld [vmem:[%s198 + $0x16e8] sm:$0xff]
      %v963 = vld [vmem:[%s198 + $0x16f0] sm:$0xff]
      %v964 = vld [vmem:[%s198 + $0x16f8] sm:$0xff]
      %v965 = vld [vmem:[%s198 + $0x1700] sm:$0xff]
      %v966 = vld [vmem:[%s198 + $0x1708] sm:$0xff]
      %v967 = vld [vmem:[%s198 + $0x1710] sm:$0xff]
      %v968 = vld [vmem:[%s198 + $0x1718] sm:$0xff]
      %v969 = vld [vmem:[%s198 + $0x1720] sm:$0xff]
      %v970 = vld [vmem:[%s198 + $0x1728] sm:$0xff]
      %v971 = vld [vmem:[%s198 + $0x1730] sm:$0xff]
      %v972 = vld [vmem:[%s198 + $0x1738] sm:$0xff]
      %v973 = vld [vmem:[%s198 + $0x1740] sm:$0xff]
      %v974 = vld [vmem:[%s198 + $0x1748] sm:$0xff]
      %v975 = vld [vmem:[%s198 + $0x1750] sm:$0xff]
      %v976 = vld [vmem:[%s198 + $0x1758] sm:$0xff]
      %v977 = vld [vmem:[%s198 + $0x1760] sm:$0xff]
      %v978 = vld [vmem:[%s198 + $0x1768] sm:$0xff]
      %v979 = vld [vmem:[%s198 + $0x1770] sm:$0xff]
      %v980 = vld [vmem:[%s198 + $0x1778] sm:$0xff]
      %v981 = vld [vmem:[%s198 + $0x1780] sm:$0xff]
      %v982 = vld [vmem:[%s198 + $0x1788] sm:$0xff]
      %v983 = vld [vmem:[%s198 + $0x1790] sm:$0xff]
      %v984 = vld [vmem:[%s198 + $0x1798] sm:$0xff]
      %v985 = vld [vmem:[%s198 + $0x17a0] sm:$0xff]
      %v986 = vld [vmem:[%s198 + $0x17a8] sm:$0xff]
      %v987 = vld [vmem:[%s198 + $0x17b0] sm:$0xff]
      %v988 = vld [vmem:[%s198 + $0x17b8] sm:$0xff]
      %v989 = vld [vmem:[%s198 + $0x17c0] sm:$0xff]
      %v990 = vld [vmem:[%s198 + $0x17c8] sm:$0xff]
      %v991 = vld [vmem:[%s198 + $0x17d0] sm:$0xff]
      %v992 = vld [vmem:[%s198 + $0x17d8] sm:$0xff]
      %v993 = vld [vmem:[%s198 + $0x17e0] sm:$0xff]
      %v994 = vld [vmem:[%s198 + $0x17e8] sm:$0xff]
      %v995 = vld [vmem:[%s198 + $0x17f0] sm:$0xff]
      %v996 = vld [vmem:[%s198 + $0x17f8] sm:$0xff]
      %v997 = vld [vmem:[%s198 + $0x1800] sm:$0xff]
      %v998 = vld [vmem:[%s198 + $0x1808] sm:$0xff]
      %v999 = vld [vmem:[%s198 + $0x1810] sm:$0xff]
      %v1000 = vld [vmem:[%s198 + $0x1818] sm:$0xff]
      %v1001 = vld [vmem:[%s198 + $0x1820] sm:$0xff]
      %v1002 = vld [vmem:[%s198 + $0x1828] sm:$0xff]
      %v1003 = vld [vmem:[%s198 + $0x1830] sm:$0xff]
      %v1004 = vld [vmem:[%s198 + $0x1838] sm:$0xff]
      %v1005 = vld [vmem:[%s198 + $0x1840] sm:$0xff]
      %v1006 = vld [vmem:[%s198 + $0x1848] sm:$0xff]
      %v1007 = vld [vmem:[%s198 + $0x1850] sm:$0xff]
      %v1008 = vld [vmem:[%s198 + $0x1858] sm:$0xff]
      %v1009 = vld [vmem:[%s198 + $0x1860] sm:$0xff]
      %v1010 = vld [vmem:[%s198 + $0x1868] sm:$0xff]
      %v1011 = vld [vmem:[%s198 + $0x1870] sm:$0xff]
      %v1012 = vld [vmem:[%s198 + $0x1878] sm:$0xff]
      %v1013 = vld [vmem:[%s198 + $0x1880] sm:$0xff]
      %v1014 = vld [vmem:[%s198 + $0x1888] sm:$0xff]
      %v1015 = vld [vmem:[%s198 + $0x1890] sm:$0xff]
      %v1016 = vld [vmem:[%s198 + $0x1898] sm:$0xff]
      %v1017 = vld [vmem:[%s198 + $0x18a0] sm:$0xff]
      %v1018 = vld [vmem:[%s198 + $0x18a8] sm:$0xff]
      %v1019 = vld [vmem:[%s198 + $0x18b0] sm:$0xff]
      %v1020 = vld [vmem:[%s198 + $0x18b8] sm:$0xff]
      %v1021 = vld [vmem:[%s198 + $0x18c0] sm:$0xff]
      %v1022 = vld [vmem:[%s198 + $0x18c8] sm:$0xff]
      %v1023 = vld [vmem:[%s198 + $0x18d0] sm:$0xff]
      %v1024 = vld [vmem:[%s198 + $0x18d8] sm:$0xff]
      %v1025 = vld [vmem:[%s198 + $0x18e0] sm:$0xff]
      %v1026 = vld [vmem:[%s198 + $0x18e8] sm:$0xff]
      %v1027 = vld [vmem:[%s198 + $0x18f0] sm:$0xff]
      %v1028 = vld [vmem:[%s198 + $0x18f8] sm:$0xff]
      %v1029 = vld [vmem:[%s198 + $0x1900] sm:$0xff]
      %v1030 = vld [vmem:[%s198 + $0x1908] sm:$0xff]
      %v1031 = vld [vmem:[%s198 + $0x1910] sm:$0xff]
      %v1032 = vld [vmem:[%s198 + $0x1918] sm:$0xff]
      %v1033 = vld [vmem:[%s198 + $0x1920] sm:$0xff]
      %v1034 = vld [vmem:[%s198 + $0x1928] sm:$0xff]
      %v1035 = vld [vmem:[%s198 + $0x1930] sm:$0xff]
      %v1036 = vld [vmem:[%s198 + $0x1938] sm:$0xff]
      %v1037 = vld [vmem:[%s198 + $0x1940] sm:$0xff]
      %v1038 = vld [vmem:[%s198 + $0x1948] sm:$0xff]
      %v1039 = vld [vmem:[%s198 + $0x1950] sm:$0xff]
      %v1040 = vld [vmem:[%s198 + $0x1958] sm:$0xff]
      %v1041 = vld [vmem:[%s198 + $0x1960] sm:$0xff]
      %v1042 = vld [vmem:[%s198 + $0x1968] sm:$0xff]
      %v1043 = vld [vmem:[%s198 + $0x1970] sm:$0xff]
      %v1044 = vld [vmem:[%s198 + $0x1978] sm:$0xff]
      %v1045 = vld [vmem:[%s198 + $0x1980] sm:$0xff]
      %v1046 = vld [vmem:[%s198 + $0x1988] sm:$0xff]
      %v1047 = vld [vmem:[%s198 + $0x1990] sm:$0xff]
      %v1048 = vld [vmem:[%s198 + $0x1998] sm:$0xff]
      %v1049 = vld [vmem:[%s198 + $0x19a0] sm:$0xff]
      %v1050 = vld [vmem:[%s198 + $0x19a8] sm:$0xff]
      %v1051 = vld [vmem:[%s198 + $0x19b0] sm:$0xff]
      %v1052 = vld [vmem:[%s198 + $0x19b8] sm:$0xff]
      %v1053 = vld [vmem:[%s198 + $0x19c0] sm:$0xff]
      %v1054 = vld [vmem:[%s198 + $0x19c8] sm:$0xff]
      %v1055 = vld [vmem:[%s198 + $0x19d0] sm:$0xff]
      %v1056 = vld [vmem:[%s198 + $0x19d8] sm:$0xff]
      %v1057 = vld [vmem:[%s198 + $0x19e0] sm:$0xff]
      %v1058 = vld [vmem:[%s198 + $0x19e8] sm:$0xff]
      %v1059 = vld [vmem:[%s198 + $0x19f0] sm:$0xff]
      %v1060 = vld [vmem:[%s198 + $0x19f8] sm:$0xff]
      %v1061 = vld [vmem:[%s198 + $0x1a00] sm:$0xff]
      %v1062 = vld [vmem:[%s198 + $0x1a08] sm:$0xff]
      %v1063 = vld [vmem:[%s198 + $0x1a10] sm:$0xff]
      %v1064 = vld [vmem:[%s198 + $0x1a18] sm:$0xff]
      %v1065 = vld [vmem:[%s198 + $0x1a20] sm:$0xff]
      %v1066 = vld [vmem:[%s198 + $0x1a28] sm:$0xff]
      %v1067 = vld [vmem:[%s198 + $0x1a30] sm:$0xff]
      %v1068 = vld [vmem:[%s198 + $0x1a38] sm:$0xff]
      %v1069 = vld [vmem:[%s198 + $0x1a40] sm:$0xff]
      %v1070 = vld [vmem:[%s198 + $0x1a48] sm:$0xff]
      %v1071 = vld [vmem:[%s198 + $0x1a50] sm:$0xff]
      %v1072 = vld [vmem:[%s198 + $0x1a58] sm:$0xff]
      %v1073 = vld [vmem:[%s198 + $0x1a60] sm:$0xff]
      %v1074 = vld [vmem:[%s198 + $0x1a68] sm:$0xff]
      %v1075 = vld [vmem:[%s198 + $0x1a70] sm:$0xff]
      %v1076 = vld [vmem:[%s198 + $0x1a78] sm:$0xff]
      %v1077 = vld [vmem:[%s198 + $0x1a80] sm:$0xff]
      %v1078 = vld [vmem:[%s198 + $0x1a88] sm:$0xff]
      %v1079 = vld [vmem:[%s198 + $0x1a90] sm:$0xff]
      %v1080 = vld [vmem:[%s198 + $0x1a98] sm:$0xff]
      %v1081 = vld [vmem:[%s198 + $0x1aa0] sm:$0xff]
      %v1082 = vld [vmem:[%s198 + $0x1aa8] sm:$0xff]
      %v1083 = vld [vmem:[%s198 + $0x1ab0] sm:$0xff]
      %v1084 = vld [vmem:[%s198 + $0x1ab8] sm:$0xff]
      %v1085 = vld [vmem:[%s198 + $0x1ac0] sm:$0xff]
      %v1086 = vld [vmem:[%s198 + $0x1ac8] sm:$0xff]
      %v1087 = vld [vmem:[%s198 + $0x1ad0] sm:$0xff]
      %v1088 = vld [vmem:[%s198 + $0x1ad8] sm:$0xff]
      %v1089 = vld [vmem:[%s198 + $0x1ae0] sm:$0xff]
      %v1090 = vld [vmem:[%s198 + $0x1ae8] sm:$0xff]
      %v1091 = vld [vmem:[%s198 + $0x1af0] sm:$0xff]
      %v1092 = vld [vmem:[%s198 + $0x1af8] sm:$0xff]
      %v1093 = vld [vmem:[%s198 + $0x1b00] sm:$0xff]
      %v1094 = vld [vmem:[%s198 + $0x1b08] sm:$0xff]
      %v1095 = vld [vmem:[%s198 + $0x1b10] sm:$0xff]
      %v1096 = vld [vmem:[%s198 + $0x1b18] sm:$0xff]
      %v1097 = vld [vmem:[%s198 + $0x1b20] sm:$0xff]
      %v1098 = vld [vmem:[%s198 + $0x1b28] sm:$0xff]
      %v1099 = vld [vmem:[%s198 + $0x1b30] sm:$0xff]
      %v1100 = vld [vmem:[%s198 + $0x1b38] sm:$0xff]
      %v1101 = vld [vmem:[%s198 + $0x1b40] sm:$0xff]
      %v1102 = vld [vmem:[%s198 + $0x1b48] sm:$0xff]
      %v1103 = vld [vmem:[%s198 + $0x1b50] sm:$0xff]
      %v1104 = vld [vmem:[%s198 + $0x1b58] sm:$0xff]
      %v1105 = vld [vmem:[%s198 + $0x1b60] sm:$0xff]
      %v1106 = vld [vmem:[%s198 + $0x1b68] sm:$0xff]
      %v1107 = vld [vmem:[%s198 + $0x1b70] sm:$0xff]
      %v1108 = vld [vmem:[%s198 + $0x1b78] sm:$0xff]
      %v1109 = vld [vmem:[%s198 + $0x1b80] sm:$0xff]
      %v1110 = vld [vmem:[%s198 + $0x1b88] sm:$0xff]
      %v1111 = vld [vmem:[%s198 + $0x1b90] sm:$0xff]
      %v1112 = vld [vmem:[%s198 + $0x1b98] sm:$0xff]
      %v1113 = vld [vmem:[%s198 + $0x1ba0] sm:$0xff]
      %v1114 = vld [vmem:[%s198 + $0x1ba8] sm:$0xff]
      %v1115 = vld [vmem:[%s198 + $0x1bb0] sm:$0xff]
      %v1116 = vld [vmem:[%s198 + $0x1bb8] sm:$0xff]
      %v1117 = vld [vmem:[%s198 + $0x1bc0] sm:$0xff]
      %v1118 = vld [vmem:[%s198 + $0x1bc8] sm:$0xff]
      %v1119 = vld [vmem:[%s198 + $0x1bd0] sm:$0xff]
      %v1120 = vld [vmem:[%s198 + $0x1bd8] sm:$0xff]
      %v1121 = vld [vmem:[%s198 + $0x1be0] sm:$0xff]
      %v1122 = vld [vmem:[%s198 + $0x1be8] sm:$0xff]
      %v1123 = vld [vmem:[%s198 + $0x1bf0] sm:$0xff]
      %v1124 = vld [vmem:[%s198 + $0x1bf8] sm:$0xff]
      %v1125 = vld [vmem:[%s198 + $0x1c00] sm:$0xff]
      %v1126 = vld [vmem:[%s198 + $0x1c08] sm:$0xff]
      %v1127 = vld [vmem:[%s198 + $0x1c10] sm:$0xff]
      %v1128 = vld [vmem:[%s198 + $0x1c18] sm:$0xff]
      %v1129 = vld [vmem:[%s198 + $0x1c20] sm:$0xff]
      %v1130 = vld [vmem:[%s198 + $0x1c28] sm:$0xff]
      %v1131 = vld [vmem:[%s198 + $0x1c30] sm:$0xff]
      %v1132 = vld [vmem:[%s198 + $0x1c38] sm:$0xff]
      %v1133 = vld [vmem:[%s198 + $0x1c40] sm:$0xff]
      %v1134 = vld [vmem:[%s198 + $0x1c48] sm:$0xff]
      %v1135 = vld [vmem:[%s198 + $0x1c50] sm:$0xff]
      %v1136 = vld [vmem:[%s198 + $0x1c58] sm:$0xff]
      %v1137 = vld [vmem:[%s198 + $0x1c60] sm:$0xff]
      %v1138 = vld [vmem:[%s198 + $0x1c68] sm:$0xff]
      %v1139 = vld [vmem:[%s198 + $0x1c70] sm:$0xff]
      %v1140 = vld [vmem:[%s198 + $0x1c78] sm:$0xff]
      %v1141 = vld [vmem:[%s198 + $0x1c80] sm:$0xff]
      %v1142 = vld [vmem:[%s198 + $0x1c88] sm:$0xff]
      %v1143 = vld [vmem:[%s198 + $0x1c90] sm:$0xff]
      %v1144 = vld [vmem:[%s198 + $0x1c98] sm:$0xff]
      %v1145 = vld [vmem:[%s198 + $0x1ca0] sm:$0xff]
      %v1146 = vld [vmem:[%s198 + $0x1ca8] sm:$0xff]
      %v1147 = vld [vmem:[%s198 + $0x1cb0] sm:$0xff]
      %v1148 = vld [vmem:[%s198 + $0x1cb8] sm:$0xff]
      %v1149 = vld [vmem:[%s198 + $0x1cc0] sm:$0xff]
      %v1150 = vld [vmem:[%s198 + $0x1cc8] sm:$0xff]
      %v1151 = vld [vmem:[%s198 + $0x1cd0] sm:$0xff]
      %v1152 = vld [vmem:[%s198 + $0x1cd8] sm:$0xff]
      %v1153 = vld [vmem:[%s198 + $0x1ce0] sm:$0xff]
      %v1154 = vld [vmem:[%s198 + $0x1ce8] sm:$0xff]
      %v1155 = vld [vmem:[%s198 + $0x1cf0] sm:$0xff]
      %v1156 = vld [vmem:[%s198 + $0x1cf8] sm:$0xff]
      %v1157 = vld [vmem:[%s198 + $0x1d00] sm:$0xff]
      %v1158 = vld [vmem:[%s198 + $0x1d08] sm:$0xff]
      %v1159 = vld [vmem:[%s198 + $0x1d10] sm:$0xff]
      %v1160 = vld [vmem:[%s198 + $0x1d18] sm:$0xff]
      %v1161 = vld [vmem:[%s198 + $0x1d20] sm:$0xff]
      %v1162 = vld [vmem:[%s198 + $0x1d28] sm:$0xff]
      %v1163 = vld [vmem:[%s198 + $0x1d30] sm:$0xff]
      %v1164 = vld [vmem:[%s198 + $0x1d38] sm:$0xff]
      %v1165 = vld [vmem:[%s198 + $0x1d40] sm:$0xff]
      %v1166 = vld [vmem:[%s198 + $0x1d48] sm:$0xff]
      %v1167 = vld [vmem:[%s198 + $0x1d50] sm:$0xff]
      %v1168 = vld [vmem:[%s198 + $0x1d58] sm:$0xff]
      %v1169 = vld [vmem:[%s198 + $0x1d60] sm:$0xff]
      %v1170 = vld [vmem:[%s198 + $0x1d68] sm:$0xff]
      %v1171 = vld [vmem:[%s198 + $0x1d70] sm:$0xff]
      %v1172 = vld [vmem:[%s198 + $0x1d78] sm:$0xff]
      %v1173 = vld [vmem:[%s198 + $0x1d80] sm:$0xff]
      %v1174 = vld [vmem:[%s198 + $0x1d88] sm:$0xff]
      %v1175 = vld [vmem:[%s198 + $0x1d90] sm:$0xff]
      %v1176 = vld [vmem:[%s198 + $0x1d98] sm:$0xff]
      %v1177 = vld [vmem:[%s198 + $0x1da0] sm:$0xff]
      %v1178 = vld [vmem:[%s198 + $0x1da8] sm:$0xff]
      %v1179 = vld [vmem:[%s198 + $0x1db0] sm:$0xff]
      %v1180 = vld [vmem:[%s198 + $0x1db8] sm:$0xff]
      %v1181 = vld [vmem:[%s198 + $0x1dc0] sm:$0xff]
      %v1182 = vld [vmem:[%s198 + $0x1dc8] sm:$0xff]
      %v1183 = vld [vmem:[%s198 + $0x1dd0] sm:$0xff]
      %v1184 = vld [vmem:[%s198 + $0x1dd8] sm:$0xff]
      %v1185 = vld [vmem:[%s198 + $0x1de0] sm:$0xff]
      %v1186 = vld [vmem:[%s198 + $0x1de8] sm:$0xff]
      %v1187 = vld [vmem:[%s198 + $0x1df0] sm:$0xff]
      %v1188 = vld [vmem:[%s198 + $0x1df8] sm:$0xff]
      %v1189 = vld [vmem:[%s198 + $0x1e00] sm:$0xff]
      %v1190 = vld [vmem:[%s198 + $0x1e08] sm:$0xff]
      %v1191 = vld [vmem:[%s198 + $0x1e10] sm:$0xff]
      %v1192 = vld [vmem:[%s198 + $0x1e18] sm:$0xff]
      %v1193 = vld [vmem:[%s198 + $0x1e20] sm:$0xff]
      %v1194 = vld [vmem:[%s198 + $0x1e28] sm:$0xff]
      %v1195 = vld [vmem:[%s198 + $0x1e30] sm:$0xff]
      %v1196 = vld [vmem:[%s198 + $0x1e38] sm:$0xff]
      %v1197 = vld [vmem:[%s198 + $0x1e40] sm:$0xff]
      %v1198 = vld [vmem:[%s198 + $0x1e48] sm:$0xff]
      %v1199 = vld [vmem:[%s198 + $0x1e50] sm:$0xff]
      %v1200 = vld [vmem:[%s198 + $0x1e58] sm:$0xff]
      %v1201 = vld [vmem:[%s198 + $0x1e60] sm:$0xff]
      %v1202 = vld [vmem:[%s198 + $0x1e68] sm:$0xff]
      %v1203 = vld [vmem:[%s198 + $0x1e70] sm:$0xff]
      %v1204 = vld [vmem:[%s198 + $0x1e78] sm:$0xff]
      %v1205 = vld [vmem:[%s198 + $0x1e80] sm:$0xff]
      %v1206 = vld [vmem:[%s198 + $0x1e88] sm:$0xff]
      %v1207 = vld [vmem:[%s198 + $0x1e90] sm:$0xff]
      %v1208 = vld [vmem:[%s198 + $0x1e98] sm:$0xff]
      %v1209 = vld [vmem:[%s198 + $0x1ea0] sm:$0xff]
      %v1210 = vld [vmem:[%s198 + $0x1ea8] sm:$0xff]
      %v1211 = vld [vmem:[%s198 + $0x1eb0] sm:$0xff]
      %v1212 = vld [vmem:[%s198 + $0x1eb8] sm:$0xff]
      %v1213 = vld [vmem:[%s198 + $0x1ec0] sm:$0xff]
      %v1214 = vld [vmem:[%s198 + $0x1ec8] sm:$0xff]
      %v1215 = vld [vmem:[%s198 + $0x1ed0] sm:$0xff]
      %v1216 = vld [vmem:[%s198 + $0x1ed8] sm:$0xff]
      %v1217 = vld [vmem:[%s198 + $0x1ee0] sm:$0xff]
      %v1218 = vld [vmem:[%s198 + $0x1ee8] sm:$0xff]
      %v1219 = vld [vmem:[%s198 + $0x1ef0] sm:$0xff]
      %v1220 = vld [vmem:[%s198 + $0x1ef8] sm:$0xff]
      %v1221 = vld [vmem:[%s198 + $0x1f00] sm:$0xff]
      %v1222 = vld [vmem:[%s198 + $0x1f08] sm:$0xff]
      %v1223 = vld [vmem:[%s198 + $0x1f10] sm:$0xff]
      %v1224 = vld [vmem:[%s198 + $0x1f18] sm:$0xff]
      %v1225 = vld [vmem:[%s198 + $0x1f20] sm:$0xff]
      %v1226 = vld [vmem:[%s198 + $0x1f28] sm:$0xff]
      %v1227 = vld [vmem:[%s198 + $0x1f30] sm:$0xff]
      %v1228 = vld [vmem:[%s198 + $0x1f38] sm:$0xff]
      %v1229 = vld [vmem:[%s198 + $0x1f40] sm:$0xff]
      %v1230 = vld [vmem:[%s198 + $0x1f48] sm:$0xff]
      %v1231 = vld [vmem:[%s198 + $0x1f50] sm:$0xff]
      %v1232 = vld [vmem:[%s198 + $0x1f58] sm:$0xff]
      %v1233 = vld [vmem:[%s198 + $0x1f60] sm:$0xff]
      %v1234 = vld [vmem:[%s198 + $0x1f68] sm:$0xff]
      %v1235 = vld [vmem:[%s198 + $0x1f70] sm:$0xff]
      %v1236 = vld [vmem:[%s198 + $0x1f78] sm:$0xff]
      %v1237 = vld [vmem:[%s198 + $0x1f80] sm:$0xff]
      %v1238 = vld [vmem:[%s198 + $0x1f88] sm:$0xff]
      %v1239 = vld [vmem:[%s198 + $0x1f90] sm:$0xff]
      %v1240 = vld [vmem:[%s198 + $0x1f98] sm:$0xff]
      %v1241 = vld [vmem:[%s198 + $0x1fa0] sm:$0xff]
      %v1242 = vld [vmem:[%s198 + $0x1fa8] sm:$0xff]
      %v1243 = vld [vmem:[%s198 + $0x1fb0] sm:$0xff]
      %v1244 = vld [vmem:[%s198 + $0x1fb8] sm:$0xff]
      %v1245 = vld [vmem:[%s198 + $0x1fc0] sm:$0xff]
      %v1246 = vld [vmem:[%s198 + $0x1fc8] sm:$0xff]
      %v1247 = vld [vmem:[%s198 + $0x1fd0] sm:$0xff]
      %v1248 = vld [vmem:[%s198 + $0x1fd8] sm:$0xff]
      %v1249 = vld [vmem:[%s198 + $0x1fe0] sm:$0xff]
      %v1250 = vld [vmem:[%s198 + $0x1fe8] sm:$0xff]
      %v1251 = vld [vmem:[%s198 + $0x1ff0] sm:$0xff]
      %v1252 = vld [vmem:[%s198 + $0x1ff8] sm:$0xff]
      %v1269 = vcombine.high %v213, %v213
      %v1271 = vunpack.c.l.s4 1983009808
      %v1272 = vunpack.c.0.s8 %v1271
      %v1273 = vlaneseq
      %v1274 = vshrl.u32 %v1273, 7
      %v1275 = vsub.s32 %v1272, %v1274
      %v1276 = vrot.slane %v213, %v1275
      %v1278 = vunpack.c.l.s4 1983009808
      %v1279 = vunpack.c.0.s8 %v1278
      %v1280 = vlaneseq
      %v1281 = vshrl.u32 %v1280, 7
      %v1282 = vsub.s32 %v1279, %v1281
      %v1283 = vrot.slane %v1269, %v1282
      %v1284 = vcombine.high %v1276, %v1276
      %v1285 = vcombine.high %v1283, %v1283
      %v1286 = vcombine.high %v214, %v214
      %v1288 = vunpack.c.l.s4 1983009808
      %v1289 = vunpack.c.0.s8 %v1288
      %v1290 = vlaneseq
      %v1291 = vshrl.u32 %v1290, 7
      %v1292 = vsub.s32 %v1289, %v1291
      %v1293 = vrot.slane %v214, %v1292
      %v1295 = vunpack.c.l.s4 1983009808
      %v1296 = vunpack.c.0.s8 %v1295
      %v1297 = vlaneseq
      %v1298 = vshrl.u32 %v1297, 7
      %v1299 = vsub.s32 %v1296, %v1298
      %v1300 = vrot.slane %v1286, %v1299
      %v1301 = vcombine.high %v1293, %v1293
      %v1302 = vcombine.high %v1300, %v1300
      %v1303 = vcombine.high %v215, %v215
      %v1305 = vunpack.c.l.s4 1983009808
      %v1306 = vunpack.c.0.s8 %v1305
      %v1307 = vlaneseq
      %v1308 = vshrl.u32 %v1307, 7
      %v1309 = vsub.s32 %v1306, %v1308
      %v1310 = vrot.slane %v215, %v1309
      %v1312 = vunpack.c.l.s4 1983009808
      %v1313 = vunpack.c.0.s8 %v1312
      %v1314 = vlaneseq
      %v1315 = vshrl.u32 %v1314, 7
      %v1316 = vsub.s32 %v1313, %v1315
      %v1317 = vrot.slane %v1303, %v1316
      %v1318 = vcombine.high %v1310, %v1310
      %v1319 = vcombine.high %v1317, %v1317
      %v1320 = vcombine.high %v216, %v216
      %v1322 = vunpack.c.l.s4 1983009808
      %v1323 = vunpack.c.0.s8 %v1322
      %v1324 = vlaneseq
      %v1325 = vshrl.u32 %v1324, 7
      %v1326 = vsub.s32 %v1323, %v1325
      %v1327 = vrot.slane %v216, %v1326
      %v1329 = vunpack.c.l.s4 1983009808
      %v1330 = vunpack.c.0.s8 %v1329
      %v1331 = vlaneseq
      %v1332 = vshrl.u32 %v1331, 7
      %v1333 = vsub.s32 %v1330, %v1332
      %v1334 = vrot.slane %v1320, %v1333
      %v1335 = vcombine.high %v1327, %v1327
      %v1336 = vcombine.high %v1334, %v1334
      %v1337 = vcombine.high %v217, %v217
      %v1339 = vunpack.c.l.s4 1983009808
      %v1340 = vunpack.c.0.s8 %v1339
      %v1341 = vlaneseq
      %v1342 = vshrl.u32 %v1341, 7
      %v1343 = vsub.s32 %v1340, %v1342
      %v1344 = vrot.slane %v217, %v1343
      %v1346 = vunpack.c.l.s4 1983009808
      %v1347 = vunpack.c.0.s8 %v1346
      %v1348 = vlaneseq
      %v1349 = vshrl.u32 %v1348, 7
      %v1350 = vsub.s32 %v1347, %v1349
      %v1351 = vrot.slane %v1337, %v1350
      %v1352 = vcombine.high %v1344, %v1344
      %v1353 = vcombine.high %v1351, %v1351
      %v1354 = vcombine.high %v218, %v218
      %v1356 = vunpack.c.l.s4 1983009808
      %v1357 = vunpack.c.0.s8 %v1356
      %v1358 = vlaneseq
      %v1359 = vshrl.u32 %v1358, 7
      %v1360 = vsub.s32 %v1357, %v1359
      %v1361 = vrot.slane %v218, %v1360
      %v1363 = vunpack.c.l.s4 1983009808
      %v1364 = vunpack.c.0.s8 %v1363
      %v1365 = vlaneseq
      %v1366 = vshrl.u32 %v1365, 7
      %v1367 = vsub.s32 %v1364, %v1366
      %v1368 = vrot.slane %v1354, %v1367
      %v1369 = vcombine.high %v1361, %v1361
      %v1370 = vcombine.high %v1368, %v1368
      %v1371 = vcombine.high %v219, %v219
      %v1373 = vunpack.c.l.s4 1983009808
      %v1374 = vunpack.c.0.s8 %v1373
      %v1375 = vlaneseq
      %v1376 = vshrl.u32 %v1375, 7
      %v1377 = vsub.s32 %v1374, %v1376
      %v1378 = vrot.slane %v219, %v1377
      %v1380 = vunpack.c.l.s4 1983009808
      %v1381 = vunpack.c.0.s8 %v1380
      %v1382 = vlaneseq
      %v1383 = vshrl.u32 %v1382, 7
      %v1384 = vsub.s32 %v1381, %v1383
      %v1385 = vrot.slane %v1371, %v1384
      %v1386 = vcombine.high %v1378, %v1378
      %v1387 = vcombine.high %v1385, %v1385
      %v1388 = vcombine.high %v220, %v220
      %v1390 = vunpack.c.l.s4 1983009808
      %v1391 = vunpack.c.0.s8 %v1390
      %v1392 = vlaneseq
      %v1393 = vshrl.u32 %v1392, 7
      %v1394 = vsub.s32 %v1391, %v1393
      %v1395 = vrot.slane %v220, %v1394
      %v1397 = vunpack.c.l.s4 1983009808
      %v1398 = vunpack.c.0.s8 %v1397
      %v1399 = vlaneseq
      %v1400 = vshrl.u32 %v1399, 7
      %v1401 = vsub.s32 %v1398, %v1400
      %v1402 = vrot.slane %v1388, %v1401
      %v1403 = vcombine.high %v1395, %v1395
      %v1404 = vcombine.high %v1402, %v1402
      %v1405 = vcombine.high %v221, %v221
      %v1407 = vunpack.c.l.s4 1983009808
      %v1408 = vunpack.c.0.s8 %v1407
      %v1409 = vlaneseq
      %v1410 = vshrl.u32 %v1409, 7
      %v1411 = vsub.s32 %v1408, %v1410
      %v1412 = vrot.slane %v221, %v1411
      %v1414 = vunpack.c.l.s4 1983009808
      %v1415 = vunpack.c.0.s8 %v1414
      %v1416 = vlaneseq
      %v1417 = vshrl.u32 %v1416, 7
      %v1418 = vsub.s32 %v1415, %v1417
      %v1419 = vrot.slane %v1405, %v1418
      %v1420 = vcombine.high %v1412, %v1412
      %v1421 = vcombine.high %v1419, %v1419
      %v1422 = vcombine.high %v222, %v222
      %v1424 = vunpack.c.l.s4 1983009808
      %v1425 = vunpack.c.0.s8 %v1424
      %v1426 = vlaneseq
      %v1427 = vshrl.u32 %v1426, 7
      %v1428 = vsub.s32 %v1425, %v1427
      %v1429 = vrot.slane %v222, %v1428
      %v1431 = vunpack.c.l.s4 1983009808
      %v1432 = vunpack.c.0.s8 %v1431
      %v1433 = vlaneseq
      %v1434 = vshrl.u32 %v1433, 7
      %v1435 = vsub.s32 %v1432, %v1434
      %v1436 = vrot.slane %v1422, %v1435
      %v1437 = vcombine.high %v1429, %v1429
      %v1438 = vcombine.high %v1436, %v1436
      %v1439 = vcombine.high %v223, %v223
      %v1441 = vunpack.c.l.s4 1983009808
      %v1442 = vunpack.c.0.s8 %v1441
      %v1443 = vlaneseq
      %v1444 = vshrl.u32 %v1443, 7
      %v1445 = vsub.s32 %v1442, %v1444
      %v1446 = vrot.slane %v223, %v1445
      %v1448 = vunpack.c.l.s4 1983009808
      %v1449 = vunpack.c.0.s8 %v1448
      %v1450 = vlaneseq
      %v1451 = vshrl.u32 %v1450, 7
      %v1452 = vsub.s32 %v1449, %v1451
      %v1453 = vrot.slane %v1439, %v1452
      %v1454 = vcombine.high %v1446, %v1446
      %v1455 = vcombine.high %v1453, %v1453
      %v1456 = vcombine.high %v224, %v224
      %v1458 = vunpack.c.l.s4 1983009808
      %v1459 = vunpack.c.0.s8 %v1458
      %v1460 = vlaneseq
      %v1461 = vshrl.u32 %v1460, 7
      %v1462 = vsub.s32 %v1459, %v1461
      %v1463 = vrot.slane %v224, %v1462
      %v1465 = vunpack.c.l.s4 1983009808
      %v1466 = vunpack.c.0.s8 %v1465
      %v1467 = vlaneseq
      %v1468 = vshrl.u32 %v1467, 7
      %v1469 = vsub.s32 %v1466, %v1468
      %v1470 = vrot.slane %v1456, %v1469
      %v1471 = vcombine.high %v1463, %v1463
      %v1472 = vcombine.high %v1470, %v1470
      %v1473 = vcombine.high %v225, %v225
      %v1475 = vunpack.c.l.s4 1983009808
      %v1476 = vunpack.c.0.s8 %v1475
      %v1477 = vlaneseq
      %v1478 = vshrl.u32 %v1477, 7
      %v1479 = vsub.s32 %v1476, %v1478
      %v1480 = vrot.slane %v225, %v1479
      %v1482 = vunpack.c.l.s4 1983009808
      %v1483 = vunpack.c.0.s8 %v1482
      %v1484 = vlaneseq
      %v1485 = vshrl.u32 %v1484, 7
      %v1486 = vsub.s32 %v1483, %v1485
      %v1487 = vrot.slane %v1473, %v1486
      %v1488 = vcombine.high %v1480, %v1480
      %v1489 = vcombine.high %v1487, %v1487
      %v1490 = vcombine.high %v226, %v226
      %v1492 = vunpack.c.l.s4 1983009808
      %v1493 = vunpack.c.0.s8 %v1492
      %v1494 = vlaneseq
      %v1495 = vshrl.u32 %v1494, 7
      %v1496 = vsub.s32 %v1493, %v1495
      %v1497 = vrot.slane %v226, %v1496
      %v1499 = vunpack.c.l.s4 1983009808
      %v1500 = vunpack.c.0.s8 %v1499
      %v1501 = vlaneseq
      %v1502 = vshrl.u32 %v1501, 7
      %v1503 = vsub.s32 %v1500, %v1502
      %v1504 = vrot.slane %v1490, %v1503
      %v1505 = vcombine.high %v1497, %v1497
      %v1506 = vcombine.high %v1504, %v1504
      %v1507 = vcombine.high %v227, %v227
      %v1509 = vunpack.c.l.s4 1983009808
      %v1510 = vunpack.c.0.s8 %v1509
      %v1511 = vlaneseq
      %v1512 = vshrl.u32 %v1511, 7
      %v1513 = vsub.s32 %v1510, %v1512
      %v1514 = vrot.slane %v227, %v1513
      %v1516 = vunpack.c.l.s4 1983009808
      %v1517 = vunpack.c.0.s8 %v1516
      %v1518 = vlaneseq
      %v1519 = vshrl.u32 %v1518, 7
      %v1520 = vsub.s32 %v1517, %v1519
      %v1521 = vrot.slane %v1507, %v1520
      %v1522 = vcombine.high %v1514, %v1514
      %v1523 = vcombine.high %v1521, %v1521
      %v1524 = vcombine.high %v228, %v228
      %v1526 = vunpack.c.l.s4 1983009808
      %v1527 = vunpack.c.0.s8 %v1526
      %v1528 = vlaneseq
      %v1529 = vshrl.u32 %v1528, 7
      %v1530 = vsub.s32 %v1527, %v1529
      %v1531 = vrot.slane %v228, %v1530
      %v1533 = vunpack.c.l.s4 1983009808
      %v1534 = vunpack.c.0.s8 %v1533
      %v1535 = vlaneseq
      %v1536 = vshrl.u32 %v1535, 7
      %v1537 = vsub.s32 %v1534, %v1536
      %v1538 = vrot.slane %v1524, %v1537
      %v1539 = vcombine.high %v1531, %v1531
      %v1540 = vcombine.high %v1538, %v1538
      %1605 = vmatprep.subr.mxu0 0.0
      %1606 = vmatpush1.msra.mxu0 %v229
      %1607 = vmatprep.subr.mxu0 0.0
      %1608 = vmatpush1.msra.mxu0 %v230
      %1609 = vmatprep.subr.mxu0 0.0
      %1610 = vmatpush1.msra.mxu0 %v231
      %1611 = vmatprep.subr.mxu0 0.0
      %1612 = vmatpush1.msra.mxu0 %v232
      %1613 = vmatprep.subr.mxu0 0.0
      %1614 = vmatpush1.msra.mxu0 %v233
      %1615 = vmatprep.subr.mxu0 0.0
      %1616 = vmatpush1.msra.mxu0 %v234
      %1617 = vmatprep.subr.mxu0 0.0
      %1618 = vmatpush1.msra.mxu0 %v235
      %1619 = vmatprep.subr.mxu0 0.0
      %1620 = vmatpush1.msra.mxu0 %v236
      %1621 = vmatprep.subr.mxu0 0.0
      %1622 = vmatpush1.msra.mxu0 %v237
      %1623 = vmatprep.subr.mxu0 0.0
      %1624 = vmatpush1.msra.mxu0 %v238
      %1625 = vmatprep.subr.mxu0 0.0
      %1626 = vmatpush1.msra.mxu0 %v239
      %1627 = vmatprep.subr.mxu0 0.0
      %1628 = vmatpush1.msra.mxu0 %v240
      %1629 = vmatprep.subr.mxu0 0.0
      %1630 = vmatpush1.msra.mxu0 %v241
      %1631 = vmatprep.subr.mxu0 0.0
      %1632 = vmatpush1.msra.mxu0 %v242
      %1633 = vmatprep.subr.mxu0 0.0
      %1634 = vmatpush1.msra.mxu0 %v243
      %1635 = vmatprep.subr.mxu0 0.0
      %1636 = vmatpush1.msra.mxu0 %v244
      %1637 = vmatprep.subr.mxu0 0.0
      %1638 = vmatpush1.msra.mxu0 %v245
      %1639 = vmatprep.subr.mxu0 0.0
      %1640 = vmatpush1.msra.mxu0 %v246
      %1641 = vmatprep.subr.mxu0 0.0
      %1642 = vmatpush1.msra.mxu0 %v247
      %1643 = vmatprep.subr.mxu0 0.0
      %1644 = vmatpush1.msra.mxu0 %v248
      %1645 = vmatprep.subr.mxu0 0.0
      %1646 = vmatpush1.msra.mxu0 %v249
      %1647 = vmatprep.subr.mxu0 0.0
      %1648 = vmatpush1.msra.mxu0 %v250
      %1649 = vmatprep.subr.mxu0 0.0
      %1650 = vmatpush1.msra.mxu0 %v251
      %1651 = vmatprep.subr.mxu0 0.0
      %1652 = vmatpush1.msra.mxu0 %v252
      %1653 = vmatprep.subr.mxu0 0.0
      %1654 = vmatpush1.msra.mxu0 %v253
      %1655 = vmatprep.subr.mxu0 0.0
      %1656 = vmatpush1.msra.mxu0 %v254
      %1657 = vmatprep.subr.mxu0 0.0
      %1658 = vmatpush1.msra.mxu0 %v255
      %1659 = vmatprep.subr.mxu0 0.0
      %1660 = vmatpush1.msra.mxu0 %v256
      %1661 = vmatprep.subr.mxu0 0.0
      %1662 = vmatpush1.msra.mxu0 %v257
      %1663 = vmatprep.subr.mxu0 0.0
      %1664 = vmatpush1.msra.mxu0 %v258
      %1665 = vmatprep.subr.mxu0 0.0
      %1666 = vmatpush1.msra.mxu0 %v259
      %1667 = vmatprep.subr.mxu0 0.0
      %1668 = vmatpush1.msra.mxu0 %v260
      %1669 = vmatprep.mubr.f32.mxu0 %v1284
      %1670 = vmatmul.mubr.f32.gmra.mrb[0].mxu0 %v1276
      %v1671 = vpop.f32.mrb[0].mxu0
      %v1672 = vadd.f32 0.0, %v1671
      %v1673 = vpop.f32.mrb[0].mxu0
      %1674 = vdwg.mxu0
      %1675 = vmatprep.subr.mxu0 0.0
      %1676 = vmatpush1.msra.mxu0 %v261
      %1677 = vmatprep.subr.mxu0 0.0
      %1678 = vmatpush1.msra.mxu0 %v262
      %1679 = vmatprep.subr.mxu0 0.0
      %1680 = vmatpush1.msra.mxu0 %v263
      %1681 = vmatprep.subr.mxu0 0.0
      %1682 = vmatpush1.msra.mxu0 %v264
      %1683 = vmatprep.subr.mxu0 0.0
      %1684 = vmatpush1.msra.mxu0 %v265
      %1685 = vmatprep.subr.mxu0 0.0
      %1686 = vmatpush1.msra.mxu0 %v266
      %1687 = vmatprep.subr.mxu0 0.0
      %1688 = vmatpush1.msra.mxu0 %v267
      %1689 = vmatprep.subr.mxu0 0.0
      %1690 = vmatpush1.msra.mxu0 %v268
      %1691 = vmatprep.subr.mxu0 0.0
      %1692 = vmatpush1.msra.mxu0 %v269
      %1693 = vmatprep.subr.mxu0 0.0
      %1694 = vmatpush1.msra.mxu0 %v270
      %1695 = vmatprep.subr.mxu0 0.0
      %1696 = vmatpush1.msra.mxu0 %v271
      %1697 = vmatprep.subr.mxu0 0.0
      %1698 = vmatpush1.msra.mxu0 %v272
      %1699 = vmatprep.subr.mxu0 0.0
      %1700 = vmatpush1.msra.mxu0 %v273
      %1701 = vmatprep.subr.mxu0 0.0
      %1702 = vmatpush1.msra.mxu0 %v274
      %1703 = vmatprep.subr.mxu0 0.0
      %1704 = vmatpush1.msra.mxu0 %v275
      %1705 = vmatprep.subr.mxu0 0.0
      %1706 = vmatpush1.msra.mxu0 %v276
      %1707 = vmatprep.subr.mxu0 0.0
      %1708 = vmatpush1.msra.mxu0 %v277
      %1709 = vmatprep.subr.mxu0 0.0
      %1710 = vmatpush1.msra.mxu0 %v278
      %1711 = vmatprep.subr.mxu0 0.0
      %1712 = vmatpush1.msra.mxu0 %v279
      %1713 = vmatprep.subr.mxu0 0.0
      %1714 = vmatpush1.msra.mxu0 %v280
      %1715 = vmatprep.subr.mxu0 0.0
      %1716 = vmatpush1.msra.mxu0 %v281
      %1717 = vmatprep.subr.mxu0 0.0
      %1718 = vmatpush1.msra.mxu0 %v282
      %1719 = vmatprep.subr.mxu0 0.0
      %1720 = vmatpush1.msra.mxu0 %v283
      %1721 = vmatprep.subr.mxu0 0.0
      %1722 = vmatpush1.msra.mxu0 %v284
      %1723 = vmatprep.subr.mxu0 0.0
      %1724 = vmatpush1.msra.mxu0 %v285
      %1725 = vmatprep.subr.mxu0 0.0
      %1726 = vmatpush1.msra.mxu0 %v286
      %1727 = vmatprep.subr.mxu0 0.0
      %1728 = vmatpush1.msra.mxu0 %v287
      %1729 = vmatprep.subr.mxu0 0.0
      %1730 = vmatpush1.msra.mxu0 %v288
      %1731 = vmatprep.subr.mxu0 0.0
      %1732 = vmatpush1.msra.mxu0 %v289
      %1733 = vmatprep.subr.mxu0 0.0
      %1734 = vmatpush1.msra.mxu0 %v290
      %1735 = vmatprep.subr.mxu0 0.0
      %1736 = vmatpush1.msra.mxu0 %v291
      %1737 = vmatprep.subr.mxu0 0.0
      %1738 = vmatpush1.msra.mxu0 %v292
      %1739 = vmatprep.mubr.f32.mxu0 %v1285
      %1740 = vmatmul.mubr.f32.gmra.mrb[0].mxu0 %v1283
      %v1741 = vpop.f32.mrb[0].mxu0
      %v1742 = vadd.f32 %v1672, %v1741
      %v1743 = vpop.f32.mrb[0].mxu0
      %1744 = vdwg.mxu0
      %1745 = vmatprep.subr.mxu0 0.0
      %1746 = vmatpush1.msra.mxu0 %v293
      %1747 = vmatprep.subr.mxu0 0.0
      %1748 = vmatpush1.msra.mxu0 %v294
      %1749 = vmatprep.subr.mxu0 0.0
      %1750 = vmatpush1.msra.mxu0 %v295
      %1751 = vmatprep.subr.mxu0 0.0
      %1752 = vmatpush1.msra.mxu0 %v296
      %1753 = vmatprep.subr.mxu0 0.0
      %1754 = vmatpush1.msra.mxu0 %v297
      %1755 = vmatprep.subr.mxu0 0.0
      %1756 = vmatpush1.msra.mxu0 %v298
      %1757 = vmatprep.subr.mxu0 0.0
      %1758 = vmatpush1.msra.mxu0 %v299
      %1759 = vmatprep.subr.mxu0 0.0
      %1760 = vmatpush1.msra.mxu0 %v300
      %1761 = vmatprep.subr.mxu0 0.0
      %1762 = vmatpush1.msra.mxu0 %v301
      %1763 = vmatprep.subr.mxu0 0.0
      %1764 = vmatpush1.msra.mxu0 %v302
      %1765 = vmatprep.subr.mxu0 0.0
      %1766 = vmatpush1.msra.mxu0 %v303
      %1767 = vmatprep.subr.mxu0 0.0
      %1768 = vmatpush1.msra.mxu0 %v304
      %1769 = vmatprep.subr.mxu0 0.0
      %1770 = vmatpush1.msra.mxu0 %v305
      %1771 = vmatprep.subr.mxu0 0.0
      %1772 = vmatpush1.msra.mxu0 %v306
      %1773 = vmatprep.subr.mxu0 0.0
      %1774 = vmatpush1.msra.mxu0 %v307
      %1775 = vmatprep.subr.mxu0 0.0
      %1776 = vmatpush1.msra.mxu0 %v308
      %1777 = vmatprep.subr.mxu0 0.0
      %1778 = vmatpush1.msra.mxu0 %v309
      %1779 = vmatprep.subr.mxu0 0.0
      %1780 = vmatpush1.msra.mxu0 %v310
      %1781 = vmatprep.subr.mxu0 0.0
      %1782 = vmatpush1.msra.mxu0 %v311
      %1783 = vmatprep.subr.mxu0 0.0
      %1784 = vmatpush1.msra.mxu0 %v312
      %1785 = vmatprep.subr.mxu0 0.0
      %1786 = vmatpush1.msra.mxu0 %v313
      %1787 = vmatprep.subr.mxu0 0.0
      %1788 = vmatpush1.msra.mxu0 %v314
      %1789 = vmatprep.subr.mxu0 0.0
      %1790 = vmatpush1.msra.mxu0 %v315
      %1791 = vmatprep.subr.mxu0 0.0
      %1792 = vmatpush1.msra.mxu0 %v316
      %1793 = vmatprep.subr.mxu0 0.0
      %1794 = vmatpush1.msra.mxu0 %v317
      %1795 = vmatprep.subr.mxu0 0.0
      %1796 = vmatpush1.msra.mxu0 %v318
      %1797 = vmatprep.subr.mxu0 0.0
      %1798 = vmatpush1.msra.mxu0 %v319
      %1799 = vmatprep.subr.mxu0 0.0
      %1800 = vmatpush1.msra.mxu0 %v320
      %1801 = vmatprep.subr.mxu0 0.0
      %1802 = vmatpush1.msra.mxu0 %v321
      %1803 = vmatprep.subr.mxu0 0.0
      %1804 = vmatpush1.msra.mxu0 %v322
      %1805 = vmatprep.subr.mxu0 0.0
      %1806 = vmatpush1.msra.mxu0 %v323
      %1807 = vmatprep.subr.mxu0 0.0
      %1808 = vmatpush1.msra.mxu0 %v324
      %1809 = vmatprep.mubr.f32.mxu0 %v1301
      %1810 = vmatmul.mubr.f32.gmra.mrb[0].mxu0 %v1293
      %v1811 = vpop.f32.mrb[0].mxu0
      %v1812 = vadd.f32 %v1742, %v1811
      %v1813 = vpop.f32.mrb[0].mxu0
      %1814 = vdwg.mxu0
      %1815 = vmatprep.subr.mxu0 0.0
      %1816 = vmatpush1.msra.mxu0 %v325
      %1817 = vmatprep.subr.mxu0 0.0
      %1818 = vmatpush1.msra.mxu0 %v326
      %1819 = vmatprep.subr.mxu0 0.0
      %1820 = vmatpush1.msra.mxu0 %v327
      %1821 = vmatprep.subr.mxu0 0.0
      %1822 = vmatpush1.msra.mxu0 %v328
      %1823 = vmatprep.subr.mxu0 0.0
      %1824 = vmatpush1.msra.mxu0 %v329
      %1825 = vmatprep.subr.mxu0 0.0
      %1826 = vmatpush1.msra.mxu0 %v330
      %1827 = vmatprep.subr.mxu0 0.0
      %1828 = vmatpush1.msra.mxu0 %v331
      %1829 = vmatprep.subr.mxu0 0.0
      %1830 = vmatpush1.msra.mxu0 %v332
      %1831 = vmatprep.subr.mxu0 0.0
      %1832 = vmatpush1.msra.mxu0 %v333
      %1833 = vmatprep.subr.mxu0 0.0
      %1834 = vmatpush1.msra.mxu0 %v334
      %1835 = vmatprep.subr.mxu0 0.0
      %1836 = vmatpush1.msra.mxu0 %v335
      %1837 = vmatprep.subr.mxu0 0.0
      %1838 = vmatpush1.msra.mxu0 %v336
      %1839 = vmatprep.subr.mxu0 0.0
      %1840 = vmatpush1.msra.mxu0 %v337
      %1841 = vmatprep.subr.mxu0 0.0
      %1842 = vmatpush1.msra.mxu0 %v338
      %1843 = vmatprep.subr.mxu0 0.0
      %1844 = vmatpush1.msra.mxu0 %v339
      %1845 = vmatprep.subr.mxu0 0.0
      %1846 = vmatpush1.msra.mxu0 %v340
      %1847 = vmatprep.subr.mxu0 0.0
      %1848 = vmatpush1.msra.mxu0 %v341
      %1849 = vmatprep.subr.mxu0 0.0
      %1850 = vmatpush1.msra.mxu0 %v342
      %1851 = vmatprep.subr.mxu0 0.0
      %1852 = vmatpush1.msra.mxu0 %v343
      %1853 = vmatprep.subr.mxu0 0.0
      %1854 = vmatpush1.msra.mxu0 %v344
      %1855 = vmatprep.subr.mxu0 0.0
      %1856 = vmatpush1.msra.mxu0 %v345
      %1857 = vmatprep.subr.mxu0 0.0
      %1858 = vmatpush1.msra.mxu0 %v346
      %1859 = vmatprep.subr.mxu0 0.0
      %1860 = vmatpush1.msra.mxu0 %v347
      %1861 = vmatprep.subr.mxu0 0.0
      %1862 = vmatpush1.msra.mxu0 %v348
      %1863 = vmatprep.subr.mxu0 0.0
      %1864 = vmatpush1.msra.mxu0 %v349
      %1865 = vmatprep.subr.mxu0 0.0
      %1866 = vmatpush1.msra.mxu0 %v350
      %1867 = vmatprep.subr.mxu0 0.0
      %1868 = vmatpush1.msra.mxu0 %v351
      %1869 = vmatprep.subr.mxu0 0.0
      %1870 = vmatpush1.msra.mxu0 %v352
      %1871 = vmatprep.subr.mxu0 0.0
      %1872 = vmatpush1.msra.mxu0 %v353
      %1873 = vmatprep.subr.mxu0 0.0
      %1874 = vmatpush1.msra.mxu0 %v354
      %1875 = vmatprep.subr.mxu0 0.0
      %1876 = vmatpush1.msra.mxu0 %v355
      %1877 = vmatprep.subr.mxu0 0.0
      %1878 = vmatpush1.msra.mxu0 %v356
      %1879 = vmatprep.mubr.f32.mxu0 %v1302
      %1880 = vmatmul.mubr.f32.gmra.mrb[0].mxu0 %v1300
      %v1881 = vpop.f32.mrb[0].mxu0
      %v1882 = vadd.f32 %v1812, %v1881
      %v1883 = vpop.f32.mrb[0].mxu0
      %1884 = vdwg.mxu0
      %1885 = vmatprep.subr.mxu0 0.0
      %1886 = vmatpush1.msra.mxu0 %v357
      %1887 = vmatprep.subr.mxu0 0.0
      %1888 = vmatpush1.msra.mxu0 %v358
      %1889 = vmatprep.subr.mxu0 0.0
      %1890 = vmatpush1.msra.mxu0 %v359
      %1891 = vmatprep.subr.mxu0 0.0
      %1892 = vmatpush1.msra.mxu0 %v360
      %1893 = vmatprep.subr.mxu0 0.0
      %1894 = vmatpush1.msra.mxu0 %v361
      %1895 = vmatprep.subr.mxu0 0.0
      %1896 = vmatpush1.msra.mxu0 %v362
      %1897 = vmatprep.subr.mxu0 0.0
      %1898 = vmatpush1.msra.mxu0 %v363
      %1899 = vmatprep.subr.mxu0 0.0
      %1900 = vmatpush1.msra.mxu0 %v364
      %1901 = vmatprep.subr.mxu0 0.0
      %1902 = vmatpush1.msra.mxu0 %v365
      %1903 = vmatprep.subr.mxu0 0.0
      %1904 = vmatpush1.msra.mxu0 %v366
      %1905 = vmatprep.subr.mxu0 0.0
      %1906 = vmatpush1.msra.mxu0 %v367
      %1907 = vmatprep.subr.mxu0 0.0
      %1908 = vmatpush1.msra.mxu0 %v368
      %1909 = vmatprep.subr.mxu0 0.0
      %1910 = vmatpush1.msra.mxu0 %v369
      %1911 = vmatprep.subr.mxu0 0.0
      %1912 = vmatpush1.msra.mxu0 %v370
      %1913 = vmatprep.subr.mxu0 0.0
      %1914 = vmatpush1.msra.mxu0 %v371
      %1915 = vmatprep.subr.mxu0 0.0
      %1916 = vmatpush1.msra.mxu0 %v372
      %1917 = vmatprep.subr.mxu0 0.0
      %1918 = vmatpush1.msra.mxu0 %v373
      %1919 = vmatprep.subr.mxu0 0.0
      %1920 = vmatpush1.msra.mxu0 %v374
      %1921 = vmatprep.subr.mxu0 0.0
      %1922 = vmatpush1.msra.mxu0 %v375
      %1923 = vmatprep.subr.mxu0 0.0
      %1924 = vmatpush1.msra.mxu0 %v376
      %1925 = vmatprep.subr.mxu0 0.0
      %1926 = vmatpush1.msra.mxu0 %v377
      %1927 = vmatprep.subr.mxu0 0.0
      %1928 = vmatpush1.msra.mxu0 %v378
      %1929 = vmatprep.subr.mxu0 0.0
      %1930 = vmatpush1.msra.mxu0 %v379
      %1931 = vmatprep.subr.mxu0 0.0
      %1932 = vmatpush1.msra.mxu0 %v380
      %1933 = vmatprep.subr.mxu0 0.0
      %1934 = vmatpush1.msra.mxu0 %v381
      %1935 = vmatprep.subr.mxu0 0.0
      %1936 = vmatpush1.msra.mxu0 %v382
      %1937 = vmatprep.subr.mxu0 0.0
      %1938 = vmatpush1.msra.mxu0 %v383
      %1939 = vmatprep.subr.mxu0 0.0
      %1940 = vmatpush1.msra.mxu0 %v384
      %1941 = vmatprep.subr.mxu0 0.0
      %1942 = vmatpush1.msra.mxu0 %v385
      %1943 = vmatprep.subr.mxu0 0.0
      %1944 = vmatpush1.msra.mxu0 %v386
      %1945 = vmatprep.subr.mxu0 0.0
      %1946 = vmatpush1.msra.mxu0 %v387
      %1947 = vmatprep.subr.mxu0 0.0
      %1948 = vmatpush1.msra.mxu0 %v388
      %1949 = vmatprep.mubr.f32.mxu0 %v1318
      %1950 = vmatmul.mubr.f32.gmra.mrb[0].mxu0 %v1310
      %v1951 = vpop.f32.mrb[0].mxu0
      %v1952 = vadd.f32 %v1882, %v1951
      %v1953 = vpop.f32.mrb[0].mxu0
      %1954 = vdwg.mxu0
      %1955 = vmatprep.subr.mxu0 0.0
      %1956 = vmatpush1.msra.mxu0 %v389
      %1957 = vmatprep.subr.mxu0 0.0
      %1958 = vmatpush1.msra.mxu0 %v390
      %1959 = vmatprep.subr.mxu0 0.0
      %1960 = vmatpush1.msra.mxu0 %v391
      %1961 = vmatprep.subr.mxu0 0.0
      %1962 = vmatpush1.msra.mxu0 %v392
      %1963 = vmatprep.subr.mxu0 0.0
      %1964 = vmatpush1.msra.mxu0 %v393
      %1965 = vmatprep.subr.mxu0 0.0
      %1966 = vmatpush1.msra.mxu0 %v394
      %1967 = vmatprep.subr.mxu0 0.0
      %1968 = vmatpush1.msra.mxu0 %v395
      %1969 = vmatprep.subr.mxu0 0.0
      %1970 = vmatpush1.msra.mxu0 %v396
      %1971 = vmatprep.subr.mxu0 0.0
      %1972 = vmatpush1.msra.mxu0 %v397
      %1973 = vmatprep.subr.mxu0 0.0
      %1974 = vmatpush1.msra.mxu0 %v398
      %1975 = vmatprep.subr.mxu0 0.0
      %1976 = vmatpush1.msra.mxu0 %v399
      %1977 = vmatprep.subr.mxu0 0.0
      %1978 = vmatpush1.msra.mxu0 %v400
      %1979 = vmatprep.subr.mxu0 0.0
      %1980 = vmatpush1.msra.mxu0 %v401
      %1981 = vmatprep.subr.mxu0 0.0
      %1982 = vmatpush1.msra.mxu0 %v402
      %1983 = vmatprep.subr.mxu0 0.0
      %1984 = vmatpush1.msra.mxu0 %v403
      %1985 = vmatprep.subr.mxu0 0.0
      %1986 = vmatpush1.msra.mxu0 %v404
      %1987 = vmatprep.subr.mxu0 0.0
      %1988 = vmatpush1.msra.mxu0 %v405
      %1989 = vmatprep.subr.mxu0 0.0
      %1990 = vmatpush1.msra.mxu0 %v406
      %1991 = vmatprep.subr.mxu0 0.0
      %1992 = vmatpush1.msra.mxu0 %v407
      %1993 = vmatprep.subr.mxu0 0.0
      %1994 = vmatpush1.msra.mxu0 %v408
      %1995 = vmatprep.subr.mxu0 0.0
      %1996 = vmatpush1.msra.mxu0 %v409
      %1997 = vmatprep.subr.mxu0 0.0
      %1998 = vmatpush1.msra.mxu0 %v410
      %1999 = vmatprep.subr.mxu0 0.0
      %2000 = vmatpush1.msra.mxu0 %v411
      %2001 = vmatprep.subr.mxu0 0.0
      %2002 = vmatpush1.msra.mxu0 %v412
      %2003 = vmatprep.subr.mxu0 0.0
      %2004 = vmatpush1.msra.mxu0 %v413
      %2005 = vmatprep.subr.mxu0 0.0
      %2006 = vmatpush1.msra.mxu0 %v414
      %2007 = vmatprep.subr.mxu0 0.0
      %2008 = vmatpush1.msra.mxu0 %v415
      %2009 = vmatprep.subr.mxu0 0.0
      %2010 = vmatpush1.msra.mxu0 %v416
      %2011 = vmatprep.subr.mxu0 0.0
      %2012 = vmatpush1.msra.mxu0 %v417
      %2013 = vmatprep.subr.mxu0 0.0
      %2014 = vmatpush1.msra.mxu0 %v418
      %2015 = vmatprep.subr.mxu0 0.0
      %2016 = vmatpush1.msra.mxu0 %v419
      %2017 = vmatprep.subr.mxu0 0.0
      %2018 = vmatpush1.msra.mxu0 %v420
      %2019 = vmatprep.mubr.f32.mxu0 %v1319
      %2020 = vmatmul.mubr.f32.gmra.mrb[0].mxu0 %v1317
      %v2021 = vpop.f32.mrb[0].mxu0
      %v2022 = vadd.f32 %v1952, %v2021
      %v2023 = vpop.f32.mrb[0].mxu0
      %2024 = vdwg.mxu0
      %2025 = vmatprep.subr.mxu0 0.0
      %2026 = vmatpush1.msra.mxu0 %v421
      %2027 = vmatprep.subr.mxu0 0.0
      %2028 = vmatpush1.msra.mxu0 %v422
      %2029 = vmatprep.subr.mxu0 0.0
      %2030 = vmatpush1.msra.mxu0 %v423
      %2031 = vmatprep.subr.mxu0 0.0
      %2032 = vmatpush1.msra.mxu0 %v424
      %2033 = vmatprep.subr.mxu0 0.0
      %2034 = vmatpush1.msra.mxu0 %v425
      %2035 = vmatprep.subr.mxu0 0.0
      %2036 = vmatpush1.msra.mxu0 %v426
      %2037 = vmatprep.subr.mxu0 0.0
      %2038 = vmatpush1.msra.mxu0 %v427
      %2039 = vmatprep.subr.mxu0 0.0
      %2040 = vmatpush1.msra.mxu0 %v428
      %2041 = vmatprep.subr.mxu0 0.0
      %2042 = vmatpush1.msra.mxu0 %v429
      %2043 = vmatprep.subr.mxu0 0.0
      %2044 = vmatpush1.msra.mxu0 %v430
      %2045 = vmatprep.subr.mxu0 0.0
      %2046 = vmatpush1.msra.mxu0 %v431
      %2047 = vmatprep.subr.mxu0 0.0
      %2048 = vmatpush1.msra.mxu0 %v432
      %2049 = vmatprep.subr.mxu0 0.0
      %2050 = vmatpush1.msra.mxu0 %v433
      %2051 = vmatprep.subr.mxu0 0.0
      %2052 = vmatpush1.msra.mxu0 %v434
      %2053 = vmatprep.subr.mxu0 0.0
      %2054 = vmatpush1.msra.mxu0 %v435
      %2055 = vmatprep.subr.mxu0 0.0
      %2056 = vmatpush1.msra.mxu0 %v436
      %2057 = vmatprep.subr.mxu0 0.0
      %2058 = vmatpush1.msra.mxu0 %v437
      %2059 = vmatprep.subr.mxu0 0.0
      %2060 = vmatpush1.msra.mxu0 %v438
      %2061 = vmatprep.subr.mxu0 0.0
      %2062 = vmatpush1.msra.mxu0 %v439
      %2063 = vmatprep.subr.mxu0 0.0
      %2064 = vmatpush1.msra.mxu0 %v440
      %2065 = vmatprep.subr.mxu0 0.0
      %2066 = vmatpush1.msra.mxu0 %v441
      %2067 = vmatprep.subr.mxu0 0.0
      %2068 = vmatpush1.msra.mxu0 %v442
      %2069 = vmatprep.subr.mxu0 0.0
      %2070 = vmatpush1.msra.mxu0 %v443
      %2071 = vmatprep.subr.mxu0 0.0
      %2072 = vmatpush1.msra.mxu0 %v444
      %2073 = vmatprep.subr.mxu0 0.0
      %2074 = vmatpush1.msra.mxu0 %v445
      %2075 = vmatprep.subr.mxu0 0.0
      %2076 = vmatpush1.msra.mxu0 %v446
      %2077 = vmatprep.subr.mxu0 0.0
      %2078 = vmatpush1.msra.mxu0 %v447
      %2079 = vmatprep.subr.mxu0 0.0
      %2080 = vmatpush1.msra.mxu0 %v448
      %2081 = vmatprep.subr.mxu0 0.0
      %2082 = vmatpush1.msra.mxu0 %v449
      %2083 = vmatprep.subr.mxu0 0.0
      %2084 = vmatpush1.msra.mxu0 %v450
      %2085 = vmatprep.subr.mxu0 0.0
      %2086 = vmatpush1.msra.mxu0 %v451
      %2087 = vmatprep.subr.mxu0 0.0
      %2088 = vmatpush1.msra.mxu0 %v452
      %2089 = vmatprep.mubr.f32.mxu0 %v1335
      %2090 = vmatmul.mubr.f32.gmra.mrb[0].mxu0 %v1327
      %v2091 = vpop.f32.mrb[0].mxu0
      %v2092 = vadd.f32 %v2022, %v2091
      %v2093 = vpop.f32.mrb[0].mxu0
      %2094 = vdwg.mxu0
      %2095 = vmatprep.subr.mxu0 0.0
      %2096 = vmatpush1.msra.mxu0 %v453
      %2097 = vmatprep.subr.mxu0 0.0
      %2098 = vmatpush1.msra.mxu0 %v454
      %2099 = vmatprep.subr.mxu0 0.0
      %2100 = vmatpush1.msra.mxu0 %v455
      %2101 = vmatprep.subr.mxu0 0.0
      %2102 = vmatpush1.msra.mxu0 %v456
      %2103 = vmatprep.subr.mxu0 0.0
      %2104 = vmatpush1.msra.mxu0 %v457
      %2105 = vmatprep.subr.mxu0 0.0
      %2106 = vmatpush1.msra.mxu0 %v458
      %2107 = vmatprep.subr.mxu0 0.0
      %2108 = vmatpush1.msra.mxu0 %v459
      %2109 = vmatprep.subr.mxu0 0.0
      %2110 = vmatpush1.msra.mxu0 %v460
      %2111 = vmatprep.subr.mxu0 0.0
      %2112 = vmatpush1.msra.mxu0 %v461
      %2113 = vmatprep.subr.mxu0 0.0
      %2114 = vmatpush1.msra.mxu0 %v462
      %2115 = vmatprep.subr.mxu0 0.0
      %2116 = vmatpush1.msra.mxu0 %v463
      %2117 = vmatprep.subr.mxu0 0.0
      %2118 = vmatpush1.msra.mxu0 %v464
      %2119 = vmatprep.subr.mxu0 0.0
      %2120 = vmatpush1.msra.mxu0 %v465
      %2121 = vmatprep.subr.mxu0 0.0
      %2122 = vmatpush1.msra.mxu0 %v466
      %2123 = vmatprep.subr.mxu0 0.0
      %2124 = vmatpush1.msra.mxu0 %v467
      %2125 = vmatprep.subr.mxu0 0.0
      %2126 = vmatpush1.msra.mxu0 %v468
      %2127 = vmatprep.subr.mxu0 0.0
      %2128 = vmatpush1.msra.mxu0 %v469
      %2129 = vmatprep.subr.mxu0 0.0
      %2130 = vmatpush1.msra.mxu0 %v470
      %2131 = vmatprep.subr.mxu0 0.0
      %2132 = vmatpush1.msra.mxu0 %v471
      %2133 = vmatprep.subr.mxu0 0.0
      %2134 = vmatpush1.msra.mxu0 %v472
      %2135 = vmatprep.subr.mxu0 0.0
      %2136 = vmatpush1.msra.mxu0 %v473
      %2137 = vmatprep.subr.mxu0 0.0
      %2138 = vmatpush1.msra.mxu0 %v474
      %2139 = vmatprep.subr.mxu0 0.0
      %2140 = vmatpush1.msra.mxu0 %v475
      %2141 = vmatprep.subr.mxu0 0.0
      %2142 = vmatpush1.msra.mxu0 %v476
      %2143 = vmatprep.subr.mxu0 0.0
      %2144 = vmatpush1.msra.mxu0 %v477
      %2145 = vmatprep.subr.mxu0 0.0
      %2146 = vmatpush1.msra.mxu0 %v478
      %2147 = vmatprep.subr.mxu0 0.0
      %2148 = vmatpush1.msra.mxu0 %v479
      %2149 = vmatprep.subr.mxu0 0.0
      %2150 = vmatpush1.msra.mxu0 %v480
      %2151 = vmatprep.subr.mxu0 0.0
      %2152 = vmatpush1.msra.mxu0 %v481
      %2153 = vmatprep.subr.mxu0 0.0
      %2154 = vmatpush1.msra.mxu0 %v482
      %2155 = vmatprep.subr.mxu0 0.0
      %2156 = vmatpush1.msra.mxu0 %v483
      %2157 = vmatprep.subr.mxu0 0.0
      %2158 = vmatpush1.msra.mxu0 %v484
      %2159 = vmatprep.mubr.f32.mxu0 %v1336
      %2160 = vmatmul.mubr.f32.gmra.mrb[0].mxu0 %v1334
      %v2161 = vpop.f32.mrb[0].mxu0
      %v2162 = vadd.f32 %v2092, %v2161
      %v2163 = vpop.f32.mrb[0].mxu0
      %2164 = vdwg.mxu0
      %2165 = vmatprep.subr.mxu0 0.0
      %2166 = vmatpush1.msra.mxu0 %v485
      %2167 = vmatprep.subr.mxu0 0.0
      %2168 = vmatpush1.msra.mxu0 %v486
      %2169 = vmatprep.subr.mxu0 0.0
      %2170 = vmatpush1.msra.mxu0 %v487
      %2171 = vmatprep.subr.mxu0 0.0
      %2172 = vmatpush1.msra.mxu0 %v488
      %2173 = vmatprep.subr.mxu0 0.0
      %2174 = vmatpush1.msra.mxu0 %v489
      %2175 = vmatprep.subr.mxu0 0.0
      %2176 = vmatpush1.msra.mxu0 %v490
      %2177 = vmatprep.subr.mxu0 0.0
      %2178 = vmatpush1.msra.mxu0 %v491
      %2179 = vmatprep.subr.mxu0 0.0
      %2180 = vmatpush1.msra.mxu0 %v492
      %2181 = vmatprep.subr.mxu0 0.0
      %2182 = vmatpush1.msra.mxu0 %v493
      %2183 = vmatprep.subr.mxu0 0.0
      %2184 = vmatpush1.msra.mxu0 %v494
      %2185 = vmatprep.subr.mxu0 0.0
      %2186 = vmatpush1.msra.mxu0 %v495
      %2187 = vmatprep.subr.mxu0 0.0
      %2188 = vmatpush1.msra.mxu0 %v496
      %2189 = vmatprep.subr.mxu0 0.0
      %2190 = vmatpush1.msra.mxu0 %v497
      %2191 = vmatprep.subr.mxu0 0.0
      %2192 = vmatpush1.msra.mxu0 %v498
      %2193 = vmatprep.subr.mxu0 0.0
      %2194 = vmatpush1.msra.mxu0 %v499
      %2195 = vmatprep.subr.mxu0 0.0
      %2196 = vmatpush1.msra.mxu0 %v500
      %2197 = vmatprep.subr.mxu0 0.0
      %2198 = vmatpush1.msra.mxu0 %v501
      %2199 = vmatprep.subr.mxu0 0.0
      %2200 = vmatpush1.msra.mxu0 %v502
      %2201 = vmatprep.subr.mxu0 0.0
      %2202 = vmatpush1.msra.mxu0 %v503
      %2203 = vmatprep.subr.mxu0 0.0
      %2204 = vmatpush1.msra.mxu0 %v504
      %2205 = vmatprep.subr.mxu0 0.0
      %2206 = vmatpush1.msra.mxu0 %v505
      %2207 = vmatprep.subr.mxu0 0.0
      %2208 = vmatpush1.msra.mxu0 %v506
      %2209 = vmatprep.subr.mxu0 0.0
      %2210 = vmatpush1.msra.mxu0 %v507
      %2211 = vmatprep.subr.mxu0 0.0
      %2212 = vmatpush1.msra.mxu0 %v508
      %2213 = vmatprep.subr.mxu0 0.0
      %2214 = vmatpush1.msra.mxu0 %v509
      %2215 = vmatprep.subr.mxu0 0.0
      %2216 = vmatpush1.msra.mxu0 %v510
      %2217 = vmatprep.subr.mxu0 0.0
      %2218 = vmatpush1.msra.mxu0 %v511
      %2219 = vmatprep.subr.mxu0 0.0
      %2220 = vmatpush1.msra.mxu0 %v512
      %2221 = vmatprep.subr.mxu0 0.0
      %2222 = vmatpush1.msra.mxu0 %v513
      %2223 = vmatprep.subr.mxu0 0.0
      %2224 = vmatpush1.msra.mxu0 %v514
      %2225 = vmatprep.subr.mxu0 0.0
      %2226 = vmatpush1.msra.mxu0 %v515
      %2227 = vmatprep.subr.mxu0 0.0
      %2228 = vmatpush1.msra.mxu0 %v516
      %2229 = vmatprep.mubr.f32.mxu0 %v1352
      %2230 = vmatmul.mubr.f32.gmra.mrb[0].mxu0 %v1344
      %v2231 = vpop.f32.mrb[0].mxu0
      %v2232 = vadd.f32 %v2162, %v2231
      %v2233 = vpop.f32.mrb[0].mxu0
      %2234 = vdwg.mxu0
      %2235 = vmatprep.subr.mxu0 0.0
      %2236 = vmatpush1.msra.mxu0 %v517
      %2237 = vmatprep.subr.mxu0 0.0
      %2238 = vmatpush1.msra.mxu0 %v518
      %2239 = vmatprep.subr.mxu0 0.0
      %2240 = vmatpush1.msra.mxu0 %v519
      %2241 = vmatprep.subr.mxu0 0.0
      %2242 = vmatpush1.msra.mxu0 %v520
      %2243 = vmatprep.subr.mxu0 0.0
      %2244 = vmatpush1.msra.mxu0 %v521
      %2245 = vmatprep.subr.mxu0 0.0
      %2246 = vmatpush1.msra.mxu0 %v522
      %2247 = vmatprep.subr.mxu0 0.0
      %2248 = vmatpush1.msra.mxu0 %v523
      %2249 = vmatprep.subr.mxu0 0.0
      %2250 = vmatpush1.msra.mxu0 %v524
      %2251 = vmatprep.subr.mxu0 0.0
      %2252 = vmatpush1.msra.mxu0 %v525
      %2253 = vmatprep.subr.mxu0 0.0
      %2254 = vmatpush1.msra.mxu0 %v526
      %2255 = vmatprep.subr.mxu0 0.0
      %2256 = vmatpush1.msra.mxu0 %v527
      %2257 = vmatprep.subr.mxu0 0.0
      %2258 = vmatpush1.msra.mxu0 %v528
      %2259 = vmatprep.subr.mxu0 0.0
      %2260 = vmatpush1.msra.mxu0 %v529
      %2261 = vmatprep.subr.mxu0 0.0
      %2262 = vmatpush1.msra.mxu0 %v530
      %2263 = vmatprep.subr.mxu0 0.0
      %2264 = vmatpush1.msra.mxu0 %v531
      %2265 = vmatprep.subr.mxu0 0.0
      %2266 = vmatpush1.msra.mxu0 %v532
      %2267 = vmatprep.subr.mxu0 0.0
      %2268 = vmatpush1.msra.mxu0 %v533
      %2269 = vmatprep.subr.mxu0 0.0
      %2270 = vmatpush1.msra.mxu0 %v534
      %2271 = vmatprep.subr.mxu0 0.0
      %2272 = vmatpush1.msra.mxu0 %v535
      %2273 = vmatprep.subr.mxu0 0.0
      %2274 = vmatpush1.msra.mxu0 %v536
      %2275 = vmatprep.subr.mxu0 0.0
      %2276 = vmatpush1.msra.mxu0 %v537
      %2277 = vmatprep.subr.mxu0 0.0
      %2278 = vmatpush1.msra.mxu0 %v538
      %2279 = vmatprep.subr.mxu0 0.0
      %2280 = vmatpush1.msra.mxu0 %v539
      %2281 = vmatprep.subr.mxu0 0.0
      %2282 = vmatpush1.msra.mxu0 %v540
      %2283 = vmatprep.subr.mxu0 0.0
      %2284 = vmatpush1.msra.mxu0 %v541
      %2285 = vmatprep.subr.mxu0 0.0
      %2286 = vmatpush1.msra.mxu0 %v542
      %2287 = vmatprep.subr.mxu0 0.0
      %2288 = vmatpush1.msra.mxu0 %v543
      %2289 = vmatprep.subr.mxu0 0.0
      %2290 = vmatpush1.msra.mxu0 %v544
      %2291 = vmatprep.subr.mxu0 0.0
      %2292 = vmatpush1.msra.mxu0 %v545
      %2293 = vmatprep.subr.mxu0 0.0
      %2294 = vmatpush1.msra.mxu0 %v546
      %2295 = vmatprep.subr.mxu0 0.0
      %2296 = vmatpush1.msra.mxu0 %v547
      %2297 = vmatprep.subr.mxu0 0.0
      %2298 = vmatpush1.msra.mxu0 %v548
      %2299 = vmatprep.mubr.f32.mxu0 %v1353
      %2300 = vmatmul.mubr.f32.gmra.mrb[0].mxu0 %v1351
      %v2301 = vpop.f32.mrb[0].mxu0
      %v2302 = vadd.f32 %v2232, %v2301
      %v2303 = vpop.f32.mrb[0].mxu0
      %2304 = vdwg.mxu0
      %2305 = vmatprep.subr.mxu0 0.0
      %2306 = vmatpush1.msra.mxu0 %v549
      %2307 = vmatprep.subr.mxu0 0.0
      %2308 = vmatpush1.msra.mxu0 %v550
      %2309 = vmatprep.subr.mxu0 0.0
      %2310 = vmatpush1.msra.mxu0 %v551
      %2311 = vmatprep.subr.mxu0 0.0
      %2312 = vmatpush1.msra.mxu0 %v552
      %2313 = vmatprep.subr.mxu0 0.0
      %2314 = vmatpush1.msra.mxu0 %v553
      %2315 = vmatprep.subr.mxu0 0.0
      %2316 = vmatpush1.msra.mxu0 %v554
      %2317 = vmatprep.subr.mxu0 0.0
      %2318 = vmatpush1.msra.mxu0 %v555
      %2319 = vmatprep.subr.mxu0 0.0
      %2320 = vmatpush1.msra.mxu0 %v556
      %2321 = vmatprep.subr.mxu0 0.0
      %2322 = vmatpush1.msra.mxu0 %v557
      %2323 = vmatprep.subr.mxu0 0.0
      %2324 = vmatpush1.msra.mxu0 %v558
      %2325 = vmatprep.subr.mxu0 0.0
      %2326 = vmatpush1.msra.mxu0 %v559
      %2327 = vmatprep.subr.mxu0 0.0
      %2328 = vmatpush1.msra.mxu0 %v560
      %2329 = vmatprep.subr.mxu0 0.0
      %2330 = vmatpush1.msra.mxu0 %v561
      %2331 = vmatprep.subr.mxu0 0.0
      %2332 = vmatpush1.msra.mxu0 %v562
      %2333 = vmatprep.subr.mxu0 0.0
      %2334 = vmatpush1.msra.mxu0 %v563
      %2335 = vmatprep.subr.mxu0 0.0
      %2336 = vmatpush1.msra.mxu0 %v564
      %2337 = vmatprep.subr.mxu0 0.0
      %2338 = vmatpush1.msra.mxu0 %v565
      %2339 = vmatprep.subr.mxu0 0.0
      %2340 = vmatpush1.msra.mxu0 %v566
      %2341 = vmatprep.subr.mxu0 0.0
      %2342 = vmatpush1.msra.mxu0 %v567
      %2343 = vmatprep.subr.mxu0 0.0
      %2344 = vmatpush1.msra.mxu0 %v568
      %2345 = vmatprep.subr.mxu0 0.0
      %2346 = vmatpush1.msra.mxu0 %v569
      %2347 = vmatprep.subr.mxu0 0.0
      %2348 = vmatpush1.msra.mxu0 %v570
      %2349 = vmatprep.subr.mxu0 0.0
      %2350 = vmatpush1.msra.mxu0 %v571
      %2351 = vmatprep.subr.mxu0 0.0
      %2352 = vmatpush1.msra.mxu0 %v572
      %2353 = vmatprep.subr.mxu0 0.0
      %2354 = vmatpush1.msra.mxu0 %v573
      %2355 = vmatprep.subr.mxu0 0.0
      %2356 = vmatpush1.msra.mxu0 %v574
      %2357 = vmatprep.subr.mxu0 0.0
      %2358 = vmatpush1.msra.mxu0 %v575
      %2359 = vmatprep.subr.mxu0 0.0
      %2360 = vmatpush1.msra.mxu0 %v576
      %2361 = vmatprep.subr.mxu0 0.0
      %2362 = vmatpush1.msra.mxu0 %v577
      %2363 = vmatprep.subr.mxu0 0.0
      %2364 = vmatpush1.msra.mxu0 %v578
      %2365 = vmatprep.subr.mxu0 0.0
      %2366 = vmatpush1.msra.mxu0 %v579
      %2367 = vmatprep.subr.mxu0 0.0
      %2368 = vmatpush1.msra.mxu0 %v580
      %2369 = vmatprep.mubr.f32.mxu0 %v1369
      %2370 = vmatmul.mubr.f32.gmra.mrb[0].mxu0 %v1361
      %v2371 = vpop.f32.mrb[0].mxu0
      %v2372 = vadd.f32 %v2302, %v2371
      %v2373 = vpop.f32.mrb[0].mxu0
      %2374 = vdwg.mxu0
      %2375 = vmatprep.subr.mxu0 0.0
      %2376 = vmatpush1.msra.mxu0 %v581
      %2377 = vmatprep.subr.mxu0 0.0
      %2378 = vmatpush1.msra.mxu0 %v582
      %2379 = vmatprep.subr.mxu0 0.0
      %2380 = vmatpush1.msra.mxu0 %v583
      %2381 = vmatprep.subr.mxu0 0.0
      %2382 = vmatpush1.msra.mxu0 %v584
      %2383 = vmatprep.subr.mxu0 0.0
      %2384 = vmatpush1.msra.mxu0 %v585
      %2385 = vmatprep.subr.mxu0 0.0
      %2386 = vmatpush1.msra.mxu0 %v586
      %2387 = vmatprep.subr.mxu0 0.0
      %2388 = vmatpush1.msra.mxu0 %v587
      %2389 = vmatprep.subr.mxu0 0.0
      %2390 = vmatpush1.msra.mxu0 %v588
      %2391 = vmatprep.subr.mxu0 0.0
      %2392 = vmatpush1.msra.mxu0 %v589
      %2393 = vmatprep.subr.mxu0 0.0
      %2394 = vmatpush1.msra.mxu0 %v590
      %2395 = vmatprep.subr.mxu0 0.0
      %2396 = vmatpush1.msra.mxu0 %v591
      %2397 = vmatprep.subr.mxu0 0.0
      %2398 = vmatpush1.msra.mxu0 %v592
      %2399 = vmatprep.subr.mxu0 0.0
      %2400 = vmatpush1.msra.mxu0 %v593
      %2401 = vmatprep.subr.mxu0 0.0
      %2402 = vmatpush1.msra.mxu0 %v594
      %2403 = vmatprep.subr.mxu0 0.0
      %2404 = vmatpush1.msra.mxu0 %v595
      %2405 = vmatprep.subr.mxu0 0.0
      %2406 = vmatpush1.msra.mxu0 %v596
      %2407 = vmatprep.subr.mxu0 0.0
      %2408 = vmatpush1.msra.mxu0 %v597
      %2409 = vmatprep.subr.mxu0 0.0
      %2410 = vmatpush1.msra.mxu0 %v598
      %2411 = vmatprep.subr.mxu0 0.0
      %2412 = vmatpush1.msra.mxu0 %v599
      %2413 = vmatprep.subr.mxu0 0.0
      %2414 = vmatpush1.msra.mxu0 %v600
      %2415 = vmatprep.subr.mxu0 0.0
      %2416 = vmatpush1.msra.mxu0 %v601
      %2417 = vmatprep.subr.mxu0 0.0
      %2418 = vmatpush1.msra.mxu0 %v602
      %2419 = vmatprep.subr.mxu0 0.0
      %2420 = vmatpush1.msra.mxu0 %v603
      %2421 = vmatprep.subr.mxu0 0.0
      %2422 = vmatpush1.msra.mxu0 %v604
      %2423 = vmatprep.subr.mxu0 0.0
      %2424 = vmatpush1.msra.mxu0 %v605
      %2425 = vmatprep.subr.mxu0 0.0
      %2426 = vmatpush1.msra.mxu0 %v606
      %2427 = vmatprep.subr.mxu0 0.0
      %2428 = vmatpush1.msra.mxu0 %v607
      %2429 = vmatprep.subr.mxu0 0.0
      %2430 = vmatpush1.msra.mxu0 %v608
      %2431 = vmatprep.subr.mxu0 0.0
      %2432 = vmatpush1.msra.mxu0 %v609
      %2433 = vmatprep.subr.mxu0 0.0
      %2434 = vmatpush1.msra.mxu0 %v610
      %2435 = vmatprep.subr.mxu0 0.0
      %2436 = vmatpush1.msra.mxu0 %v611
      %2437 = vmatprep.subr.mxu0 0.0
      %2438 = vmatpush1.msra.mxu0 %v612
      %2439 = vmatprep.mubr.f32.mxu0 %v1370
      %2440 = vmatmul.mubr.f32.gmra.mrb[0].mxu0 %v1368
      %v2441 = vpop.f32.mrb[0].mxu0
      %v2442 = vadd.f32 %v2372, %v2441
      %v2443 = vpop.f32.mrb[0].mxu0
      %2444 = vdwg.mxu0
      %2445 = vmatprep.subr.mxu0 0.0
      %2446 = vmatpush1.msra.mxu0 %v613
      %2447 = vmatprep.subr.mxu0 0.0
      %2448 = vmatpush1.msra.mxu0 %v614
      %2449 = vmatprep.subr.mxu0 0.0
      %2450 = vmatpush1.msra.mxu0 %v615
      %2451 = vmatprep.subr.mxu0 0.0
      %2452 = vmatpush1.msra.mxu0 %v616
      %2453 = vmatprep.subr.mxu0 0.0
      %2454 = vmatpush1.msra.mxu0 %v617
      %2455 = vmatprep.subr.mxu0 0.0
      %2456 = vmatpush1.msra.mxu0 %v618
      %2457 = vmatprep.subr.mxu0 0.0
      %2458 = vmatpush1.msra.mxu0 %v619
      %2459 = vmatprep.subr.mxu0 0.0
      %2460 = vmatpush1.msra.mxu0 %v620
      %2461 = vmatprep.subr.mxu0 0.0
      %2462 = vmatpush1.msra.mxu0 %v621
      %2463 = vmatprep.subr.mxu0 0.0
      %2464 = vmatpush1.msra.mxu0 %v622
      %2465 = vmatprep.subr.mxu0 0.0
      %2466 = vmatpush1.msra.mxu0 %v623
      %2467 = vmatprep.subr.mxu0 0.0
      %2468 = vmatpush1.msra.mxu0 %v624
      %2469 = vmatprep.subr.mxu0 0.0
      %2470 = vmatpush1.msra.mxu0 %v625
      %2471 = vmatprep.subr.mxu0 0.0
      %2472 = vmatpush1.msra.mxu0 %v626
      %2473 = vmatprep.subr.mxu0 0.0
      %2474 = vmatpush1.msra.mxu0 %v627
      %2475 = vmatprep.subr.mxu0 0.0
      %2476 = vmatpush1.msra.mxu0 %v628
      %2477 = vmatprep.subr.mxu0 0.0
      %2478 = vmatpush1.msra.mxu0 %v629
      %2479 = vmatprep.subr.mxu0 0.0
      %2480 = vmatpush1.msra.mxu0 %v630
      %2481 = vmatprep.subr.mxu0 0.0
      %2482 = vmatpush1.msra.mxu0 %v631
      %2483 = vmatprep.subr.mxu0 0.0
      %2484 = vmatpush1.msra.mxu0 %v632
      %2485 = vmatprep.subr.mxu0 0.0
      %2486 = vmatpush1.msra.mxu0 %v633
      %2487 = vmatprep.subr.mxu0 0.0
      %2488 = vmatpush1.msra.mxu0 %v634
      %2489 = vmatprep.subr.mxu0 0.0
      %2490 = vmatpush1.msra.mxu0 %v635
      %2491 = vmatprep.subr.mxu0 0.0
      %2492 = vmatpush1.msra.mxu0 %v636
      %2493 = vmatprep.subr.mxu0 0.0
      %2494 = vmatpush1.msra.mxu0 %v637
      %2495 = vmatprep.subr.mxu0 0.0
      %2496 = vmatpush1.msra.mxu0 %v638
      %2497 = vmatprep.subr.mxu0 0.0
      %2498 = vmatpush1.msra.mxu0 %v639
      %2499 = vmatprep.subr.mxu0 0.0
      %2500 = vmatpush1.msra.mxu0 %v640
      %2501 = vmatprep.subr.mxu0 0.0
      %2502 = vmatpush1.msra.mxu0 %v641
      %2503 = vmatprep.subr.mxu0 0.0
      %2504 = vmatpush1.msra.mxu0 %v642
      %2505 = vmatprep.subr.mxu0 0.0
      %2506 = vmatpush1.msra.mxu0 %v643
      %2507 = vmatprep.subr.mxu0 0.0
      %2508 = vmatpush1.msra.mxu0 %v644
      %2509 = vmatprep.mubr.f32.mxu0 %v1386
      %2510 = vmatmul.mubr.f32.gmra.mrb[0].mxu0 %v1378
      %v2511 = vpop.f32.mrb[0].mxu0
      %v2512 = vadd.f32 %v2442, %v2511
      %v2513 = vpop.f32.mrb[0].mxu0
      %2514 = vdwg.mxu0
      %2515 = vmatprep.subr.mxu0 0.0
      %2516 = vmatpush1.msra.mxu0 %v645
      %2517 = vmatprep.subr.mxu0 0.0
      %2518 = vmatpush1.msra.mxu0 %v646
      %2519 = vmatprep.subr.mxu0 0.0
      %2520 = vmatpush1.msra.mxu0 %v647
      %2521 = vmatprep.subr.mxu0 0.0
      %2522 = vmatpush1.msra.mxu0 %v648
      %2523 = vmatprep.subr.mxu0 0.0
      %2524 = vmatpush1.msra.mxu0 %v649
      %2525 = vmatprep.subr.mxu0 0.0
      %2526 = vmatpush1.msra.mxu0 %v650
      %2527 = vmatprep.subr.mxu0 0.0
      %2528 = vmatpush1.msra.mxu0 %v651
      %2529 = vmatprep.subr.mxu0 0.0
      %2530 = vmatpush1.msra.mxu0 %v652
      %2531 = vmatprep.subr.mxu0 0.0
      %2532 = vmatpush1.msra.mxu0 %v653
      %2533 = vmatprep.subr.mxu0 0.0
      %2534 = vmatpush1.msra.mxu0 %v654
      %2535 = vmatprep.subr.mxu0 0.0
      %2536 = vmatpush1.msra.mxu0 %v655
      %2537 = vmatprep.subr.mxu0 0.0
      %2538 = vmatpush1.msra.mxu0 %v656
      %2539 = vmatprep.subr.mxu0 0.0
      %2540 = vmatpush1.msra.mxu0 %v657
      %2541 = vmatprep.subr.mxu0 0.0
      %2542 = vmatpush1.msra.mxu0 %v658
      %2543 = vmatprep.subr.mxu0 0.0
      %2544 = vmatpush1.msra.mxu0 %v659
      %2545 = vmatprep.subr.mxu0 0.0
      %2546 = vmatpush1.msra.mxu0 %v660
      %2547 = vmatprep.subr.mxu0 0.0
      %2548 = vmatpush1.msra.mxu0 %v661
      %2549 = vmatprep.subr.mxu0 0.0
      %2550 = vmatpush1.msra.mxu0 %v662
      %2551 = vmatprep.subr.mxu0 0.0
      %2552 = vmatpush1.msra.mxu0 %v663
      %2553 = vmatprep.subr.mxu0 0.0
      %2554 = vmatpush1.msra.mxu0 %v664
      %2555 = vmatprep.subr.mxu0 0.0
      %2556 = vmatpush1.msra.mxu0 %v665
      %2557 = vmatprep.subr.mxu0 0.0
      %2558 = vmatpush1.msra.mxu0 %v666
      %2559 = vmatprep.subr.mxu0 0.0
      %2560 = vmatpush1.msra.mxu0 %v667
      %2561 = vmatprep.subr.mxu0 0.0
      %2562 = vmatpush1.msra.mxu0 %v668
      %2563 = vmatprep.subr.mxu0 0.0
      %2564 = vmatpush1.msra.mxu0 %v669
      %2565 = vmatprep.subr.mxu0 0.0
      %2566 = vmatpush1.msra.mxu0 %v670
      %2567 = vmatprep.subr.mxu0 0.0
      %2568 = vmatpush1.msra.mxu0 %v671
      %2569 = vmatprep.subr.mxu0 0.0
      %2570 = vmatpush1.msra.mxu0 %v672
      %2571 = vmatprep.subr.mxu0 0.0
      %2572 = vmatpush1.msra.mxu0 %v673
      %2573 = vmatprep.subr.mxu0 0.0
      %2574 = vmatpush1.msra.mxu0 %v674
      %2575 = vmatprep.subr.mxu0 0.0
      %2576 = vmatpush1.msra.mxu0 %v675
      %2577 = vmatprep.subr.mxu0 0.0
      %2578 = vmatpush1.msra.mxu0 %v676
      %2579 = vmatprep.mubr.f32.mxu0 %v1387
      %2580 = vmatmul.mubr.f32.gmra.mrb[0].mxu0 %v1385
      %v2581 = vpop.f32.mrb[0].mxu0
      %v2582 = vadd.f32 %v2512, %v2581
      %v2583 = vpop.f32.mrb[0].mxu0
      %2584 = vdwg.mxu0
      %2585 = vmatprep.subr.mxu0 0.0
      %2586 = vmatpush1.msra.mxu0 %v677
      %2587 = vmatprep.subr.mxu0 0.0
      %2588 = vmatpush1.msra.mxu0 %v678
      %2589 = vmatprep.subr.mxu0 0.0
      %2590 = vmatpush1.msra.mxu0 %v679
      %2591 = vmatprep.subr.mxu0 0.0
      %2592 = vmatpush1.msra.mxu0 %v680
      %2593 = vmatprep.subr.mxu0 0.0
      %2594 = vmatpush1.msra.mxu0 %v681
      %2595 = vmatprep.subr.mxu0 0.0
      %2596 = vmatpush1.msra.mxu0 %v682
      %2597 = vmatprep.subr.mxu0 0.0
      %2598 = vmatpush1.msra.mxu0 %v683
      %2599 = vmatprep.subr.mxu0 0.0
      %2600 = vmatpush1.msra.mxu0 %v684
      %2601 = vmatprep.subr.mxu0 0.0
      %2602 = vmatpush1.msra.mxu0 %v685
      %2603 = vmatprep.subr.mxu0 0.0
      %2604 = vmatpush1.msra.mxu0 %v686
      %2605 = vmatprep.subr.mxu0 0.0
      %2606 = vmatpush1.msra.mxu0 %v687
      %2607 = vmatprep.subr.mxu0 0.0
      %2608 = vmatpush1.msra.mxu0 %v688
      %2609 = vmatprep.subr.mxu0 0.0
      %2610 = vmatpush1.msra.mxu0 %v689
      %2611 = vmatprep.subr.mxu0 0.0
      %2612 = vmatpush1.msra.mxu0 %v690
      %2613 = vmatprep.subr.mxu0 0.0
      %2614 = vmatpush1.msra.mxu0 %v691
      %2615 = vmatprep.subr.mxu0 0.0
      %2616 = vmatpush1.msra.mxu0 %v692
      %2617 = vmatprep.subr.mxu0 0.0
      %2618 = vmatpush1.msra.mxu0 %v693
      %2619 = vmatprep.subr.mxu0 0.0
      %2620 = vmatpush1.msra.mxu0 %v694
      %2621 = vmatprep.subr.mxu0 0.0
      %2622 = vmatpush1.msra.mxu0 %v695
      %2623 = vmatprep.subr.mxu0 0.0
      %2624 = vmatpush1.msra.mxu0 %v696
      %2625 = vmatprep.subr.mxu0 0.0
      %2626 = vmatpush1.msra.mxu0 %v697
      %2627 = vmatprep.subr.mxu0 0.0
      %2628 = vmatpush1.msra.mxu0 %v698
      %2629 = vmatprep.subr.mxu0 0.0
      %2630 = vmatpush1.msra.mxu0 %v699
      %2631 = vmatprep.subr.mxu0 0.0
      %2632 = vmatpush1.msra.mxu0 %v700
      %2633 = vmatprep.subr.mxu0 0.0
      %2634 = vmatpush1.msra.mxu0 %v701
      %2635 = vmatprep.subr.mxu0 0.0
      %2636 = vmatpush1.msra.mxu0 %v702
      %2637 = vmatprep.subr.mxu0 0.0
      %2638 = vmatpush1.msra.mxu0 %v703
      %2639 = vmatprep.subr.mxu0 0.0
      %2640 = vmatpush1.msra.mxu0 %v704
      %2641 = vmatprep.subr.mxu0 0.0
      %2642 = vmatpush1.msra.mxu0 %v705
      %2643 = vmatprep.subr.mxu0 0.0
      %2644 = vmatpush1.msra.mxu0 %v706
      %2645 = vmatprep.subr.mxu0 0.0
      %2646 = vmatpush1.msra.mxu0 %v707
      %2647 = vmatprep.subr.mxu0 0.0
      %2648 = vmatpush1.msra.mxu0 %v708
      %2649 = vmatprep.mubr.f32.mxu0 %v1403
      %2650 = vmatmul.mubr.f32.gmra.mrb[0].mxu0 %v1395
      %v2651 = vpop.f32.mrb[0].mxu0
      %v2652 = vadd.f32 %v2582, %v2651
      %v2653 = vpop.f32.mrb[0].mxu0
      %2654 = vdwg.mxu0
      %2655 = vmatprep.subr.mxu0 0.0
      %2656 = vmatpush1.msra.mxu0 %v709
      %2657 = vmatprep.subr.mxu0 0.0
      %2658 = vmatpush1.msra.mxu0 %v710
      %2659 = vmatprep.subr.mxu0 0.0
      %2660 = vmatpush1.msra.mxu0 %v711
      %2661 = vmatprep.subr.mxu0 0.0
      %2662 = vmatpush1.msra.mxu0 %v712
      %2663 = vmatprep.subr.mxu0 0.0
      %2664 = vmatpush1.msra.mxu0 %v713
      %2665 = vmatprep.subr.mxu0 0.0
      %2666 = vmatpush1.msra.mxu0 %v714
      %2667 = vmatprep.subr.mxu0 0.0
      %2668 = vmatpush1.msra.mxu0 %v715
      %2669 = vmatprep.subr.mxu0 0.0
      %2670 = vmatpush1.msra.mxu0 %v716
      %2671 = vmatprep.subr.mxu0 0.0
      %2672 = vmatpush1.msra.mxu0 %v717
      %2673 = vmatprep.subr.mxu0 0.0
      %2674 = vmatpush1.msra.mxu0 %v718
      %2675 = vmatprep.subr.mxu0 0.0
      %2676 = vmatpush1.msra.mxu0 %v719
      %2677 = vmatprep.subr.mxu0 0.0
      %2678 = vmatpush1.msra.mxu0 %v720
      %2679 = vmatprep.subr.mxu0 0.0
      %2680 = vmatpush1.msra.mxu0 %v721
      %2681 = vmatprep.subr.mxu0 0.0
      %2682 = vmatpush1.msra.mxu0 %v722
      %2683 = vmatprep.subr.mxu0 0.0
      %2684 = vmatpush1.msra.mxu0 %v723
      %2685 = vmatprep.subr.mxu0 0.0
      %2686 = vmatpush1.msra.mxu0 %v724
      %2687 = vmatprep.subr.mxu0 0.0
      %2688 = vmatpush1.msra.mxu0 %v725
      %2689 = vmatprep.subr.mxu0 0.0
      %2690 = vmatpush1.msra.mxu0 %v726
      %2691 = vmatprep.subr.mxu0 0.0
      %2692 = vmatpush1.msra.mxu0 %v727
      %2693 = vmatprep.subr.mxu0 0.0
      %2694 = vmatpush1.msra.mxu0 %v728
      %2695 = vmatprep.subr.mxu0 0.0
      %2696 = vmatpush1.msra.mxu0 %v729
      %2697 = vmatprep.subr.mxu0 0.0
      %2698 = vmatpush1.msra.mxu0 %v730
      %2699 = vmatprep.subr.mxu0 0.0
      %2700 = vmatpush1.msra.mxu0 %v731
      %2701 = vmatprep.subr.mxu0 0.0
      %2702 = vmatpush1.msra.mxu0 %v732
      %2703 = vmatprep.subr.mxu0 0.0
      %2704 = vmatpush1.msra.mxu0 %v733
      %2705 = vmatprep.subr.mxu0 0.0
      %2706 = vmatpush1.msra.mxu0 %v734
      %2707 = vmatprep.subr.mxu0 0.0
      %2708 = vmatpush1.msra.mxu0 %v735
      %2709 = vmatprep.subr.mxu0 0.0
      %2710 = vmatpush1.msra.mxu0 %v736
      %2711 = vmatprep.subr.mxu0 0.0
      %2712 = vmatpush1.msra.mxu0 %v737
      %2713 = vmatprep.subr.mxu0 0.0
      %2714 = vmatpush1.msra.mxu0 %v738
      %2715 = vmatprep.subr.mxu0 0.0
      %2716 = vmatpush1.msra.mxu0 %v739
      %2717 = vmatprep.subr.mxu0 0.0
      %2718 = vmatpush1.msra.mxu0 %v740
      %2719 = vmatprep.mubr.f32.mxu0 %v1404
      %2720 = vmatmul.mubr.f32.gmra.mrb[0].mxu0 %v1402
      %v2721 = vpop.f32.mrb[0].mxu0
      %v2722 = vadd.f32 %v2652, %v2721
      %v2723 = vpop.f32.mrb[0].mxu0
      %2724 = vdwg.mxu0
      %2725 = vmatprep.subr.mxu0 0.0
      %2726 = vmatpush1.msra.mxu0 %v741
      %2727 = vmatprep.subr.mxu0 0.0
      %2728 = vmatpush1.msra.mxu0 %v742
      %2729 = vmatprep.subr.mxu0 0.0
      %2730 = vmatpush1.msra.mxu0 %v743
      %2731 = vmatprep.subr.mxu0 0.0
      %2732 = vmatpush1.msra.mxu0 %v744
      %2733 = vmatprep.subr.mxu0 0.0
      %2734 = vmatpush1.msra.mxu0 %v745
      %2735 = vmatprep.subr.mxu0 0.0
      %2736 = vmatpush1.msra.mxu0 %v746
      %2737 = vmatprep.subr.mxu0 0.0
      %2738 = vmatpush1.msra.mxu0 %v747
      %2739 = vmatprep.subr.mxu0 0.0
      %2740 = vmatpush1.msra.mxu0 %v748
      %2741 = vmatprep.subr.mxu0 0.0
      %2742 = vmatpush1.msra.mxu0 %v749
      %2743 = vmatprep.subr.mxu0 0.0
      %2744 = vmatpush1.msra.mxu0 %v750
      %2745 = vmatprep.subr.mxu0 0.0
      %2746 = vmatpush1.msra.mxu0 %v751
      %2747 = vmatprep.subr.mxu0 0.0
      %2748 = vmatpush1.msra.mxu0 %v752
      %2749 = vmatprep.subr.mxu0 0.0
      %2750 = vmatpush1.msra.mxu0 %v753
      %2751 = vmatprep.subr.mxu0 0.0
      %2752 = vmatpush1.msra.mxu0 %v754
      %2753 = vmatprep.subr.mxu0 0.0
      %2754 = vmatpush1.msra.mxu0 %v755
      %2755 = vmatprep.subr.mxu0 0.0
      %2756 = vmatpush1.msra.mxu0 %v756
      %2757 = vmatprep.subr.mxu0 0.0
      %2758 = vmatpush1.msra.mxu0 %v757
      %2759 = vmatprep.subr.mxu0 0.0
      %2760 = vmatpush1.msra.mxu0 %v758
      %2761 = vmatprep.subr.mxu0 0.0
      %2762 = vmatpush1.msra.mxu0 %v759
      %2763 = vmatprep.subr.mxu0 0.0
      %2764 = vmatpush1.msra.mxu0 %v760
      %2765 = vmatprep.subr.mxu0 0.0
      %2766 = vmatpush1.msra.mxu0 %v761
      %2767 = vmatprep.subr.mxu0 0.0
      %2768 = vmatpush1.msra.mxu0 %v762
      %2769 = vmatprep.subr.mxu0 0.0
      %2770 = vmatpush1.msra.mxu0 %v763
      %2771 = vmatprep.subr.mxu0 0.0
      %2772 = vmatpush1.msra.mxu0 %v764
      %2773 = vmatprep.subr.mxu0 0.0
      %2774 = vmatpush1.msra.mxu0 %v765
      %2775 = vmatprep.subr.mxu0 0.0
      %2776 = vmatpush1.msra.mxu0 %v766
      %2777 = vmatprep.subr.mxu0 0.0
      %2778 = vmatpush1.msra.mxu0 %v767
      %2779 = vmatprep.subr.mxu0 0.0
      %2780 = vmatpush1.msra.mxu0 %v768
      %2781 = vmatprep.subr.mxu0 0.0
      %2782 = vmatpush1.msra.mxu0 %v769
      %2783 = vmatprep.subr.mxu0 0.0
      %2784 = vmatpush1.msra.mxu0 %v770
      %2785 = vmatprep.subr.mxu0 0.0
      %2786 = vmatpush1.msra.mxu0 %v771
      %2787 = vmatprep.subr.mxu0 0.0
      %2788 = vmatpush1.msra.mxu0 %v772
      %2789 = vmatprep.mubr.f32.mxu0 %v1420
      %2790 = vmatmul.mubr.f32.gmra.mrb[0].mxu0 %v1412
      %v2791 = vpop.f32.mrb[0].mxu0
      %v2792 = vadd.f32 %v2722, %v2791
      %v2793 = vpop.f32.mrb[0].mxu0
      %2794 = vdwg.mxu0
      %2795 = vmatprep.subr.mxu0 0.0
      %2796 = vmatpush1.msra.mxu0 %v773
      %2797 = vmatprep.subr.mxu0 0.0
      %2798 = vmatpush1.msra.mxu0 %v774
      %2799 = vmatprep.subr.mxu0 0.0
      %2800 = vmatpush1.msra.mxu0 %v775
      %2801 = vmatprep.subr.mxu0 0.0
      %2802 = vmatpush1.msra.mxu0 %v776
      %2803 = vmatprep.subr.mxu0 0.0
      %2804 = vmatpush1.msra.mxu0 %v777
      %2805 = vmatprep.subr.mxu0 0.0
      %2806 = vmatpush1.msra.mxu0 %v778
      %2807 = vmatprep.subr.mxu0 0.0
      %2808 = vmatpush1.msra.mxu0 %v779
      %2809 = vmatprep.subr.mxu0 0.0
      %2810 = vmatpush1.msra.mxu0 %v780
      %2811 = vmatprep.subr.mxu0 0.0
      %2812 = vmatpush1.msra.mxu0 %v781
      %2813 = vmatprep.subr.mxu0 0.0
      %2814 = vmatpush1.msra.mxu0 %v782
      %2815 = vmatprep.subr.mxu0 0.0
      %2816 = vmatpush1.msra.mxu0 %v783
      %2817 = vmatprep.subr.mxu0 0.0
      %2818 = vmatpush1.msra.mxu0 %v784
      %2819 = vmatprep.subr.mxu0 0.0
      %2820 = vmatpush1.msra.mxu0 %v785
      %2821 = vmatprep.subr.mxu0 0.0
      %2822 = vmatpush1.msra.mxu0 %v786
      %2823 = vmatprep.subr.mxu0 0.0
      %2824 = vmatpush1.msra.mxu0 %v787
      %2825 = vmatprep.subr.mxu0 0.0
      %2826 = vmatpush1.msra.mxu0 %v788
      %2827 = vmatprep.subr.mxu0 0.0
      %2828 = vmatpush1.msra.mxu0 %v789
      %2829 = vmatprep.subr.mxu0 0.0
      %2830 = vmatpush1.msra.mxu0 %v790
      %2831 = vmatprep.subr.mxu0 0.0
      %2832 = vmatpush1.msra.mxu0 %v791
      %2833 = vmatprep.subr.mxu0 0.0
      %2834 = vmatpush1.msra.mxu0 %v792
      %2835 = vmatprep.subr.mxu0 0.0
      %2836 = vmatpush1.msra.mxu0 %v793
      %2837 = vmatprep.subr.mxu0 0.0
      %2838 = vmatpush1.msra.mxu0 %v794
      %2839 = vmatprep.subr.mxu0 0.0
      %2840 = vmatpush1.msra.mxu0 %v795
      %2841 = vmatprep.subr.mxu0 0.0
      %2842 = vmatpush1.msra.mxu0 %v796
      %2843 = vmatprep.subr.mxu0 0.0
      %2844 = vmatpush1.msra.mxu0 %v797
      %2845 = vmatprep.subr.mxu0 0.0
      %2846 = vmatpush1.msra.mxu0 %v798
      %2847 = vmatprep.subr.mxu0 0.0
      %2848 = vmatpush1.msra.mxu0 %v799
      %2849 = vmatprep.subr.mxu0 0.0
      %2850 = vmatpush1.msra.mxu0 %v800
      %2851 = vmatprep.subr.mxu0 0.0
      %2852 = vmatpush1.msra.mxu0 %v801
      %2853 = vmatprep.subr.mxu0 0.0
      %2854 = vmatpush1.msra.mxu0 %v802
      %2855 = vmatprep.subr.mxu0 0.0
      %2856 = vmatpush1.msra.mxu0 %v803
      %2857 = vmatprep.subr.mxu0 0.0
      %2858 = vmatpush1.msra.mxu0 %v804
      %2859 = vmatprep.mubr.f32.mxu0 %v1421
      %2860 = vmatmul.mubr.f32.gmra.mrb[0].mxu0 %v1419
      %v2861 = vpop.f32.mrb[0].mxu0
      %v2862 = vadd.f32 %v2792, %v2861
      %v2863 = vpop.f32.mrb[0].mxu0
      %2864 = vdwg.mxu0
      %2865 = vmatprep.subr.mxu0 0.0
      %2866 = vmatpush1.msra.mxu0 %v805
      %2867 = vmatprep.subr.mxu0 0.0
      %2868 = vmatpush1.msra.mxu0 %v806
      %2869 = vmatprep.subr.mxu0 0.0
      %2870 = vmatpush1.msra.mxu0 %v807
      %2871 = vmatprep.subr.mxu0 0.0
      %2872 = vmatpush1.msra.mxu0 %v808
      %2873 = vmatprep.subr.mxu0 0.0
      %2874 = vmatpush1.msra.mxu0 %v809
      %2875 = vmatprep.subr.mxu0 0.0
      %2876 = vmatpush1.msra.mxu0 %v810
      %2877 = vmatprep.subr.mxu0 0.0
      %2878 = vmatpush1.msra.mxu0 %v811
      %2879 = vmatprep.subr.mxu0 0.0
      %2880 = vmatpush1.msra.mxu0 %v812
      %2881 = vmatprep.subr.mxu0 0.0
      %2882 = vmatpush1.msra.mxu0 %v813
      %2883 = vmatprep.subr.mxu0 0.0
      %2884 = vmatpush1.msra.mxu0 %v814
      %2885 = vmatprep.subr.mxu0 0.0
      %2886 = vmatpush1.msra.mxu0 %v815
      %2887 = vmatprep.subr.mxu0 0.0
      %2888 = vmatpush1.msra.mxu0 %v816
      %2889 = vmatprep.subr.mxu0 0.0
      %2890 = vmatpush1.msra.mxu0 %v817
      %2891 = vmatprep.subr.mxu0 0.0
      %2892 = vmatpush1.msra.mxu0 %v818
      %2893 = vmatprep.subr.mxu0 0.0
      %2894 = vmatpush1.msra.mxu0 %v819
      %2895 = vmatprep.subr.mxu0 0.0
      %2896 = vmatpush1.msra.mxu0 %v820
      %2897 = vmatprep.subr.mxu0 0.0
      %2898 = vmatpush1.msra.mxu0 %v821
      %2899 = vmatprep.subr.mxu0 0.0
      %2900 = vmatpush1.msra.mxu0 %v822
      %2901 = vmatprep.subr.mxu0 0.0
      %2902 = vmatpush1.msra.mxu0 %v823
      %2903 = vmatprep.subr.mxu0 0.0
      %2904 = vmatpush1.msra.mxu0 %v824
      %2905 = vmatprep.subr.mxu0 0.0
      %2906 = vmatpush1.msra.mxu0 %v825
      %2907 = vmatprep.subr.mxu0 0.0
      %2908 = vmatpush1.msra.mxu0 %v826
      %2909 = vmatprep.subr.mxu0 0.0
      %2910 = vmatpush1.msra.mxu0 %v827
      %2911 = vmatprep.subr.mxu0 0.0
      %2912 = vmatpush1.msra.mxu0 %v828
      %2913 = vmatprep.subr.mxu0 0.0
      %2914 = vmatpush1.msra.mxu0 %v829
      %2915 = vmatprep.subr.mxu0 0.0
      %2916 = vmatpush1.msra.mxu0 %v830
      %2917 = vmatprep.subr.mxu0 0.0
      %2918 = vmatpush1.msra.mxu0 %v831
      %2919 = vmatprep.subr.mxu0 0.0
      %2920 = vmatpush1.msra.mxu0 %v832
      %2921 = vmatprep.subr.mxu0 0.0
      %2922 = vmatpush1.msra.mxu0 %v833
      %2923 = vmatprep.subr.mxu0 0.0
      %2924 = vmatpush1.msra.mxu0 %v834
      %2925 = vmatprep.subr.mxu0 0.0
      %2926 = vmatpush1.msra.mxu0 %v835
      %2927 = vmatprep.subr.mxu0 0.0
      %2928 = vmatpush1.msra.mxu0 %v836
      %2929 = vmatprep.mubr.f32.mxu0 %v1437
      %2930 = vmatmul.mubr.f32.gmra.mrb[0].mxu0 %v1429
      %v2931 = vpop.f32.mrb[0].mxu0
      %v2932 = vadd.f32 %v2862, %v2931
      %v2933 = vpop.f32.mrb[0].mxu0
      %2934 = vdwg.mxu0
      %2935 = vmatprep.subr.mxu0 0.0
      %2936 = vmatpush1.msra.mxu0 %v837
      %2937 = vmatprep.subr.mxu0 0.0
      %2938 = vmatpush1.msra.mxu0 %v838
      %2939 = vmatprep.subr.mxu0 0.0
      %2940 = vmatpush1.msra.mxu0 %v839
      %2941 = vmatprep.subr.mxu0 0.0
      %2942 = vmatpush1.msra.mxu0 %v840
      %2943 = vmatprep.subr.mxu0 0.0
      %2944 = vmatpush1.msra.mxu0 %v841
      %2945 = vmatprep.subr.mxu0 0.0
      %2946 = vmatpush1.msra.mxu0 %v842
      %2947 = vmatprep.subr.mxu0 0.0
      %2948 = vmatpush1.msra.mxu0 %v843
      %2949 = vmatprep.subr.mxu0 0.0
      %2950 = vmatpush1.msra.mxu0 %v844
      %2951 = vmatprep.subr.mxu0 0.0
      %2952 = vmatpush1.msra.mxu0 %v845
      %2953 = vmatprep.subr.mxu0 0.0
      %2954 = vmatpush1.msra.mxu0 %v846
      %2955 = vmatprep.subr.mxu0 0.0
      %2956 = vmatpush1.msra.mxu0 %v847
      %2957 = vmatprep.subr.mxu0 0.0
      %2958 = vmatpush1.msra.mxu0 %v848
      %2959 = vmatprep.subr.mxu0 0.0
      %2960 = vmatpush1.msra.mxu0 %v849
      %2961 = vmatprep.subr.mxu0 0.0
      %2962 = vmatpush1.msra.mxu0 %v850
      %2963 = vmatprep.subr.mxu0 0.0
      %2964 = vmatpush1.msra.mxu0 %v851
      %2965 = vmatprep.subr.mxu0 0.0
      %2966 = vmatpush1.msra.mxu0 %v852
      %2967 = vmatprep.subr.mxu0 0.0
      %2968 = vmatpush1.msra.mxu0 %v853
      %2969 = vmatprep.subr.mxu0 0.0
      %2970 = vmatpush1.msra.mxu0 %v854
      %2971 = vmatprep.subr.mxu0 0.0
      %2972 = vmatpush1.msra.mxu0 %v855
      %2973 = vmatprep.subr.mxu0 0.0
      %2974 = vmatpush1.msra.mxu0 %v856
      %2975 = vmatprep.subr.mxu0 0.0
      %2976 = vmatpush1.msra.mxu0 %v857
      %2977 = vmatprep.subr.mxu0 0.0
      %2978 = vmatpush1.msra.mxu0 %v858
      %2979 = vmatprep.subr.mxu0 0.0
      %2980 = vmatpush1.msra.mxu0 %v859
      %2981 = vmatprep.subr.mxu0 0.0
      %2982 = vmatpush1.msra.mxu0 %v860
      %2983 = vmatprep.subr.mxu0 0.0
      %2984 = vmatpush1.msra.mxu0 %v861
      %2985 = vmatprep.subr.mxu0 0.0
      %2986 = vmatpush1.msra.mxu0 %v862
      %2987 = vmatprep.subr.mxu0 0.0
      %2988 = vmatpush1.msra.mxu0 %v863
      %2989 = vmatprep.subr.mxu0 0.0
      %2990 = vmatpush1.msra.mxu0 %v864
      %2991 = vmatprep.subr.mxu0 0.0
      %2992 = vmatpush1.msra.mxu0 %v865
      %2993 = vmatprep.subr.mxu0 0.0
      %2994 = vmatpush1.msra.mxu0 %v866
      %2995 = vmatprep.subr.mxu0 0.0
      %2996 = vmatpush1.msra.mxu0 %v867
      %2997 = vmatprep.subr.mxu0 0.0
      %2998 = vmatpush1.msra.mxu0 %v868
      %2999 = vmatprep.mubr.f32.mxu0 %v1438
      %3000 = vmatmul.mubr.f32.gmra.mrb[0].mxu0 %v1436
      %v3001 = vpop.f32.mrb[0].mxu0
      %v3002 = vadd.f32 %v2932, %v3001
      %v3003 = vpop.f32.mrb[0].mxu0
      %3004 = vdwg.mxu0
      %3005 = vmatprep.subr.mxu0 0.0
      %3006 = vmatpush1.msra.mxu0 %v869
      %3007 = vmatprep.subr.mxu0 0.0
      %3008 = vmatpush1.msra.mxu0 %v870
      %3009 = vmatprep.subr.mxu0 0.0
      %3010 = vmatpush1.msra.mxu0 %v871
      %3011 = vmatprep.subr.mxu0 0.0
      %3012 = vmatpush1.msra.mxu0 %v872
      %3013 = vmatprep.subr.mxu0 0.0
      %3014 = vmatpush1.msra.mxu0 %v873
      %3015 = vmatprep.subr.mxu0 0.0
      %3016 = vmatpush1.msra.mxu0 %v874
      %3017 = vmatprep.subr.mxu0 0.0
      %3018 = vmatpush1.msra.mxu0 %v875
      %3019 = vmatprep.subr.mxu0 0.0
      %3020 = vmatpush1.msra.mxu0 %v876
      %3021 = vmatprep.subr.mxu0 0.0
      %3022 = vmatpush1.msra.mxu0 %v877
      %3023 = vmatprep.subr.mxu0 0.0
      %3024 = vmatpush1.msra.mxu0 %v878
      %3025 = vmatprep.subr.mxu0 0.0
      %3026 = vmatpush1.msra.mxu0 %v879
      %3027 = vmatprep.subr.mxu0 0.0
      %3028 = vmatpush1.msra.mxu0 %v880
      %3029 = vmatprep.subr.mxu0 0.0
      %3030 = vmatpush1.msra.mxu0 %v881
      %3031 = vmatprep.subr.mxu0 0.0
      %3032 = vmatpush1.msra.mxu0 %v882
      %3033 = vmatprep.subr.mxu0 0.0
      %3034 = vmatpush1.msra.mxu0 %v883
      %3035 = vmatprep.subr.mxu0 0.0
      %3036 = vmatpush1.msra.mxu0 %v884
      %3037 = vmatprep.subr.mxu0 0.0
      %3038 = vmatpush1.msra.mxu0 %v885
      %3039 = vmatprep.subr.mxu0 0.0
      %3040 = vmatpush1.msra.mxu0 %v886
      %3041 = vmatprep.subr.mxu0 0.0
      %3042 = vmatpush1.msra.mxu0 %v887
      %3043 = vmatprep.subr.mxu0 0.0
      %3044 = vmatpush1.msra.mxu0 %v888
      %3045 = vmatprep.subr.mxu0 0.0
      %3046 = vmatpush1.msra.mxu0 %v889
      %3047 = vmatprep.subr.mxu0 0.0
      %3048 = vmatpush1.msra.mxu0 %v890
      %3049 = vmatprep.subr.mxu0 0.0
      %3050 = vmatpush1.msra.mxu0 %v891
      %3051 = vmatprep.subr.mxu0 0.0
      %3052 = vmatpush1.msra.mxu0 %v892
      %3053 = vmatprep.subr.mxu0 0.0
      %3054 = vmatpush1.msra.mxu0 %v893
      %3055 = vmatprep.subr.mxu0 0.0
      %3056 = vmatpush1.msra.mxu0 %v894
      %3057 = vmatprep.subr.mxu0 0.0
      %3058 = vmatpush1.msra.mxu0 %v895
      %3059 = vmatprep.subr.mxu0 0.0
      %3060 = vmatpush1.msra.mxu0 %v896
      %3061 = vmatprep.subr.mxu0 0.0
      %3062 = vmatpush1.msra.mxu0 %v897
      %3063 = vmatprep.subr.mxu0 0.0
      %3064 = vmatpush1.msra.mxu0 %v898
      %3065 = vmatprep.subr.mxu0 0.0
      %3066 = vmatpush1.msra.mxu0 %v899
      %3067 = vmatprep.subr.mxu0 0.0
      %3068 = vmatpush1.msra.mxu0 %v900
      %3069 = vmatprep.mubr.f32.mxu0 %v1454
      %3070 = vmatmul.mubr.f32.gmra.mrb[0].mxu0 %v1446
      %v3071 = vpop.f32.mrb[0].mxu0
      %v3072 = vadd.f32 %v3002, %v3071
      %v3073 = vpop.f32.mrb[0].mxu0
      %3074 = vdwg.mxu0
      %3075 = vmatprep.subr.mxu0 0.0
      %3076 = vmatpush1.msra.mxu0 %v901
      %3077 = vmatprep.subr.mxu0 0.0
      %3078 = vmatpush1.msra.mxu0 %v902
      %3079 = vmatprep.subr.mxu0 0.0
      %3080 = vmatpush1.msra.mxu0 %v903
      %3081 = vmatprep.subr.mxu0 0.0
      %3082 = vmatpush1.msra.mxu0 %v904
      %3083 = vmatprep.subr.mxu0 0.0
      %3084 = vmatpush1.msra.mxu0 %v905
      %3085 = vmatprep.subr.mxu0 0.0
      %3086 = vmatpush1.msra.mxu0 %v906
      %3087 = vmatprep.subr.mxu0 0.0
      %3088 = vmatpush1.msra.mxu0 %v907
      %3089 = vmatprep.subr.mxu0 0.0
      %3090 = vmatpush1.msra.mxu0 %v908
      %3091 = vmatprep.subr.mxu0 0.0
      %3092 = vmatpush1.msra.mxu0 %v909
      %3093 = vmatprep.subr.mxu0 0.0
      %3094 = vmatpush1.msra.mxu0 %v910
      %3095 = vmatprep.subr.mxu0 0.0
      %3096 = vmatpush1.msra.mxu0 %v911
      %3097 = vmatprep.subr.mxu0 0.0
      %3098 = vmatpush1.msra.mxu0 %v912
      %3099 = vmatprep.subr.mxu0 0.0
      %3100 = vmatpush1.msra.mxu0 %v913
      %3101 = vmatprep.subr.mxu0 0.0
      %3102 = vmatpush1.msra.mxu0 %v914
      %3103 = vmatprep.subr.mxu0 0.0
      %3104 = vmatpush1.msra.mxu0 %v915
      %3105 = vmatprep.subr.mxu0 0.0
      %3106 = vmatpush1.msra.mxu0 %v916
      %3107 = vmatprep.subr.mxu0 0.0
      %3108 = vmatpush1.msra.mxu0 %v917
      %3109 = vmatprep.subr.mxu0 0.0
      %3110 = vmatpush1.msra.mxu0 %v918
      %3111 = vmatprep.subr.mxu0 0.0
      %3112 = vmatpush1.msra.mxu0 %v919
      %3113 = vmatprep.subr.mxu0 0.0
      %3114 = vmatpush1.msra.mxu0 %v920
      %3115 = vmatprep.subr.mxu0 0.0
      %3116 = vmatpush1.msra.mxu0 %v921
      %3117 = vmatprep.subr.mxu0 0.0
      %3118 = vmatpush1.msra.mxu0 %v922
      %3119 = vmatprep.subr.mxu0 0.0
      %3120 = vmatpush1.msra.mxu0 %v923
      %3121 = vmatprep.subr.mxu0 0.0
      %3122 = vmatpush1.msra.mxu0 %v924
      %3123 = vmatprep.subr.mxu0 0.0
      %3124 = vmatpush1.msra.mxu0 %v925
      %3125 = vmatprep.subr.mxu0 0.0
      %3126 = vmatpush1.msra.mxu0 %v926
      %3127 = vmatprep.subr.mxu0 0.0
      %3128 = vmatpush1.msra.mxu0 %v927
      %3129 = vmatprep.subr.mxu0 0.0
      %3130 = vmatpush1.msra.mxu0 %v928
      %3131 = vmatprep.subr.mxu0 0.0
      %3132 = vmatpush1.msra.mxu0 %v929
      %3133 = vmatprep.subr.mxu0 0.0
      %3134 = vmatpush1.msra.mxu0 %v930
      %3135 = vmatprep.subr.mxu0 0.0
      %3136 = vmatpush1.msra.mxu0 %v931
      %3137 = vmatprep.subr.mxu0 0.0
      %3138 = vmatpush1.msra.mxu0 %v932
      %3139 = vmatprep.mubr.f32.mxu0 %v1455
      %3140 = vmatmul.mubr.f32.gmra.mrb[0].mxu0 %v1453
      %v3141 = vpop.f32.mrb[0].mxu0
      %v3142 = vadd.f32 %v3072, %v3141
      %v3143 = vpop.f32.mrb[0].mxu0
      %3144 = vdwg.mxu0
      %3145 = vmatprep.subr.mxu0 0.0
      %3146 = vmatpush1.msra.mxu0 %v933
      %3147 = vmatprep.subr.mxu0 0.0
      %3148 = vmatpush1.msra.mxu0 %v934
      %3149 = vmatprep.subr.mxu0 0.0
      %3150 = vmatpush1.msra.mxu0 %v935
      %3151 = vmatprep.subr.mxu0 0.0
      %3152 = vmatpush1.msra.mxu0 %v936
      %3153 = vmatprep.subr.mxu0 0.0
      %3154 = vmatpush1.msra.mxu0 %v937
      %3155 = vmatprep.subr.mxu0 0.0
      %3156 = vmatpush1.msra.mxu0 %v938
      %3157 = vmatprep.subr.mxu0 0.0
      %3158 = vmatpush1.msra.mxu0 %v939
      %3159 = vmatprep.subr.mxu0 0.0
      %3160 = vmatpush1.msra.mxu0 %v940
      %3161 = vmatprep.subr.mxu0 0.0
      %3162 = vmatpush1.msra.mxu0 %v941
      %3163 = vmatprep.subr.mxu0 0.0
      %3164 = vmatpush1.msra.mxu0 %v942
      %3165 = vmatprep.subr.mxu0 0.0
      %3166 = vmatpush1.msra.mxu0 %v943
      %3167 = vmatprep.subr.mxu0 0.0
      %3168 = vmatpush1.msra.mxu0 %v944
      %3169 = vmatprep.subr.mxu0 0.0
      %3170 = vmatpush1.msra.mxu0 %v945
      %3171 = vmatprep.subr.mxu0 0.0
      %3172 = vmatpush1.msra.mxu0 %v946
      %3173 = vmatprep.subr.mxu0 0.0
      %3174 = vmatpush1.msra.mxu0 %v947
      %3175 = vmatprep.subr.mxu0 0.0
      %3176 = vmatpush1.msra.mxu0 %v948
      %3177 = vmatprep.subr.mxu0 0.0
      %3178 = vmatpush1.msra.mxu0 %v949
      %3179 = vmatprep.subr.mxu0 0.0
      %3180 = vmatpush1.msra.mxu0 %v950
      %3181 = vmatprep.subr.mxu0 0.0
      %3182 = vmatpush1.msra.mxu0 %v951
      %3183 = vmatprep.subr.mxu0 0.0
      %3184 = vmatpush1.msra.mxu0 %v952
      %3185 = vmatprep.subr.mxu0 0.0
      %3186 = vmatpush1.msra.mxu0 %v953
      %3187 = vmatprep.subr.mxu0 0.0
      %3188 = vmatpush1.msra.mxu0 %v954
      %3189 = vmatprep.subr.mxu0 0.0
      %3190 = vmatpush1.msra.mxu0 %v955
      %3191 = vmatprep.subr.mxu0 0.0
      %3192 = vmatpush1.msra.mxu0 %v956
      %3193 = vmatprep.subr.mxu0 0.0
      %3194 = vmatpush1.msra.mxu0 %v957
      %3195 = vmatprep.subr.mxu0 0.0
      %3196 = vmatpush1.msra.mxu0 %v958
      %3197 = vmatprep.subr.mxu0 0.0
      %3198 = vmatpush1.msra.mxu0 %v959
      %3199 = vmatprep.subr.mxu0 0.0
      %3200 = vmatpush1.msra.mxu0 %v960
      %3201 = vmatprep.subr.mxu0 0.0
      %3202 = vmatpush1.msra.mxu0 %v961
      %3203 = vmatprep.subr.mxu0 0.0
      %3204 = vmatpush1.msra.mxu0 %v962
      %3205 = vmatprep.subr.mxu0 0.0
      %3206 = vmatpush1.msra.mxu0 %v963
      %3207 = vmatprep.subr.mxu0 0.0
      %3208 = vmatpush1.msra.mxu0 %v964
      %3209 = vmatprep.mubr.f32.mxu0 %v1471
      %3210 = vmatmul.mubr.f32.gmra.mrb[0].mxu0 %v1463
      %v3211 = vpop.f32.mrb[0].mxu0
      %v3212 = vadd.f32 %v3142, %v3211
      %v3213 = vpop.f32.mrb[0].mxu0
      %3214 = vdwg.mxu0
      %3215 = vmatprep.subr.mxu0 0.0
      %3216 = vmatpush1.msra.mxu0 %v965
      %3217 = vmatprep.subr.mxu0 0.0
      %3218 = vmatpush1.msra.mxu0 %v966
      %3219 = vmatprep.subr.mxu0 0.0
      %3220 = vmatpush1.msra.mxu0 %v967
      %3221 = vmatprep.subr.mxu0 0.0
      %3222 = vmatpush1.msra.mxu0 %v968
      %3223 = vmatprep.subr.mxu0 0.0
      %3224 = vmatpush1.msra.mxu0 %v969
      %3225 = vmatprep.subr.mxu0 0.0
      %3226 = vmatpush1.msra.mxu0 %v970
      %3227 = vmatprep.subr.mxu0 0.0
      %3228 = vmatpush1.msra.mxu0 %v971
      %3229 = vmatprep.subr.mxu0 0.0
      %3230 = vmatpush1.msra.mxu0 %v972
      %3231 = vmatprep.subr.mxu0 0.0
      %3232 = vmatpush1.msra.mxu0 %v973
      %3233 = vmatprep.subr.mxu0 0.0
      %3234 = vmatpush1.msra.mxu0 %v974
      %3235 = vmatprep.subr.mxu0 0.0
      %3236 = vmatpush1.msra.mxu0 %v975
      %3237 = vmatprep.subr.mxu0 0.0
      %3238 = vmatpush1.msra.mxu0 %v976
      %3239 = vmatprep.subr.mxu0 0.0
      %3240 = vmatpush1.msra.mxu0 %v977
      %3241 = vmatprep.subr.mxu0 0.0
      %3242 = vmatpush1.msra.mxu0 %v978
      %3243 = vmatprep.subr.mxu0 0.0
      %3244 = vmatpush1.msra.mxu0 %v979
      %3245 = vmatprep.subr.mxu0 0.0
      %3246 = vmatpush1.msra.mxu0 %v980
      %3247 = vmatprep.subr.mxu0 0.0
      %3248 = vmatpush1.msra.mxu0 %v981
      %3249 = vmatprep.subr.mxu0 0.0
      %3250 = vmatpush1.msra.mxu0 %v982
      %3251 = vmatprep.subr.mxu0 0.0
      %3252 = vmatpush1.msra.mxu0 %v983
      %3253 = vmatprep.subr.mxu0 0.0
      %3254 = vmatpush1.msra.mxu0 %v984
      %3255 = vmatprep.subr.mxu0 0.0
      %3256 = vmatpush1.msra.mxu0 %v985
      %3257 = vmatprep.subr.mxu0 0.0
      %3258 = vmatpush1.msra.mxu0 %v986
      %3259 = vmatprep.subr.mxu0 0.0
      %3260 = vmatpush1.msra.mxu0 %v987
      %3261 = vmatprep.subr.mxu0 0.0
      %3262 = vmatpush1.msra.mxu0 %v988
      %3263 = vmatprep.subr.mxu0 0.0
      %3264 = vmatpush1.msra.mxu0 %v989
      %3265 = vmatprep.subr.mxu0 0.0
      %3266 = vmatpush1.msra.mxu0 %v990
      %3267 = vmatprep.subr.mxu0 0.0
      %3268 = vmatpush1.msra.mxu0 %v991
      %3269 = vmatprep.subr.mxu0 0.0
      %3270 = vmatpush1.msra.mxu0 %v992
      %3271 = vmatprep.subr.mxu0 0.0
      %3272 = vmatpush1.msra.mxu0 %v993
      %3273 = vmatprep.subr.mxu0 0.0
      %3274 = vmatpush1.msra.mxu0 %v994
      %3275 = vmatprep.subr.mxu0 0.0
      %3276 = vmatpush1.msra.mxu0 %v995
      %3277 = vmatprep.subr.mxu0 0.0
      %3278 = vmatpush1.msra.mxu0 %v996
      %3279 = vmatprep.mubr.f32.mxu0 %v1472
      %3280 = vmatmul.mubr.f32.gmra.mrb[0].mxu0 %v1470
      %v3281 = vpop.f32.mrb[0].mxu0
      %v3282 = vadd.f32 %v3212, %v3281
      %v3283 = vpop.f32.mrb[0].mxu0
      %3284 = vdwg.mxu0
      %3285 = vmatprep.subr.mxu0 0.0
      %3286 = vmatpush1.msra.mxu0 %v997
      %3287 = vmatprep.subr.mxu0 0.0
      %3288 = vmatpush1.msra.mxu0 %v998
      %3289 = vmatprep.subr.mxu0 0.0
      %3290 = vmatpush1.msra.mxu0 %v999
      %3291 = vmatprep.subr.mxu0 0.0
      %3292 = vmatpush1.msra.mxu0 %v1000
      %3293 = vmatprep.subr.mxu0 0.0
      %3294 = vmatpush1.msra.mxu0 %v1001
      %3295 = vmatprep.subr.mxu0 0.0
      %3296 = vmatpush1.msra.mxu0 %v1002
      %3297 = vmatprep.subr.mxu0 0.0
      %3298 = vmatpush1.msra.mxu0 %v1003
      %3299 = vmatprep.subr.mxu0 0.0
      %3300 = vmatpush1.msra.mxu0 %v1004
      %3301 = vmatprep.subr.mxu0 0.0
      %3302 = vmatpush1.msra.mxu0 %v1005
      %3303 = vmatprep.subr.mxu0 0.0
      %3304 = vmatpush1.msra.mxu0 %v1006
      %3305 = vmatprep.subr.mxu0 0.0
      %3306 = vmatpush1.msra.mxu0 %v1007
      %3307 = vmatprep.subr.mxu0 0.0
      %3308 = vmatpush1.msra.mxu0 %v1008
      %3309 = vmatprep.subr.mxu0 0.0
      %3310 = vmatpush1.msra.mxu0 %v1009
      %3311 = vmatprep.subr.mxu0 0.0
      %3312 = vmatpush1.msra.mxu0 %v1010
      %3313 = vmatprep.subr.mxu0 0.0
      %3314 = vmatpush1.msra.mxu0 %v1011
      %3315 = vmatprep.subr.mxu0 0.0
      %3316 = vmatpush1.msra.mxu0 %v1012
      %3317 = vmatprep.subr.mxu0 0.0
      %3318 = vmatpush1.msra.mxu0 %v1013
      %3319 = vmatprep.subr.mxu0 0.0
      %3320 = vmatpush1.msra.mxu0 %v1014
      %3321 = vmatprep.subr.mxu0 0.0
      %3322 = vmatpush1.msra.mxu0 %v1015
      %3323 = vmatprep.subr.mxu0 0.0
      %3324 = vmatpush1.msra.mxu0 %v1016
      %3325 = vmatprep.subr.mxu0 0.0
      %3326 = vmatpush1.msra.mxu0 %v1017
      %3327 = vmatprep.subr.mxu0 0.0
      %3328 = vmatpush1.msra.mxu0 %v1018
      %3329 = vmatprep.subr.mxu0 0.0
      %3330 = vmatpush1.msra.mxu0 %v1019
      %3331 = vmatprep.subr.mxu0 0.0
      %3332 = vmatpush1.msra.mxu0 %v1020
      %3333 = vmatprep.subr.mxu0 0.0
      %3334 = vmatpush1.msra.mxu0 %v1021
      %3335 = vmatprep.subr.mxu0 0.0
      %3336 = vmatpush1.msra.mxu0 %v1022
      %3337 = vmatprep.subr.mxu0 0.0
      %3338 = vmatpush1.msra.mxu0 %v1023
      %3339 = vmatprep.subr.mxu0 0.0
      %3340 = vmatpush1.msra.mxu0 %v1024
      %3341 = vmatprep.subr.mxu0 0.0
      %3342 = vmatpush1.msra.mxu0 %v1025
      %3343 = vmatprep.subr.mxu0 0.0
      %3344 = vmatpush1.msra.mxu0 %v1026
      %3345 = vmatprep.subr.mxu0 0.0
      %3346 = vmatpush1.msra.mxu0 %v1027
      %3347 = vmatprep.subr.mxu0 0.0
      %3348 = vmatpush1.msra.mxu0 %v1028
      %3349 = vmatprep.mubr.f32.mxu0 %v1488
      %3350 = vmatmul.mubr.f32.gmra.mrb[0].mxu0 %v1480
      %v3351 = vpop.f32.mrb[0].mxu0
      %v3352 = vadd.f32 %v3282, %v3351
      %v3353 = vpop.f32.mrb[0].mxu0
      %3354 = vdwg.mxu0
      %3355 = vmatprep.subr.mxu0 0.0
      %3356 = vmatpush1.msra.mxu0 %v1029
      %3357 = vmatprep.subr.mxu0 0.0
      %3358 = vmatpush1.msra.mxu0 %v1030
      %3359 = vmatprep.subr.mxu0 0.0
      %3360 = vmatpush1.msra.mxu0 %v1031
      %3361 = vmatprep.subr.mxu0 0.0
      %3362 = vmatpush1.msra.mxu0 %v1032
      %3363 = vmatprep.subr.mxu0 0.0
      %3364 = vmatpush1.msra.mxu0 %v1033
      %3365 = vmatprep.subr.mxu0 0.0
      %3366 = vmatpush1.msra.mxu0 %v1034
      %3367 = vmatprep.subr.mxu0 0.0
      %3368 = vmatpush1.msra.mxu0 %v1035
      %3369 = vmatprep.subr.mxu0 0.0
      %3370 = vmatpush1.msra.mxu0 %v1036
      %3371 = vmatprep.subr.mxu0 0.0
      %3372 = vmatpush1.msra.mxu0 %v1037
      %3373 = vmatprep.subr.mxu0 0.0
      %3374 = vmatpush1.msra.mxu0 %v1038
      %3375 = vmatprep.subr.mxu0 0.0
      %3376 = vmatpush1.msra.mxu0 %v1039
      %3377 = vmatprep.subr.mxu0 0.0
      %3378 = vmatpush1.msra.mxu0 %v1040
      %3379 = vmatprep.subr.mxu0 0.0
      %3380 = vmatpush1.msra.mxu0 %v1041
      %3381 = vmatprep.subr.mxu0 0.0
      %3382 = vmatpush1.msra.mxu0 %v1042
      %3383 = vmatprep.subr.mxu0 0.0
      %3384 = vmatpush1.msra.mxu0 %v1043
      %3385 = vmatprep.subr.mxu0 0.0
      %3386 = vmatpush1.msra.mxu0 %v1044
      %3387 = vmatprep.subr.mxu0 0.0
      %3388 = vmatpush1.msra.mxu0 %v1045
      %3389 = vmatprep.subr.mxu0 0.0
      %3390 = vmatpush1.msra.mxu0 %v1046
      %3391 = vmatprep.subr.mxu0 0.0
      %3392 = vmatpush1.msra.mxu0 %v1047
      %3393 = vmatprep.subr.mxu0 0.0
      %3394 = vmatpush1.msra.mxu0 %v1048
      %3395 = vmatprep.subr.mxu0 0.0
      %3396 = vmatpush1.msra.mxu0 %v1049
      %3397 = vmatprep.subr.mxu0 0.0
      %3398 = vmatpush1.msra.mxu0 %v1050
      %3399 = vmatprep.subr.mxu0 0.0
      %3400 = vmatpush1.msra.mxu0 %v1051
      %3401 = vmatprep.subr.mxu0 0.0
      %3402 = vmatpush1.msra.mxu0 %v1052
      %3403 = vmatprep.subr.mxu0 0.0
      %3404 = vmatpush1.msra.mxu0 %v1053
      %3405 = vmatprep.subr.mxu0 0.0
      %3406 = vmatpush1.msra.mxu0 %v1054
      %3407 = vmatprep.subr.mxu0 0.0
      %3408 = vmatpush1.msra.mxu0 %v1055
      %3409 = vmatprep.subr.mxu0 0.0
      %3410 = vmatpush1.msra.mxu0 %v1056
      %3411 = vmatprep.subr.mxu0 0.0
      %3412 = vmatpush1.msra.mxu0 %v1057
      %3413 = vmatprep.subr.mxu0 0.0
      %3414 = vmatpush1.msra.mxu0 %v1058
      %3415 = vmatprep.subr.mxu0 0.0
      %3416 = vmatpush1.msra.mxu0 %v1059
      %3417 = vmatprep.subr.mxu0 0.0
      %3418 = vmatpush1.msra.mxu0 %v1060
      %3419 = vmatprep.mubr.f32.mxu0 %v1489
      %3420 = vmatmul.mubr.f32.gmra.mrb[0].mxu0 %v1487
      %v3421 = vpop.f32.mrb[0].mxu0
      %v3422 = vadd.f32 %v3352, %v3421
      %v3423 = vpop.f32.mrb[0].mxu0
      %3424 = vdwg.mxu0
      %3425 = vmatprep.subr.mxu0 0.0
      %3426 = vmatpush1.msra.mxu0 %v1061
      %3427 = vmatprep.subr.mxu0 0.0
      %3428 = vmatpush1.msra.mxu0 %v1062
      %3429 = vmatprep.subr.mxu0 0.0
      %3430 = vmatpush1.msra.mxu0 %v1063
      %3431 = vmatprep.subr.mxu0 0.0
      %3432 = vmatpush1.msra.mxu0 %v1064
      %3433 = vmatprep.subr.mxu0 0.0
      %3434 = vmatpush1.msra.mxu0 %v1065
      %3435 = vmatprep.subr.mxu0 0.0
      %3436 = vmatpush1.msra.mxu0 %v1066
      %3437 = vmatprep.subr.mxu0 0.0
      %3438 = vmatpush1.msra.mxu0 %v1067
      %3439 = vmatprep.subr.mxu0 0.0
      %3440 = vmatpush1.msra.mxu0 %v1068
      %3441 = vmatprep.subr.mxu0 0.0
      %3442 = vmatpush1.msra.mxu0 %v1069
      %3443 = vmatprep.subr.mxu0 0.0
      %3444 = vmatpush1.msra.mxu0 %v1070
      %3445 = vmatprep.subr.mxu0 0.0
      %3446 = vmatpush1.msra.mxu0 %v1071
      %3447 = vmatprep.subr.mxu0 0.0
      %3448 = vmatpush1.msra.mxu0 %v1072
      %3449 = vmatprep.subr.mxu0 0.0
      %3450 = vmatpush1.msra.mxu0 %v1073
      %3451 = vmatprep.subr.mxu0 0.0
      %3452 = vmatpush1.msra.mxu0 %v1074
      %3453 = vmatprep.subr.mxu0 0.0
      %3454 = vmatpush1.msra.mxu0 %v1075
      %3455 = vmatprep.subr.mxu0 0.0
      %3456 = vmatpush1.msra.mxu0 %v1076
      %3457 = vmatprep.subr.mxu0 0.0
      %3458 = vmatpush1.msra.mxu0 %v1077
      %3459 = vmatprep.subr.mxu0 0.0
      %3460 = vmatpush1.msra.mxu0 %v1078
      %3461 = vmatprep.subr.mxu0 0.0
      %3462 = vmatpush1.msra.mxu0 %v1079
      %3463 = vmatprep.subr.mxu0 0.0
      %3464 = vmatpush1.msra.mxu0 %v1080
      %3465 = vmatprep.subr.mxu0 0.0
      %3466 = vmatpush1.msra.mxu0 %v1081
      %3467 = vmatprep.subr.mxu0 0.0
      %3468 = vmatpush1.msra.mxu0 %v1082
      %3469 = vmatprep.subr.mxu0 0.0
      %3470 = vmatpush1.msra.mxu0 %v1083
      %3471 = vmatprep.subr.mxu0 0.0
      %3472 = vmatpush1.msra.mxu0 %v1084
      %3473 = vmatprep.subr.mxu0 0.0
      %3474 = vmatpush1.msra.mxu0 %v1085
      %3475 = vmatprep.subr.mxu0 0.0
      %3476 = vmatpush1.msra.mxu0 %v1086
      %3477 = vmatprep.subr.mxu0 0.0
      %3478 = vmatpush1.msra.mxu0 %v1087
      %3479 = vmatprep.subr.mxu0 0.0
      %3480 = vmatpush1.msra.mxu0 %v1088
      %3481 = vmatprep.subr.mxu0 0.0
      %3482 = vmatpush1.msra.mxu0 %v1089
      %3483 = vmatprep.subr.mxu0 0.0
      %3484 = vmatpush1.msra.mxu0 %v1090
      %3485 = vmatprep.subr.mxu0 0.0
      %3486 = vmatpush1.msra.mxu0 %v1091
      %3487 = vmatprep.subr.mxu0 0.0
      %3488 = vmatpush1.msra.mxu0 %v1092
      %3489 = vmatprep.mubr.f32.mxu0 %v1505
      %3490 = vmatmul.mubr.f32.gmra.mrb[0].mxu0 %v1497
      %v3491 = vpop.f32.mrb[0].mxu0
      %v3492 = vadd.f32 %v3422, %v3491
      %v3493 = vpop.f32.mrb[0].mxu0
      %3494 = vdwg.mxu0
      %3495 = vmatprep.subr.mxu0 0.0
      %3496 = vmatpush1.msra.mxu0 %v1093
      %3497 = vmatprep.subr.mxu0 0.0
      %3498 = vmatpush1.msra.mxu0 %v1094
      %3499 = vmatprep.subr.mxu0 0.0
      %3500 = vmatpush1.msra.mxu0 %v1095
      %3501 = vmatprep.subr.mxu0 0.0
      %3502 = vmatpush1.msra.mxu0 %v1096
      %3503 = vmatprep.subr.mxu0 0.0
      %3504 = vmatpush1.msra.mxu0 %v1097
      %3505 = vmatprep.subr.mxu0 0.0
      %3506 = vmatpush1.msra.mxu0 %v1098
      %3507 = vmatprep.subr.mxu0 0.0
      %3508 = vmatpush1.msra.mxu0 %v1099
      %3509 = vmatprep.subr.mxu0 0.0
      %3510 = vmatpush1.msra.mxu0 %v1100
      %3511 = vmatprep.subr.mxu0 0.0
      %3512 = vmatpush1.msra.mxu0 %v1101
      %3513 = vmatprep.subr.mxu0 0.0
      %3514 = vmatpush1.msra.mxu0 %v1102
      %3515 = vmatprep.subr.mxu0 0.0
      %3516 = vmatpush1.msra.mxu0 %v1103
      %3517 = vmatprep.subr.mxu0 0.0
      %3518 = vmatpush1.msra.mxu0 %v1104
      %3519 = vmatprep.subr.mxu0 0.0
      %3520 = vmatpush1.msra.mxu0 %v1105
      %3521 = vmatprep.subr.mxu0 0.0
      %3522 = vmatpush1.msra.mxu0 %v1106
      %3523 = vmatprep.subr.mxu0 0.0
      %3524 = vmatpush1.msra.mxu0 %v1107
      %3525 = vmatprep.subr.mxu0 0.0
      %3526 = vmatpush1.msra.mxu0 %v1108
      %3527 = vmatprep.subr.mxu0 0.0
      %3528 = vmatpush1.msra.mxu0 %v1109
      %3529 = vmatprep.subr.mxu0 0.0
      %3530 = vmatpush1.msra.mxu0 %v1110
      %3531 = vmatprep.subr.mxu0 0.0
      %3532 = vmatpush1.msra.mxu0 %v1111
      %3533 = vmatprep.subr.mxu0 0.0
      %3534 = vmatpush1.msra.mxu0 %v1112
      %3535 = vmatprep.subr.mxu0 0.0
      %3536 = vmatpush1.msra.mxu0 %v1113
      %3537 = vmatprep.subr.mxu0 0.0
      %3538 = vmatpush1.msra.mxu0 %v1114
      %3539 = vmatprep.subr.mxu0 0.0
      %3540 = vmatpush1.msra.mxu0 %v1115
      %3541 = vmatprep.subr.mxu0 0.0
      %3542 = vmatpush1.msra.mxu0 %v1116
      %3543 = vmatprep.subr.mxu0 0.0
      %3544 = vmatpush1.msra.mxu0 %v1117
      %3545 = vmatprep.subr.mxu0 0.0
      %3546 = vmatpush1.msra.mxu0 %v1118
      %3547 = vmatprep.subr.mxu0 0.0
      %3548 = vmatpush1.msra.mxu0 %v1119
      %3549 = vmatprep.subr.mxu0 0.0
      %3550 = vmatpush1.msra.mxu0 %v1120
      %3551 = vmatprep.subr.mxu0 0.0
      %3552 = vmatpush1.msra.mxu0 %v1121
      %3553 = vmatprep.subr.mxu0 0.0
      %3554 = vmatpush1.msra.mxu0 %v1122
      %3555 = vmatprep.subr.mxu0 0.0
      %3556 = vmatpush1.msra.mxu0 %v1123
      %3557 = vmatprep.subr.mxu0 0.0
      %3558 = vmatpush1.msra.mxu0 %v1124
      %3559 = vmatprep.mubr.f32.mxu0 %v1506
      %3560 = vmatmul.mubr.f32.gmra.mrb[0].mxu0 %v1504
      %v3561 = vpop.f32.mrb[0].mxu0
      %v3562 = vadd.f32 %v3492, %v3561
      %v3563 = vpop.f32.mrb[0].mxu0
      %3564 = vdwg.mxu0
      %3565 = vmatprep.subr.mxu0 0.0
      %3566 = vmatpush1.msra.mxu0 %v1125
      %3567 = vmatprep.subr.mxu0 0.0
      %3568 = vmatpush1.msra.mxu0 %v1126
      %3569 = vmatprep.subr.mxu0 0.0
      %3570 = vmatpush1.msra.mxu0 %v1127
      %3571 = vmatprep.subr.mxu0 0.0
      %3572 = vmatpush1.msra.mxu0 %v1128
      %3573 = vmatprep.subr.mxu0 0.0
      %3574 = vmatpush1.msra.mxu0 %v1129
      %3575 = vmatprep.subr.mxu0 0.0
      %3576 = vmatpush1.msra.mxu0 %v1130
      %3577 = vmatprep.subr.mxu0 0.0
      %3578 = vmatpush1.msra.mxu0 %v1131
      %3579 = vmatprep.subr.mxu0 0.0
      %3580 = vmatpush1.msra.mxu0 %v1132
      %3581 = vmatprep.subr.mxu0 0.0
      %3582 = vmatpush1.msra.mxu0 %v1133
      %3583 = vmatprep.subr.mxu0 0.0
      %3584 = vmatpush1.msra.mxu0 %v1134
      %3585 = vmatprep.subr.mxu0 0.0
      %3586 = vmatpush1.msra.mxu0 %v1135
      %3587 = vmatprep.subr.mxu0 0.0
      %3588 = vmatpush1.msra.mxu0 %v1136
      %3589 = vmatprep.subr.mxu0 0.0
      %3590 = vmatpush1.msra.mxu0 %v1137
      %3591 = vmatprep.subr.mxu0 0.0
      %3592 = vmatpush1.msra.mxu0 %v1138
      %3593 = vmatprep.subr.mxu0 0.0
      %3594 = vmatpush1.msra.mxu0 %v1139
      %3595 = vmatprep.subr.mxu0 0.0
      %3596 = vmatpush1.msra.mxu0 %v1140
      %3597 = vmatprep.subr.mxu0 0.0
      %3598 = vmatpush1.msra.mxu0 %v1141
      %3599 = vmatprep.subr.mxu0 0.0
      %3600 = vmatpush1.msra.mxu0 %v1142
      %3601 = vmatprep.subr.mxu0 0.0
      %3602 = vmatpush1.msra.mxu0 %v1143
      %3603 = vmatprep.subr.mxu0 0.0
      %3604 = vmatpush1.msra.mxu0 %v1144
      %3605 = vmatprep.subr.mxu0 0.0
      %3606 = vmatpush1.msra.mxu0 %v1145
      %3607 = vmatprep.subr.mxu0 0.0
      %3608 = vmatpush1.msra.mxu0 %v1146
      %3609 = vmatprep.subr.mxu0 0.0
      %3610 = vmatpush1.msra.mxu0 %v1147
      %3611 = vmatprep.subr.mxu0 0.0
      %3612 = vmatpush1.msra.mxu0 %v1148
      %3613 = vmatprep.subr.mxu0 0.0
      %3614 = vmatpush1.msra.mxu0 %v1149
      %3615 = vmatprep.subr.mxu0 0.0
      %3616 = vmatpush1.msra.mxu0 %v1150
      %3617 = vmatprep.subr.mxu0 0.0
      %3618 = vmatpush1.msra.mxu0 %v1151
      %3619 = vmatprep.subr.mxu0 0.0
      %3620 = vmatpush1.msra.mxu0 %v1152
      %3621 = vmatprep.subr.mxu0 0.0
      %3622 = vmatpush1.msra.mxu0 %v1153
      %3623 = vmatprep.subr.mxu0 0.0
      %3624 = vmatpush1.msra.mxu0 %v1154
      %3625 = vmatprep.subr.mxu0 0.0
      %3626 = vmatpush1.msra.mxu0 %v1155
      %3627 = vmatprep.subr.mxu0 0.0
      %3628 = vmatpush1.msra.mxu0 %v1156
      %3629 = vmatprep.mubr.f32.mxu0 %v1522
      %3630 = vmatmul.mubr.f32.gmra.mrb[0].mxu0 %v1514
      %v3631 = vpop.f32.mrb[0].mxu0
      %v3632 = vadd.f32 %v3562, %v3631
      %v3633 = vpop.f32.mrb[0].mxu0
      %3634 = vdwg.mxu0
      %3635 = vmatprep.subr.mxu0 0.0
      %3636 = vmatpush1.msra.mxu0 %v1157
      %3637 = vmatprep.subr.mxu0 0.0
      %3638 = vmatpush1.msra.mxu0 %v1158
      %3639 = vmatprep.subr.mxu0 0.0
      %3640 = vmatpush1.msra.mxu0 %v1159
      %3641 = vmatprep.subr.mxu0 0.0
      %3642 = vmatpush1.msra.mxu0 %v1160
      %3643 = vmatprep.subr.mxu0 0.0
      %3644 = vmatpush1.msra.mxu0 %v1161
      %3645 = vmatprep.subr.mxu0 0.0
      %3646 = vmatpush1.msra.mxu0 %v1162
      %3647 = vmatprep.subr.mxu0 0.0
      %3648 = vmatpush1.msra.mxu0 %v1163
      %3649 = vmatprep.subr.mxu0 0.0
      %3650 = vmatpush1.msra.mxu0 %v1164
      %3651 = vmatprep.subr.mxu0 0.0
      %3652 = vmatpush1.msra.mxu0 %v1165
      %3653 = vmatprep.subr.mxu0 0.0
      %3654 = vmatpush1.msra.mxu0 %v1166
      %3655 = vmatprep.subr.mxu0 0.0
      %3656 = vmatpush1.msra.mxu0 %v1167
      %3657 = vmatprep.subr.mxu0 0.0
      %3658 = vmatpush1.msra.mxu0 %v1168
      %3659 = vmatprep.subr.mxu0 0.0
      %3660 = vmatpush1.msra.mxu0 %v1169
      %3661 = vmatprep.subr.mxu0 0.0
      %3662 = vmatpush1.msra.mxu0 %v1170
      %3663 = vmatprep.subr.mxu0 0.0
      %3664 = vmatpush1.msra.mxu0 %v1171
      %3665 = vmatprep.subr.mxu0 0.0
      %3666 = vmatpush1.msra.mxu0 %v1172
      %3667 = vmatprep.subr.mxu0 0.0
      %3668 = vmatpush1.msra.mxu0 %v1173
      %3669 = vmatprep.subr.mxu0 0.0
      %3670 = vmatpush1.msra.mxu0 %v1174
      %3671 = vmatprep.subr.mxu0 0.0
      %3672 = vmatpush1.msra.mxu0 %v1175
      %3673 = vmatprep.subr.mxu0 0.0
      %3674 = vmatpush1.msra.mxu0 %v1176
      %3675 = vmatprep.subr.mxu0 0.0
      %3676 = vmatpush1.msra.mxu0 %v1177
      %3677 = vmatprep.subr.mxu0 0.0
      %3678 = vmatpush1.msra.mxu0 %v1178
      %3679 = vmatprep.subr.mxu0 0.0
      %3680 = vmatpush1.msra.mxu0 %v1179
      %3681 = vmatprep.subr.mxu0 0.0
      %3682 = vmatpush1.msra.mxu0 %v1180
      %3683 = vmatprep.subr.mxu0 0.0
      %3684 = vmatpush1.msra.mxu0 %v1181
      %3685 = vmatprep.subr.mxu0 0.0
      %3686 = vmatpush1.msra.mxu0 %v1182
      %3687 = vmatprep.subr.mxu0 0.0
      %3688 = vmatpush1.msra.mxu0 %v1183
      %3689 = vmatprep.subr.mxu0 0.0
      %3690 = vmatpush1.msra.mxu0 %v1184
      %3691 = vmatprep.subr.mxu0 0.0
      %3692 = vmatpush1.msra.mxu0 %v1185
      %3693 = vmatprep.subr.mxu0 0.0
      %3694 = vmatpush1.msra.mxu0 %v1186
      %3695 = vmatprep.subr.mxu0 0.0
      %3696 = vmatpush1.msra.mxu0 %v1187
      %3697 = vmatprep.subr.mxu0 0.0
      %3698 = vmatpush1.msra.mxu0 %v1188
      %3699 = vmatprep.mubr.f32.mxu0 %v1523
      %3700 = vmatmul.mubr.f32.gmra.mrb[0].mxu0 %v1521
      %v3701 = vpop.f32.mrb[0].mxu0
      %v3702 = vadd.f32 %v3632, %v3701
      %v3703 = vpop.f32.mrb[0].mxu0
      %3704 = vdwg.mxu0
      %3705 = vmatprep.subr.mxu0 0.0
      %3706 = vmatpush1.msra.mxu0 %v1189
      %3707 = vmatprep.subr.mxu0 0.0
      %3708 = vmatpush1.msra.mxu0 %v1190
      %3709 = vmatprep.subr.mxu0 0.0
      %3710 = vmatpush1.msra.mxu0 %v1191
      %3711 = vmatprep.subr.mxu0 0.0
      %3712 = vmatpush1.msra.mxu0 %v1192
      %3713 = vmatprep.subr.mxu0 0.0
      %3714 = vmatpush1.msra.mxu0 %v1193
      %3715 = vmatprep.subr.mxu0 0.0
      %3716 = vmatpush1.msra.mxu0 %v1194
      %3717 = vmatprep.subr.mxu0 0.0
      %3718 = vmatpush1.msra.mxu0 %v1195
      %3719 = vmatprep.subr.mxu0 0.0
      %3720 = vmatpush1.msra.mxu0 %v1196
      %3721 = vmatprep.subr.mxu0 0.0
      %3722 = vmatpush1.msra.mxu0 %v1197
      %3723 = vmatprep.subr.mxu0 0.0
      %3724 = vmatpush1.msra.mxu0 %v1198
      %3725 = vmatprep.subr.mxu0 0.0
      %3726 = vmatpush1.msra.mxu0 %v1199
      %3727 = vmatprep.subr.mxu0 0.0
      %3728 = vmatpush1.msra.mxu0 %v1200
      %3729 = vmatprep.subr.mxu0 0.0
      %3730 = vmatpush1.msra.mxu0 %v1201
      %3731 = vmatprep.subr.mxu0 0.0
      %3732 = vmatpush1.msra.mxu0 %v1202
      %3733 = vmatprep.subr.mxu0 0.0
      %3734 = vmatpush1.msra.mxu0 %v1203
      %3735 = vmatprep.subr.mxu0 0.0
      %3736 = vmatpush1.msra.mxu0 %v1204
      %3737 = vmatprep.subr.mxu0 0.0
      %3738 = vmatpush1.msra.mxu0 %v1205
      %3739 = vmatprep.subr.mxu0 0.0
      %3740 = vmatpush1.msra.mxu0 %v1206
      %3741 = vmatprep.subr.mxu0 0.0
      %3742 = vmatpush1.msra.mxu0 %v1207
      %3743 = vmatprep.subr.mxu0 0.0
      %3744 = vmatpush1.msra.mxu0 %v1208
      %3745 = vmatprep.subr.mxu0 0.0
      %3746 = vmatpush1.msra.mxu0 %v1209
      %3747 = vmatprep.subr.mxu0 0.0
      %3748 = vmatpush1.msra.mxu0 %v1210
      %3749 = vmatprep.subr.mxu0 0.0
      %3750 = vmatpush1.msra.mxu0 %v1211
      %3751 = vmatprep.subr.mxu0 0.0
      %3752 = vmatpush1.msra.mxu0 %v1212
      %3753 = vmatprep.subr.mxu0 0.0
      %3754 = vmatpush1.msra.mxu0 %v1213
      %3755 = vmatprep.subr.mxu0 0.0
      %3756 = vmatpush1.msra.mxu0 %v1214
      %3757 = vmatprep.subr.mxu0 0.0
      %3758 = vmatpush1.msra.mxu0 %v1215
      %3759 = vmatprep.subr.mxu0 0.0
      %3760 = vmatpush1.msra.mxu0 %v1216
      %3761 = vmatprep.subr.mxu0 0.0
      %3762 = vmatpush1.msra.mxu0 %v1217
      %3763 = vmatprep.subr.mxu0 0.0
      %3764 = vmatpush1.msra.mxu0 %v1218
      %3765 = vmatprep.subr.mxu0 0.0
      %3766 = vmatpush1.msra.mxu0 %v1219
      %3767 = vmatprep.subr.mxu0 0.0
      %3768 = vmatpush1.msra.mxu0 %v1220
      %3769 = vmatprep.mubr.f32.mxu0 %v1539
      %3770 = vmatmul.mubr.f32.gmra.mrb[0].mxu0 %v1531
      %v3771 = vpop.f32.mrb[0].mxu0
      %v3772 = vadd.f32 %v3702, %v3771
      %v3773 = vpop.f32.mrb[0].mxu0
      %3774 = vdwg.mxu0
      %3775 = vmatprep.subr.mxu0 0.0
      %3776 = vmatpush1.msra.mxu0 %v1221
      %3777 = vmatprep.subr.mxu0 0.0
      %3778 = vmatpush1.msra.mxu0 %v1222
      %3779 = vmatprep.subr.mxu0 0.0
      %3780 = vmatpush1.msra.mxu0 %v1223
      %3781 = vmatprep.subr.mxu0 0.0
      %3782 = vmatpush1.msra.mxu0 %v1224
      %3783 = vmatprep.subr.mxu0 0.0
      %3784 = vmatpush1.msra.mxu0 %v1225
      %3785 = vmatprep.subr.mxu0 0.0
      %3786 = vmatpush1.msra.mxu0 %v1226
      %3787 = vmatprep.subr.mxu0 0.0
      %3788 = vmatpush1.msra.mxu0 %v1227
      %3789 = vmatprep.subr.mxu0 0.0
      %3790 = vmatpush1.msra.mxu0 %v1228
      %3791 = vmatprep.subr.mxu0 0.0
      %3792 = vmatpush1.msra.mxu0 %v1229
      %3793 = vmatprep.subr.mxu0 0.0
      %3794 = vmatpush1.msra.mxu0 %v1230
      %3795 = vmatprep.subr.mxu0 0.0
      %3796 = vmatpush1.msra.mxu0 %v1231
      %3797 = vmatprep.subr.mxu0 0.0
      %3798 = vmatpush1.msra.mxu0 %v1232
      %3799 = vmatprep.subr.mxu0 0.0
      %3800 = vmatpush1.msra.mxu0 %v1233
      %3801 = vmatprep.subr.mxu0 0.0
      %3802 = vmatpush1.msra.mxu0 %v1234
      %3803 = vmatprep.subr.mxu0 0.0
      %3804 = vmatpush1.msra.mxu0 %v1235
      %3805 = vmatprep.subr.mxu0 0.0
      %3806 = vmatpush1.msra.mxu0 %v1236
      %3807 = vmatprep.subr.mxu0 0.0
      %3808 = vmatpush1.msra.mxu0 %v1237
      %3809 = vmatprep.subr.mxu0 0.0
      %3810 = vmatpush1.msra.mxu0 %v1238
      %3811 = vmatprep.subr.mxu0 0.0
      %3812 = vmatpush1.msra.mxu0 %v1239
      %3813 = vmatprep.subr.mxu0 0.0
      %3814 = vmatpush1.msra.mxu0 %v1240
      %3815 = vmatprep.subr.mxu0 0.0
      %3816 = vmatpush1.msra.mxu0 %v1241
      %3817 = vmatprep.subr.mxu0 0.0
      %3818 = vmatpush1.msra.mxu0 %v1242
      %3819 = vmatprep.subr.mxu0 0.0
      %3820 = vmatpush1.msra.mxu0 %v1243
      %3821 = vmatprep.subr.mxu0 0.0
      %3822 = vmatpush1.msra.mxu0 %v1244
      %3823 = vmatprep.subr.mxu0 0.0
      %3824 = vmatpush1.msra.mxu0 %v1245
      %3825 = vmatprep.subr.mxu0 0.0
      %3826 = vmatpush1.msra.mxu0 %v1246
      %3827 = vmatprep.subr.mxu0 0.0
      %3828 = vmatpush1.msra.mxu0 %v1247
      %3829 = vmatprep.subr.mxu0 0.0
      %3830 = vmatpush1.msra.mxu0 %v1248
      %3831 = vmatprep.subr.mxu0 0.0
      %3832 = vmatpush1.msra.mxu0 %v1249
      %3833 = vmatprep.subr.mxu0 0.0
      %3834 = vmatpush1.msra.mxu0 %v1250
      %3835 = vmatprep.subr.mxu0 0.0
      %3836 = vmatpush1.msra.mxu0 %v1251
      %3837 = vmatprep.subr.mxu0 0.0
      %3838 = vmatpush1.msra.mxu0 %v1252
      %3839 = vmatprep.mubr.f32.mxu0 %v1540
      %3840 = vmatmul.mubr.f32.gmra.mrb[0].mxu0 %v1538
      %v3841 = vpop.f32.mrb[0].mxu0
      %v3842 = vadd.f32 %v3772, %v3841
      %v3843 = vpop.f32.mrb[0].mxu0
      %3844 = vdwg.mxu0
      %v3845 = vadd.f32 %v212, %v3842
      %vm3846 = vcmask 517120
      %3847 = vst.msk [vmem:[%s205] sm:$0x3] %vm3846, %v3845
      %p3848 = scmp.lt.s32.totalorder %s17, 1
      %s3849 = scalar_select %p3848, %s17, 1
      %s3850 = smul.addr %s3849, 2
      %s3851 = scalar_lea.vmem %s2, %s3850
      // Predicated region
      $region33: #{server_trashnet_forward.2} parent=27 // pred_check
        %p3852 = pneg %p103
      $region34: #{server_trashnet_forward.2} parent=27 // pred_check_branch
        %3854 = sbr.rel (%p3852) target = $region36
      $region35: #{server_trashnet_forward.2} parent=27 // pred_region
        _
      $region36: #{server_trashnet_forward.2} parent=27 // pred_fallthru
        _
    $region28: #{server_trashnet_forward.2} parent=5 // pred_fallthru
      _
    %p3855 = scmp.le.s32.totalorder 2, %s8
    // Predicated region
    $region37: #{server_trashnet_forward.2} parent=5 // pred_check
      %p3856 = pneg %p3855
    $region38: #{server_trashnet_forward.2} parent=5 // pred_check_branch
      %3858 = sbr.rel (%p3856) target = $region40
    $region39: #{server_trashnet_forward.2} parent=5 // pred_region
      %s3859 = ssub.s32 %s8, 2
      // Predicated region
      $region41: #{server_trashnet_forward.2} parent=39 // pred_check
        %p3860 = pneg %p109
      $region42: #{server_trashnet_forward.2} parent=39 // pred_check_branch
        %3862 = sbr.rel (%p3860) target = $region44
      $region43: #{server_trashnet_forward.2} parent=39 // pred_region
        %p3863 = scmp.lt.s32.totalorder %s19, 1
        %s3864 = scalar_select %p3863, %s19, 1
        %s3865 = smul.addr %s3864, 2
        %s3866 = scalar_lea.vmem %s2, %s3865
      $region44: #{server_trashnet_forward.2} parent=39 // pred_fallthru
        _
    $region40: #{server_trashnet_forward.2} parent=5 // pred_fallthru
      _
  $region6: #{server_trashnet_forward.2} parent=0 // loop_footer
    %s12 = sadd.s32 1, %s8
  $region7: #{server_trashnet_forward.2} parent=0 // loop_footer_branch
    %7 = sbr.rel target = $region3
  $region8: #{server_trashnet_forward.2} parent=0 // loop_exit
    _

</llo_original>
